<compile_context>
chip_gen: v7x
topology: tpu7x:2x2x1
jax: 0.10.0
libtpu: 0.0.40
codegen_flags: <defaults>
</compile_context>

<pallas_src>
import functools

import jax
import jax.numpy as jnp
from jax.experimental import pallas as pl
from jax.experimental.pallas import tpu as pltpu


# ----------------------------------------------------------------------------
# Fused kernel: encoder MLP -> vector quantization -> decoder MLP (one batch tile)
# ----------------------------------------------------------------------------
def pose_vqvae_kernel(
    x_ref, c_ref,                                   # activations (TB, ...) bf16
    w1x, w1c, b1, w2, b2, w3, b3, wmu, bmu,         # encoder params (w* bf16, b* f32)
    embed_m2, embed_t, e_sq,                        # -2*embed (L,E) bf16, embed^T (E,L) bf16, |e|^2 (1,E) f32
    w4z, w4c, b4, w5, b5, w6, b6, wout, bout,       # decoder params
    recon_ref, sq_ref, idx_ref,                     # outputs
):
    f32 = jnp.float32
    bf16 = jnp.bfloat16

    def dense(a_bf, w_bf, b_f32):
        # bf16 x bf16 -> f32 on the MXU; bias add in f32 on the VPU.
        return jnp.dot(a_bf, w_bf[...], preferred_element_type=f32) + b_f32[...]

    x = x_ref[...]                                                     # (TB, xd) bf16
    c = c_ref[...]                                                     # (TB, cd) bf16

    # ---------------- encoder: fc1 (split, no concat) / fc2 / fc3 + mu ----------------
    h = jnp.maximum(
        jnp.dot(x, w1x[...], preferred_element_type=f32)
        + jnp.dot(c, w1c[...], preferred_element_type=f32)
        + b1[...], 0.0)
    h = jnp.maximum(dense(h.astype(bf16), w2, b2), 0.0)
    h = jnp.maximum(dense(h.astype(bf16), w3, b3), 0.0)
    mu = dense(h.astype(bf16), wmu, bmu)                               # (TB, L) f32

    # ---------------- vector quantizer ----------------
    # score = |e|^2 - 2*mu.e   (mu^2 row term dropped -> same argmin; -2 folded into embed_m2;
    #  distance matmul in bf16 -> f32 accumulation)
    score = e_sq[...] + jnp.dot(mu.astype(bf16), embed_m2[...],
                                preferred_element_type=f32)            # (TB, E) f32
    TB, E = score.shape
    min_s = jnp.min(score, axis=1, keepdims=True)                      # (TB, 1)
    col = jax.lax.broadcasted_iota(jnp.int32, (TB, E), 1)
    # first index achieving the minimum (matches torch .max(1) tie-breaking)
    idx = jnp.min(jnp.where(score == min_s, col, E), axis=1, keepdims=True)   # (TB, 1)
    idx_ref[...] = idx

    onehot = (col == idx).astype(bf16)                                 # (TB, E) exact 0/1
    quant = jnp.dot(onehot, embed_t[...], preferred_element_type=f32)  # (TB, L) f32

    diff = quant - mu
    sq_ref[...] = jnp.sum(diff * diff, axis=1, keepdims=True)          # per-row SSE (f32)

    # ---------------- decoder: fc4 (split) / fc5 / fc6 + out ----------------
    h = jnp.maximum(
        jnp.dot(quant.astype(bf16), w4z[...], preferred_element_type=f32)
        + jnp.dot(c, w4c[...], preferred_element_type=f32)
        + b4[...], 0.0)
    h = jnp.maximum(dense(h.astype(bf16), w5, b5), 0.0)
    h = jnp.maximum(dense(h.astype(bf16), w6, b6), 0.0)
    recon_ref[...] = dense(h.astype(bf16), wout, bout)                 # (TB, out_pad) lane-dense


# ----------------------------------------------------------------------------
# Wrapper
# ----------------------------------------------------------------------------
def _round_up(n, m):
    return ((n + m - 1) // m) * m


@functools.partial(jax.jit, static_argnames=("out_dim", "block_batch"))
def pose_vqvae_forward(x, c, params, out_dim, block_batch=2048):
    """x: (B, frame_size*num_future_predictions), c: (B, frame_size*num_condition_frames)."""
    B = x.shape[0]
    x = x.astype(jnp.bfloat16)
    c = c.astype(jnp.bfloat16)

    # Batch tiling: big tiles to amortize per-step pipeline overhead; TB is a multiple
    # of 16 (bf16 sublane packing) and capped at ~ceil(B/2) so large batches always
    # produce >= 2 grid tiles (keeps both v7x TensorCores busy).
    TB = min(block_batch, max(16, _round_up(-(-B // 2), 16)))
    B_pad = _round_up(B, TB)
    if B_pad != B:
        x = jnp.pad(x, ((0, B_pad - B), (0, 0)))
        c = jnp.pad(c, ((0, B_pad - B), (0, 0)))
    num_tiles = B_pad // TB

    x_dim = x.shape[1]
    c_dim = c.shape[1]
    L, E = params["embed_m2"].shape
    h1 = params["b1"].shape[1]
    out_pad = params["bout_p"].shape[1]

    weight_names = ["w1x", "w1c", "b1", "w2", "b2", "w3", "b3", "wmu", "bmu",
                    "embed_m2", "embed_t", "e_sq",
                    "w4z", "w4c", "b4", "w5", "b5", "w6", "b6", "wout_p", "bout_p"]
    weights = [params[n] for n in weight_names]

    def act_spec(feat):
        return pl.BlockSpec((TB, feat), lambda i: (i, 0))

    # Full-array weight blocks with a constant index_map -> DMA'd once, VMEM-resident.
    w_specs = [pl.BlockSpec(tuple(w.shape), lambda i: (0, 0)) for w in weights]

    in_specs = [act_spec(x_dim), act_spec(c_dim)] + w_specs
    out_specs = (
        pl.BlockSpec((TB, out_pad), lambda i: (i, 0)),   # recon (lane-dense, 128 lanes)
        pl.BlockSpec((TB, 1), lambda i: (i, 0)),         # per-row squared error
        pl.BlockSpec((TB, 1), lambda i: (i, 0)),         # per-row codebook index
    )
    out_shape = (
        jax.ShapeDtypeStruct((B_pad, out_pad), jnp.float32),
        jax.ShapeDtypeStruct((B_pad, 1), jnp.float32),
        jax.ShapeDtypeStruct((B_pad, 1), jnp.int32),
    )

    flops = 2 * B_pad * (x_dim * h1 + c_dim * h1 + 2 * h1 * h1 + h1 * L   # encoder
                         + 2 * L * E                                     # VQ dist + quant
                         + L * h1 + c_dim * h1 + 2 * h1 * h1             # decoder fc4/5/6
                         + h1 * out_pad)                                 # out
    weight_bytes = sum(int(w.size) * w.dtype.itemsize for w in weights)
    act_bytes = B_pad * (2 * (x_dim + c_dim) + 4 * (out_pad + 2))
    cost = pl.CostEstimate(flops=int(flops), transcendentals=0,
                           bytes_accessed=int(weight_bytes + act_bytes))

    recon_p, sq, idx = pl.pallas_call(
        pose_vqvae_kernel,
        grid=(num_tiles,),
        in_specs=in_specs,
        out_specs=out_specs,
        out_shape=out_shape,
        compiler_params=pltpu.CompilerParams(
            dimension_semantics=("parallel",),
            vmem_limit_bytes=48 * 1024 * 1024),
        cost_estimate=cost,
    )(x, c, *weights)

    # Tiny finalization in the wrapper (keeps the batch grid axis fully parallel).
    recon = recon_p[:B, :out_dim]
    loss = jnp.sum(sq[:B, 0]) / (B * L)
    onehot = jax.nn.one_hot(idx[:B, 0], E, dtype=jnp.float32)
    avg_p = jnp.mean(onehot, axis=0)
    perp = jnp.exp(-jnp.sum(avg_p * jnp.log(avg_p + 1e-10)))
    return recon, loss, perp


# ----------------------------------------------------------------------------
# Pure-JAX reference (mirrors the PyTorch forward, using the same bf16 weights
# and the same bf16 VQ-distance formulation as the kernel)
# ----------------------------------------------------------------------------
def reference_forward(x, c, params, out_dim):
    f32, bf16 = jnp.float32, jnp.bfloat16
    xb, cb = x.astype(bf16), c.astype(bf16)

    def dense(a_bf, w_bf, b):
        return jnp.dot(a_bf, w_bf, preferred_element_type=f32) + b

    h = jax.nn.relu(jnp.dot(xb, params["w1x"], preferred_element_type=f32)
                    + jnp.dot(cb, params["w1c"], preferred_element_type=f32)
                    + params["b1"])
    h = jax.nn.relu(dense(h.astype(bf16), params["w2"], params["b2"]))
    h = jax.nn.relu(dense(h.astype(bf16), params["w3"], params["b3"]))
    mu = dense(h.astype(bf16), params["wmu"], params["bmu"])

    # VQ (same distance math as the kernel; mu^2 row term does not affect argmin)
    score = params["e_sq"] + jnp.dot(mu.astype(bf16), params["embed_m2"],
                                     preferred_element_type=f32)
    ind = jnp.argmin(score, axis=1)
    e_t = params["embed_t"].astype(f32)                     # (E, L)
    quant = e_t[ind]
    loss = jnp.mean((quant - mu) ** 2)
    onehot = jax.nn.one_hot(ind, e_t.shape[0], dtype=f32)
    avg_p = jnp.mean(onehot, axis=0)
    perp = jnp.exp(-jnp.sum(avg_p * jnp.log(avg_p + 1e-10)))

    h = jax.nn.relu(jnp.dot(quant.astype(bf16), params["w4z"], preferred_element_type=f32)
                    + jnp.dot(cb, params["w4c"], preferred_element_type=f32)
                    + params["b4"])
    h = jax.nn.relu(dense(h.astype(bf16), params["w5"], params["b5"]))
    h = jax.nn.relu(dense(h.astype(bf16), params["w6"], params["b6"]))
    recon = dense(h.astype(bf16), params["wout_p"], params["bout_p"])[:, :out_dim]
    return recon, loss, perp


# ----------------------------------------------------------------------------
# Deterministic parameter init (shapes follow PoseVQVAE.__init__); weights bf16
# ----------------------------------------------------------------------------
def init_params(key, frame_size, latent_size, num_embeddings,
                num_condition_frames, num_future_predictions, h1=512):
    x_dim = frame_size * num_future_predictions
    c_dim = frame_size * num_condition_frames
    enc_in = x_dim + c_dim
    out_dim = num_future_predictions * frame_size
    out_pad = max(128, _round_up(out_dim, 128))

    def linear(k, fan_in, fan_out):
        kw, kb = jax.random.split(k)
        bound = 1.0 / jnp.sqrt(fan_in)
        w = jax.random.uniform(kw, (fan_in, fan_out), jnp.float32, -bound, bound)
        b = jax.random.uniform(kb, (1, fan_out), jnp.float32, -bound, bound)
        return w.astype(jnp.bfloat16), b          # bf16 weight, f32 bias

    keys = jax.random.split(key, 10)
    p = {}
    # encoder fc1 takes [x, c]; split its weight along input rows (no in-kernel concat)
    w1_full, p["b1"] = linear(keys[0], enc_in, h1)
    p["w1x"] = w1_full[:x_dim]
    p["w1c"] = w1_full[x_dim:]
    p["w2"], p["b2"] = linear(keys[1], h1, h1)
    p["w3"], p["b3"] = linear(keys[2], h1, h1)
    p["wmu"], p["bmu"] = linear(keys[3], h1, latent_size)

    # decoder fc4 takes [z, c]; split its weight along input rows (no in-kernel concat)
    w4_full, p["b4"] = linear(keys[4], latent_size + c_dim, h1)
    p["w4z"] = w4_full[:latent_size]
    p["w4c"] = w4_full[latent_size:]
    p["w5"], p["b5"] = linear(keys[5], h1, h1)
    p["w6"], p["b6"] = linear(keys[6], h1, h1)

    # output layer zero-padded to a lane-dense (multiple-of-128) width
    wout, bout = linear(keys[7], h1, out_dim)
    p["wout_p"] = jnp.zeros((h1, out_pad), jnp.bfloat16).at[:, :out_dim].set(wout)
    p["bout_p"] = jnp.zeros((1, out_pad), jnp.float32).at[:, :out_dim].set(bout)

    # codebook: (L, E) bf16; -2*embed pre-folded (exact in bf16), embed^T for lookup,
    # |e|^2 precomputed in f32.
    embed_f32 = jax.random.normal(keys[8], (latent_size, num_embeddings), jnp.float32)
    embed_bf = embed_f32.astype(jnp.bfloat16)
    p["embed"] = embed_bf                                              # (L, E) bf16 (unused by kernel)
    p["embed_m2"] = (embed_bf.astype(jnp.float32) * -2.0).astype(jnp.bfloat16)
    p["embed_t"] = embed_bf.T                                          # (E, L) bf16
    p["e_sq"] = jnp.sum(embed_bf.astype(jnp.float32) ** 2,
                        axis=0, keepdims=True)                         # (1, E) f32
    return p


if __name__ == "__main__":
    # Small, module-consistent shapes
    B = 8
    frame_size = 16
    latent_size = 32
    num_embeddings = 128
    num_condition_frames = 1
    num_future_predictions = 1
    out_dim = num_future_predictions * frame_size

    key = jax.random.PRNGKey(0)
    kx, kc, kp = jax.random.split(key, 3)
    x = jax.random.normal(kx, (B, frame_size * num_future_predictions), jnp.float32)
    c = jax.random.normal(kc, (B, frame_size * num_condition_frames), jnp.float32)
    params = init_params(kp, frame_size, latent_size, num_embeddings,
                         num_condition_frames, num_future_predictions)

    recon, loss, perp = pose_vqvae_forward(x, c, params, out_dim=out_dim)
    jax.block_until_ready((recon, loss, perp))

    # correctness check vs pure-JAX reference of the same (bf16-weight) forward math
    r_recon, r_loss, r_perp = reference_forward(x, c, params, out_dim)
    assert recon.shape == (B, out_dim)
    assert jnp.allclose(recon, r_recon, atol=2e-3, rtol=2e-3), "recon mismatch"
    assert jnp.allclose(loss, r_loss, atol=2e-3, rtol=2e-3), "loss mismatch"
    assert jnp.allclose(perp, r_perp, atol=2e-3, rtol=2e-3), "perplexity mismatch"

    print("KERNEL_OK")
</pallas_src>

<mosaic_0001>
module attributes {stable_mosaic.version = 11 : i64} {
  func.func @pose_vqvae_kernel(%arg0: i32, %arg1: memref<16x16xbf16, #tpu.memory_space<vmem>>, %arg2: memref<16x16xbf16, #tpu.memory_space<vmem>>, %arg3: memref<16x512xbf16, #tpu.memory_space<vmem>>, %arg4: memref<16x512xbf16, #tpu.memory_space<vmem>>, %arg5: memref<1x512xf32, #tpu.memory_space<vmem>>, %arg6: memref<512x512xbf16, #tpu.memory_space<vmem>>, %arg7: memref<1x512xf32, #tpu.memory_space<vmem>>, %arg8: memref<512x512xbf16, #tpu.memory_space<vmem>>, %arg9: memref<1x512xf32, #tpu.memory_space<vmem>>, %arg10: memref<512x32xbf16, #tpu.memory_space<vmem>>, %arg11: memref<1x32xf32, #tpu.memory_space<vmem>>, %arg12: memref<32x128xbf16, #tpu.memory_space<vmem>>, %arg13: memref<128x32xbf16, #tpu.memory_space<vmem>>, %arg14: memref<1x128xf32, #tpu.memory_space<vmem>>, %arg15: memref<32x512xbf16, #tpu.memory_space<vmem>>, %arg16: memref<16x512xbf16, #tpu.memory_space<vmem>>, %arg17: memref<1x512xf32, #tpu.memory_space<vmem>>, %arg18: memref<512x512xbf16, #tpu.memory_space<vmem>>, %arg19: memref<1x512xf32, #tpu.memory_space<vmem>>, %arg20: memref<512x512xbf16, #tpu.memory_space<vmem>>, %arg21: memref<1x512xf32, #tpu.memory_space<vmem>>, %arg22: memref<512x128xbf16, #tpu.memory_space<vmem>>, %arg23: memref<1x128xf32, #tpu.memory_space<vmem>>, %arg24: memref<16x128xf32, #tpu.memory_space<vmem>>, %arg25: memref<16x1xf32, #tpu.memory_space<vmem>>, %arg26: memref<16x1xi32, #tpu.memory_space<vmem>>) attributes {dimension_semantics = [#tpu.dimension_semantics<parallel>], iteration_bounds = array<i64: 1>, scalar_prefetch = 0 : i64, scratch_operands = 0 : i64, tpu.core_type = #tpu.core_type<tc>, window_params = [{transform_indices = @transform_0, window_bounds = array<i64: 16, 16>}, {transform_indices = @transform_1, window_bounds = array<i64: 16, 16>}, {pipeline_mode = #tpu.pipeline_mode<synchronous>, transform_indices = @transform_2, window_bounds = array<i64: 16, 512>}, {pipeline_mode = #tpu.pipeline_mode<synchronous>, transform_indices = @transform_3, window_bounds = array<i64: 16, 512>}, {pipeline_mode = #tpu.pipeline_mode<synchronous>, transform_indices = @transform_4, window_bounds = array<i64: 1, 512>}, {pipeline_mode = #tpu.pipeline_mode<synchronous>, transform_indices = @transform_5, window_bounds = array<i64: 512, 512>}, {pipeline_mode = #tpu.pipeline_mode<synchronous>, transform_indices = @transform_6, window_bounds = array<i64: 1, 512>}, {pipeline_mode = #tpu.pipeline_mode<synchronous>, transform_indices = @transform_7, window_bounds = array<i64: 512, 512>}, {pipeline_mode = #tpu.pipeline_mode<synchronous>, transform_indices = @transform_8, window_bounds = array<i64: 1, 512>}, {pipeline_mode = #tpu.pipeline_mode<synchronous>, transform_indices = @transform_9, window_bounds = array<i64: 512, 32>}, {pipeline_mode = #tpu.pipeline_mode<synchronous>, transform_indices = @transform_10, window_bounds = array<i64: 1, 32>}, {pipeline_mode = #tpu.pipeline_mode<synchronous>, transform_indices = @transform_11, window_bounds = array<i64: 32, 128>}, {pipeline_mode = #tpu.pipeline_mode<synchronous>, transform_indices = @transform_12, window_bounds = array<i64: 128, 32>}, {pipeline_mode = #tpu.pipeline_mode<synchronous>, transform_indices = @transform_13, window_bounds = array<i64: 1, 128>}, {pipeline_mode = #tpu.pipeline_mode<synchronous>, transform_indices = @transform_14, window_bounds = array<i64: 32, 512>}, {pipeline_mode = #tpu.pipeline_mode<synchronous>, transform_indices = @transform_15, window_bounds = array<i64: 16, 512>}, {pipeline_mode = #tpu.pipeline_mode<synchronous>, transform_indices = @transform_16, window_bounds = array<i64: 1, 512>}, {pipeline_mode = #tpu.pipeline_mode<synchronous>, transform_indices = @transform_17, window_bounds = array<i64: 512, 512>}, {pipeline_mode = #tpu.pipeline_mode<synchronous>, transform_indices = @transform_18, window_bounds = array<i64: 1, 512>}, {pipeline_mode = #tpu.pipeline_mode<synchronous>, transform_indices = @transform_19, window_bounds = array<i64: 512, 512>}, {pipeline_mode = #tpu.pipeline_mode<synchronous>, transform_indices = @transform_20, window_bounds = array<i64: 1, 512>}, {pipeline_mode = #tpu.pipeline_mode<synchronous>, transform_indices = @transform_21, window_bounds = array<i64: 512, 128>}, {pipeline_mode = #tpu.pipeline_mode<synchronous>, transform_indices = @transform_22, window_bounds = array<i64: 1, 128>}, {transform_indices = @transform_23, window_bounds = array<i64: 16, 128>}, {transform_indices = @transform_24, window_bounds = array<i64: 16, 1>}, {transform_indices = @transform_25, window_bounds = array<i64: 16, 1>}]} {
    %c0 = arith.constant 0 : index
    %c0_0 = arith.constant 0 : index
    %0 = vector.load %arg1[%c0, %c0_0] : memref<16x16xbf16, #tpu.memory_space<vmem>>, vector<16x16xbf16>
    %c0_1 = arith.constant 0 : index
    %c0_2 = arith.constant 0 : index
    %1 = vector.load %arg2[%c0_1, %c0_2] : memref<16x16xbf16, #tpu.memory_space<vmem>>, vector<16x16xbf16>
    %c0_3 = arith.constant 0 : index
    %c0_4 = arith.constant 0 : index
    %2 = vector.load %arg3[%c0_3, %c0_4] : memref<16x512xbf16, #tpu.memory_space<vmem>>, vector<16x512xbf16>
    %cst = arith.constant dense<0.000000e+00> : vector<16x512xf32>
    %3 = tpu.matmul %0, %2, %cst {dimension_numbers = #tpu.dot_dimension_numbers<[1], [0], [0], [1], [0, 0, 1, 1], [], []>} : vector<16x16xbf16>, vector<16x512xbf16>, vector<16x512xf32> -> vector<16x512xf32>
    %c0_5 = arith.constant 0 : index
    %c0_6 = arith.constant 0 : index
    %4 = vector.load %arg4[%c0_5, %c0_6] : memref<16x512xbf16, #tpu.memory_space<vmem>>, vector<16x512xbf16>
    %cst_7 = arith.constant dense<0.000000e+00> : vector<16x512xf32>
    %5 = tpu.matmul %1, %4, %cst_7 {dimension_numbers = #tpu.dot_dimension_numbers<[1], [0], [0], [1], [0, 0, 1, 1], [], []>} : vector<16x16xbf16>, vector<16x512xbf16>, vector<16x512xf32> -> vector<16x512xf32>
    %6 = arith.addf %3, %5 : vector<16x512xf32>
    %c0_8 = arith.constant 0 : index
    %c0_9 = arith.constant 0 : index
    %7 = vector.load %arg5[%c0_8, %c0_9] : memref<1x512xf32, #tpu.memory_space<vmem>>, vector<1x512xf32>
    %8 = vector.broadcast %7 : vector<1x512xf32> to vector<16x512xf32>
    %9 = arith.addf %6, %8 : vector<16x512xf32>
    %cst_10 = arith.constant 0.000000e+00 : f32
    %10 = vector.broadcast %cst_10 : f32 to vector<16x512xf32>
    %11 = arith.maximumf %9, %10 : vector<16x512xf32>
    %12 = arith.truncf %11 : vector<16x512xf32> to vector<16x512xbf16>
    %c0_11 = arith.constant 0 : index
    %c0_12 = arith.constant 0 : index
    %13 = vector.load %arg6[%c0_11, %c0_12] : memref<512x512xbf16, #tpu.memory_space<vmem>>, vector<512x512xbf16>
    %cst_13 = arith.constant dense<0.000000e+00> : vector<16x512xf32>
    %14 = tpu.matmul %12, %13, %cst_13 {dimension_numbers = #tpu.dot_dimension_numbers<[1], [0], [0], [1], [0, 0, 1, 1], [], []>} : vector<16x512xbf16>, vector<512x512xbf16>, vector<16x512xf32> -> vector<16x512xf32>
    %c0_14 = arith.constant 0 : index
    %c0_15 = arith.constant 0 : index
    %15 = vector.load %arg7[%c0_14, %c0_15] : memref<1x512xf32, #tpu.memory_space<vmem>>, vector<1x512xf32>
    %16 = vector.broadcast %15 : vector<1x512xf32> to vector<16x512xf32>
    %17 = arith.addf %14, %16 : vector<16x512xf32>
    %cst_16 = arith.constant 0.000000e+00 : f32
    %18 = vector.broadcast %cst_16 : f32 to vector<16x512xf32>
    %19 = arith.maximumf %17, %18 : vector<16x512xf32>
    %20 = arith.truncf %19 : vector<16x512xf32> to vector<16x512xbf16>
    %c0_17 = arith.constant 0 : index
    %c0_18 = arith.constant 0 : index
    %21 = vector.load %arg8[%c0_17, %c0_18] : memref<512x512xbf16, #tpu.memory_space<vmem>>, vector<512x512xbf16>
    %cst_19 = arith.constant dense<0.000000e+00> : vector<16x512xf32>
    %22 = tpu.matmul %20, %21, %cst_19 {dimension_numbers = #tpu.dot_dimension_numbers<[1], [0], [0], [1], [0, 0, 1, 1], [], []>} : vector<16x512xbf16>, vector<512x512xbf16>, vector<16x512xf32> -> vector<16x512xf32>
    %c0_20 = arith.constant 0 : index
    %c0_21 = arith.constant 0 : index
    %23 = vector.load %arg9[%c0_20, %c0_21] : memref<1x512xf32, #tpu.memory_space<vmem>>, vector<1x512xf32>
    %24 = vector.broadcast %23 : vector<1x512xf32> to vector<16x512xf32>
    %25 = arith.addf %22, %24 : vector<16x512xf32>
    %cst_22 = arith.constant 0.000000e+00 : f32
    %26 = vector.broadcast %cst_22 : f32 to vector<16x512xf32>
    %27 = arith.maximumf %25, %26 : vector<16x512xf32>
    %28 = arith.truncf %27 : vector<16x512xf32> to vector<16x512xbf16>
    %c0_23 = arith.constant 0 : index
    %c0_24 = arith.constant 0 : index
    %29 = vector.load %arg10[%c0_23, %c0_24] : memref<512x32xbf16, #tpu.memory_space<vmem>>, vector<512x32xbf16>
    %cst_25 = arith.constant dense<0.000000e+00> : vector<16x32xf32>
    %30 = tpu.matmul %28, %29, %cst_25 {dimension_numbers = #tpu.dot_dimension_numbers<[1], [0], [0], [1], [0, 0, 1, 1], [], []>} : vector<16x512xbf16>, vector<512x32xbf16>, vector<16x32xf32> -> vector<16x32xf32>
    %c0_26 = arith.constant 0 : index
    %c0_27 = arith.constant 0 : index
    %31 = vector.load %arg11[%c0_26, %c0_27] : memref<1x32xf32, #tpu.memory_space<vmem>>, vector<1x32xf32>
    %32 = vector.broadcast %31 : vector<1x32xf32> to vector<16x32xf32>
    %33 = arith.addf %30, %32 : vector<16x32xf32>
    %c0_28 = arith.constant 0 : index
    %c0_29 = arith.constant 0 : index
    %34 = vector.load %arg14[%c0_28, %c0_29] : memref<1x128xf32, #tpu.memory_space<vmem>>, vector<1x128xf32>
    %35 = arith.truncf %33 : vector<16x32xf32> to vector<16x32xbf16>
    %c0_30 = arith.constant 0 : index
    %c0_31 = arith.constant 0 : index
    %36 = vector.load %arg12[%c0_30, %c0_31] : memref<32x128xbf16, #tpu.memory_space<vmem>>, vector<32x128xbf16>
    %cst_32 = arith.constant dense<0.000000e+00> : vector<16x128xf32>
    %37 = tpu.matmul %35, %36, %cst_32 {dimension_numbers = #tpu.dot_dimension_numbers<[1], [0], [0], [1], [0, 0, 1, 1], [], []>} : vector<16x32xbf16>, vector<32x128xbf16>, vector<16x128xf32> -> vector<16x128xf32>
    %38 = vector.broadcast %34 : vector<1x128xf32> to vector<16x128xf32>
    %39 = arith.addf %38, %37 : vector<16x128xf32>
    %cst_33 = arith.constant dense<0x7F800000> : vector<16xf32>
    %40 = vector.multi_reduction <minimumf>, %39, %cst_33 [1] : vector<16x128xf32> to vector<16xf32>
    %41 = vector.shape_cast %40 : vector<16xf32> to vector<16x1xf32>
    %42 = tpu.iota {dimensions = array<i32: 1>} : vector<16x128xi32>
    %43 = vector.broadcast %41 : vector<16x1xf32> to vector<16x128xf32>
    %44 = arith.cmpf oeq, %39, %43 : vector<16x128xf32>
    %c128_i32 = arith.constant 128 : i32
    %45 = vector.broadcast %c128_i32 : i32 to vector<16x128xi32>
    %46 = arith.select %44, %42, %45 : vector<16x128xi1>, vector<16x128xi32>
    %cst_34 = arith.constant dense<2147483647> : vector<16xi32>
    %47 = vector.multi_reduction <minsi>, %46, %cst_34 [1] : vector<16x128xi32> to vector<16xi32>
    %48 = vector.shape_cast %47 : vector<16xi32> to vector<16x1xi32>
    %c0_35 = arith.constant 0 : index
    %c0_36 = arith.constant 0 : index
    %49 = vector.load %arg26[%c0_35, %c0_36] : memref<16x1xi32, #tpu.memory_space<vmem>>, vector<16x1xi32>
    tpu.vector_store %arg26[%c0_35, %c0_36], %48 {strides = array<i32>} : memref<16x1xi32, #tpu.memory_space<vmem>>, vector<16x1xi32>,
    %50 = vector.broadcast %48 : vector<16x1xi32> to vector<16x128xi32>
    %51 = arith.cmpi eq, %42, %50 : vector<16x128xi32>
    %52 = arith.extui %51 : vector<16x128xi1> to vector<16x128xi32>
    %53 = arith.sitofp %52 : vector<16x128xi32> to vector<16x128xf32>
    %54 = arith.truncf %53 : vector<16x128xf32> to vector<16x128xbf16>
    %c0_37 = arith.constant 0 : index
    %c0_38 = arith.constant 0 : index
    %55 = vector.load %arg13[%c0_37, %c0_38] : memref<128x32xbf16, #tpu.memory_space<vmem>>, vector<128x32xbf16>
    %cst_39 = arith.constant dense<0.000000e+00> : vector<16x32xf32>
    %56 = tpu.matmul %54, %55, %cst_39 {dimension_numbers = #tpu.dot_dimension_numbers<[1], [0], [0], [1], [0, 0, 1, 1], [], []>} : vector<16x128xbf16>, vector<128x32xbf16>, vector<16x32xf32> -> vector<16x32xf32>
    %57 = arith.subf %56, %33 : vector<16x32xf32>
    %58 = arith.mulf %57, %57 : vector<16x32xf32>
    %cst_40 = arith.constant dense<0.000000e+00> : vector<16xf32>
    %59 = vector.multi_reduction <add>, %58, %cst_40 [1] : vector<16x32xf32> to vector<16xf32>
    %60 = vector.shape_cast %59 : vector<16xf32> to vector<16x1xf32>
    %c0_41 = arith.constant 0 : index
    %c0_42 = arith.constant 0 : index
    %61 = vector.load %arg25[%c0_41, %c0_42] : memref<16x1xf32, #tpu.memory_space<vmem>>, vector<16x1xf32>
    tpu.vector_store %arg25[%c0_41, %c0_42], %60 {strides = array<i32>} : memref<16x1xf32, #tpu.memory_space<vmem>>, vector<16x1xf32>,
    %62 = arith.truncf %56 : vector<16x32xf32> to vector<16x32xbf16>
    %c0_43 = arith.constant 0 : index
    %c0_44 = arith.constant 0 : index
    %63 = vector.load %arg15[%c0_43, %c0_44] : memref<32x512xbf16, #tpu.memory_space<vmem>>, vector<32x512xbf16>
    %cst_45 = arith.constant dense<0.000000e+00> : vector<16x512xf32>
    %64 = tpu.matmul %62, %63, %cst_45 {dimension_numbers = #tpu.dot_dimension_numbers<[1], [0], [0], [1], [0, 0, 1, 1], [], []>} : vector<16x32xbf16>, vector<32x512xbf16>, vector<16x512xf32> -> vector<16x512xf32>
    %c0_46 = arith.constant 0 : index
    %c0_47 = arith.constant 0 : index
    %65 = vector.load %arg16[%c0_46, %c0_47] : memref<16x512xbf16, #tpu.memory_space<vmem>>, vector<16x512xbf16>
    %cst_48 = arith.constant dense<0.000000e+00> : vector<16x512xf32>
    %66 = tpu.matmul %1, %65, %cst_48 {dimension_numbers = #tpu.dot_dimension_numbers<[1], [0], [0], [1], [0, 0, 1, 1], [], []>} : vector<16x16xbf16>, vector<16x512xbf16>, vector<16x512xf32> -> vector<16x512xf32>
    %67 = arith.addf %64, %66 : vector<16x512xf32>
    %c0_49 = arith.constant 0 : index
    %c0_50 = arith.constant 0 : index
    %68 = vector.load %arg17[%c0_49, %c0_50] : memref<1x512xf32, #tpu.memory_space<vmem>>, vector<1x512xf32>
    %69 = vector.broadcast %68 : vector<1x512xf32> to vector<16x512xf32>
    %70 = arith.addf %67, %69 : vector<16x512xf32>
    %cst_51 = arith.constant 0.000000e+00 : f32
    %71 = vector.broadcast %cst_51 : f32 to vector<16x512xf32>
    %72 = arith.maximumf %70, %71 : vector<16x512xf32>
    %73 = arith.truncf %72 : vector<16x512xf32> to vector<16x512xbf16>
    %c0_52 = arith.constant 0 : index
    %c0_53 = arith.constant 0 : index
    %74 = vector.load %arg18[%c0_52, %c0_53] : memref<512x512xbf16, #tpu.memory_space<vmem>>, vector<512x512xbf16>
    %cst_54 = arith.constant dense<0.000000e+00> : vector<16x512xf32>
    %75 = tpu.matmul %73, %74, %cst_54 {dimension_numbers = #tpu.dot_dimension_numbers<[1], [0], [0], [1], [0, 0, 1, 1], [], []>} : vector<16x512xbf16>, vector<512x512xbf16>, vector<16x512xf32> -> vector<16x512xf32>
    %c0_55 = arith.constant 0 : index
    %c0_56 = arith.constant 0 : index
    %76 = vector.load %arg19[%c0_55, %c0_56] : memref<1x512xf32, #tpu.memory_space<vmem>>, vector<1x512xf32>
    %77 = vector.broadcast %76 : vector<1x512xf32> to vector<16x512xf32>
    %78 = arith.addf %75, %77 : vector<16x512xf32>
    %cst_57 = arith.constant 0.000000e+00 : f32
    %79 = vector.broadcast %cst_57 : f32 to vector<16x512xf32>
    %80 = arith.maximumf %78, %79 : vector<16x512xf32>
    %81 = arith.truncf %80 : vector<16x512xf32> to vector<16x512xbf16>
    %c0_58 = arith.constant 0 : index
    %c0_59 = arith.constant 0 : index
    %82 = vector.load %arg20[%c0_58, %c0_59] : memref<512x512xbf16, #tpu.memory_space<vmem>>, vector<512x512xbf16>
    %cst_60 = arith.constant dense<0.000000e+00> : vector<16x512xf32>
    %83 = tpu.matmul %81, %82, %cst_60 {dimension_numbers = #tpu.dot_dimension_numbers<[1], [0], [0], [1], [0, 0, 1, 1], [], []>} : vector<16x512xbf16>, vector<512x512xbf16>, vector<16x512xf32> -> vector<16x512xf32>
    %c0_61 = arith.constant 0 : index
    %c0_62 = arith.constant 0 : index
    %84 = vector.load %arg21[%c0_61, %c0_62] : memref<1x512xf32, #tpu.memory_space<vmem>>, vector<1x512xf32>
    %85 = vector.broadcast %84 : vector<1x512xf32> to vector<16x512xf32>
    %86 = arith.addf %83, %85 : vector<16x512xf32>
    %cst_63 = arith.constant 0.000000e+00 : f32
    %87 = vector.broadcast %cst_63 : f32 to vector<16x512xf32>
    %88 = arith.maximumf %86, %87 : vector<16x512xf32>
    %89 = arith.truncf %88 : vector<16x512xf32> to vector<16x512xbf16>
    %c0_64 = arith.constant 0 : index
    %c0_65 = arith.constant 0 : index
    %90 = vector.load %arg22[%c0_64, %c0_65] : memref<512x128xbf16, #tpu.memory_space<vmem>>, vector<512x128xbf16>
    %cst_66 = arith.constant dense<0.000000e+00> : vector<16x128xf32>
    %91 = tpu.matmul %89, %90, %cst_66 {dimension_numbers = #tpu.dot_dimension_numbers<[1], [0], [0], [1], [0, 0, 1, 1], [], []>} : vector<16x512xbf16>, vector<512x128xbf16>, vector<16x128xf32> -> vector<16x128xf32>
    %c0_67 = arith.constant 0 : index
    %c0_68 = arith.constant 0 : index
    %92 = vector.load %arg23[%c0_67, %c0_68] : memref<1x128xf32, #tpu.memory_space<vmem>>, vector<1x128xf32>
    %93 = vector.broadcast %92 : vector<1x128xf32> to vector<16x128xf32>
    %94 = arith.addf %91, %93 : vector<16x128xf32>
    %c0_69 = arith.constant 0 : index
    %c0_70 = arith.constant 0 : index
    %95 = vector.load %arg24[%c0_69, %c0_70] : memref<16x128xf32, #tpu.memory_space<vmem>>, vector<16x128xf32>
    tpu.vector_store %arg24[%c0_69, %c0_70], %94 {strides = array<i32>} : memref<16x128xf32, #tpu.memory_space<vmem>>, vector<16x128xf32>,
    return
  }
  func.func @transform_0(%arg0: i32) -> (i32, i32) {
    %c0_i32 = arith.constant 0 : i32
    %c0_i32_0 = arith.constant 0 : i32
    return %arg0, %c0_i32 : i32, i32
  }
  func.func @transform_1(%arg0: i32) -> (i32, i32) {
    %c0_i32 = arith.constant 0 : i32
    %c0_i32_0 = arith.constant 0 : i32
    return %arg0, %c0_i32 : i32, i32
  }
  func.func @transform_2(%arg0: i32) -> (i32, i32) {
    %c0_i32 = arith.constant 0 : i32
    %c0_i32_0 = arith.constant 0 : i32
    %c0_i32_1 = arith.constant 0 : i32
    return %c0_i32, %c0_i32_0 : i32, i32
  }
  func.func @transform_3(%arg0: i32) -> (i32, i32) {
    %c0_i32 = arith.constant 0 : i32
    %c0_i32_0 = arith.constant 0 : i32
    %c0_i32_1 = arith.constant 0 : i32
    return %c0_i32, %c0_i32_0 : i32, i32
  }
  func.func @transform_4(%arg0: i32) -> (i32, i32) {
    %c0_i32 = arith.constant 0 : i32
    %c0_i32_0 = arith.constant 0 : i32
    %c0_i32_1 = arith.constant 0 : i32
    return %c0_i32, %c0_i32_0 : i32, i32
  }
  func.func @transform_5(%arg0: i32) -> (i32, i32) {
    %c0_i32 = arith.constant 0 : i32
    %c0_i32_0 = arith.constant 0 : i32
    %c0_i32_1 = arith.constant 0 : i32
    return %c0_i32, %c0_i32_0 : i32, i32
  }
  func.func @transform_6(%arg0: i32) -> (i32, i32) {
    %c0_i32 = arith.constant 0 : i32
    %c0_i32_0 = arith.constant 0 : i32
    %c0_i32_1 = arith.constant 0 : i32
    return %c0_i32, %c0_i32_0 : i32, i32
  }
  func.func @transform_7(%arg0: i32) -> (i32, i32) {
    %c0_i32 = arith.constant 0 : i32
    %c0_i32_0 = arith.constant 0 : i32
    %c0_i32_1 = arith.constant 0 : i32
    return %c0_i32, %c0_i32_0 : i32, i32
  }
  func.func @transform_8(%arg0: i32) -> (i32, i32) {
    %c0_i32 = arith.constant 0 : i32
    %c0_i32_0 = arith.constant 0 : i32
    %c0_i32_1 = arith.constant 0 : i32
    return %c0_i32, %c0_i32_0 : i32, i32
  }
  func.func @transform_9(%arg0: i32) -> (i32, i32) {
    %c0_i32 = arith.constant 0 : i32
    %c0_i32_0 = arith.constant 0 : i32
    %c0_i32_1 = arith.constant 0 : i32
    return %c0_i32, %c0_i32_0 : i32, i32
  }
  func.func @transform_10(%arg0: i32) -> (i32, i32) {
    %c0_i32 = arith.constant 0 : i32
    %c0_i32_0 = arith.constant 0 : i32
    %c0_i32_1 = arith.constant 0 : i32
    return %c0_i32, %c0_i32_0 : i32, i32
  }
  func.func @transform_11(%arg0: i32) -> (i32, i32) {
    %c0_i32 = arith.constant 0 : i32
    %c0_i32_0 = arith.constant 0 : i32
    %c0_i32_1 = arith.constant 0 : i32
    return %c0_i32, %c0_i32_0 : i32, i32
  }
  func.func @transform_12(%arg0: i32) -> (i32, i32) {
    %c0_i32 = arith.constant 0 : i32
    %c0_i32_0 = arith.constant 0 : i32
    %c0_i32_1 = arith.constant 0 : i32
    return %c0_i32, %c0_i32_0 : i32, i32
  }
  func.func @transform_13(%arg0: i32) -> (i32, i32) {
    %c0_i32 = arith.constant 0 : i32
    %c0_i32_0 = arith.constant 0 : i32
    %c0_i32_1 = arith.constant 0 : i32
    return %c0_i32, %c0_i32_0 : i32, i32
  }
  func.func @transform_14(%arg0: i32) -> (i32, i32) {
    %c0_i32 = arith.constant 0 : i32
    %c0_i32_0 = arith.constant 0 : i32
    %c0_i32_1 = arith.constant 0 : i32
    return %c0_i32, %c0_i32_0 : i32, i32
  }
  func.func @transform_15(%arg0: i32) -> (i32, i32) {
    %c0_i32 = arith.constant 0 : i32
    %c0_i32_0 = arith.constant 0 : i32
    %c0_i32_1 = arith.constant 0 : i32
    return %c0_i32, %c0_i32_0 : i32, i32
  }
  func.func @transform_16(%arg0: i32) -> (i32, i32) {
    %c0_i32 = arith.constant 0 : i32
    %c0_i32_0 = arith.constant 0 : i32
    %c0_i32_1 = arith.constant 0 : i32
    return %c0_i32, %c0_i32_0 : i32, i32
  }
  func.func @transform_17(%arg0: i32) -> (i32, i32) {
    %c0_i32 = arith.constant 0 : i32
    %c0_i32_0 = arith.constant 0 : i32
    %c0_i32_1 = arith.constant 0 : i32
    return %c0_i32, %c0_i32_0 : i32, i32
  }
  func.func @transform_18(%arg0: i32) -> (i32, i32) {
    %c0_i32 = arith.constant 0 : i32
    %c0_i32_0 = arith.constant 0 : i32
    %c0_i32_1 = arith.constant 0 : i32
    return %c0_i32, %c0_i32_0 : i32, i32
  }
  func.func @transform_19(%arg0: i32) -> (i32, i32) {
    %c0_i32 = arith.constant 0 : i32
    %c0_i32_0 = arith.constant 0 : i32
    %c0_i32_1 = arith.constant 0 : i32
    return %c0_i32, %c0_i32_0 : i32, i32
  }
  func.func @transform_20(%arg0: i32) -> (i32, i32) {
    %c0_i32 = arith.constant 0 : i32
    %c0_i32_0 = arith.constant 0 : i32
    %c0_i32_1 = arith.constant 0 : i32
    return %c0_i32, %c0_i32_0 : i32, i32
  }
  func.func @transform_21(%arg0: i32) -> (i32, i32) {
    %c0_i32 = arith.constant 0 : i32
    %c0_i32_0 = arith.constant 0 : i32
    %c0_i32_1 = arith.constant 0 : i32
    return %c0_i32, %c0_i32_0 : i32, i32
  }
  func.func @transform_22(%arg0: i32) -> (i32, i32) {
    %c0_i32 = arith.constant 0 : i32
    %c0_i32_0 = arith.constant 0 : i32
    %c0_i32_1 = arith.constant 0 : i32
    return %c0_i32, %c0_i32_0 : i32, i32
  }
  func.func @transform_23(%arg0: i32) -> (i32, i32) {
    %c0_i32 = arith.constant 0 : i32
    %c0_i32_0 = arith.constant 0 : i32
    return %arg0, %c0_i32 : i32, i32
  }
  func.func @transform_24(%arg0: i32) -> (i32, i32) {
    %c0_i32 = arith.constant 0 : i32
    %c0_i32_0 = arith.constant 0 : i32
    return %arg0, %c0_i32 : i32, i32
  }
  func.func @transform_25(%arg0: i32) -> (i32, i32) {
    %c0_i32 = arith.constant 0 : i32
    %c0_i32_0 = arith.constant 0 : i32
    return %arg0, %c0_i32 : i32, i32
  }
}

</mosaic_0001>

<llo_original>
// kernel: pose_vqvae_forward.1
$region0: #{pose_vqvae_forward.1}
  #allocation0 [shape = 'u32[]', space=smem, size = 0x4, offset = 0x4, fixed_abs, tag = 'smem constant byte address 0x4 - core index']
  #allocation1 [shape = 'u32[144,128]{1,0:T(1,128)}', space=vmem, size = 0x12000, scoped, tag = 'internal scratch']
  %s0 = inlined_call_operand.vmem [shape: bf16[16,16], index: 0, kind: input, shape index: {}]
  %s1 = inlined_call_operand.vmem [shape: bf16[16,16], index: 1, kind: input, shape index: {}]
  %s2 = inlined_call_operand.vmem [shape: bf16[16,512], index: 2, kind: input, shape index: {}]
  %s3 = inlined_call_operand.vmem [shape: bf16[16,512], index: 3, kind: input, shape index: {}]
  %s4 = inlined_call_operand.vmem [shape: f32[1,512], index: 4, kind: input, shape index: {}]
  %s5 = inlined_call_operand.hbm [shape: bf16[512,512], index: 5, kind: input, shape index: {}]
  %s6 = inlined_call_operand.vmem [shape: f32[1,512], index: 6, kind: input, shape index: {}]
  %s7 = inlined_call_operand.hbm [shape: bf16[512,512], index: 7, kind: input, shape index: {}]
  %s8 = inlined_call_operand.vmem [shape: f32[1,512], index: 8, kind: input, shape index: {}]
  %s9 = inlined_call_operand.vmem [shape: bf16[512,32], index: 9, kind: input, shape index: {}]
  %s10 = inlined_call_operand.vmem [shape: f32[1,32], index: 10, kind: input, shape index: {}]
  %s11 = inlined_call_operand.vmem [shape: bf16[32,128], index: 11, kind: input, shape index: {}]
  %s12 = inlined_call_operand.vmem [shape: bf16[128,32], index: 12, kind: input, shape index: {}]
  %s13 = inlined_call_operand.vmem [shape: f32[1,128], index: 13, kind: input, shape index: {}]
  %s14 = inlined_call_operand.vmem [shape: bf16[32,512], index: 14, kind: input, shape index: {}]
  %s15 = inlined_call_operand.vmem [shape: bf16[16,512], index: 15, kind: input, shape index: {}]
  %s16 = inlined_call_operand.vmem [shape: f32[1,512], index: 16, kind: input, shape index: {}]
  %s17 = inlined_call_operand.hbm [shape: bf16[512,512], index: 17, kind: input, shape index: {}]
  %s18 = inlined_call_operand.hbm [shape: f32[1,512], index: 18, kind: input, shape index: {}]
  %s19 = inlined_call_operand.hbm [shape: bf16[512,512], index: 19, kind: input, shape index: {}]
  %s20 = inlined_call_operand.hbm [shape: f32[1,512], index: 20, kind: input, shape index: {}]
  %s21 = inlined_call_operand.vmem [shape: bf16[512,128], index: 21, kind: input, shape index: {}]
  %s22 = inlined_call_operand.hbm [shape: f32[1,128], index: 22, kind: input, shape index: {}]
  %s23 = inlined_call_operand.vmem [shape: f32[16,128], index: 23, kind: output, shape index: {0}]
  %s24 = inlined_call_operand.vmem [shape: f32[16,1], index: 24, kind: output, shape index: {1}]
  %s25 = inlined_call_operand.vmem [shape: s32[16,1], index: 25, kind: output, shape index: {2}]
  %26 = xla_tuple %s23, %s24, %s25
  %s27 = sld [smem:[#allocation0]]
  $region146: #{pose_vqvae_forward.1} parent=0
    _
  %s29 = ssub.s32 1, %s27
  %s30 = scalar_select 0, %s29, %s27
  $region1: #{pose_vqvae_forward.1} parent=0
    #allocation2 [shape = 'u8[524288]{0}', space=vmem, size = 0x80000, scoped, tag = 'input window, operand 5, single buffered']
    #allocation3 [shape = 's32[1]{0}', space=sflag, size = 0x4, scoped, tag = 'scoped memory for pose_vqvae_forward.1']
    #allocation4 [shape = 'u8[524288]{0}', space=vmem, size = 0x80000, scoped, tag = 'input window, operand 7, single buffered']
    #allocation5 [shape = 's32[1]{0}', space=sflag, size = 0x4, scoped, tag = 'scoped memory for pose_vqvae_forward.1']
    #allocation6 [shape = 'u8[524288]{0}', space=vmem, size = 0x80000, scoped, tag = 'input window, operand 17, single buffered']
    #allocation7 [shape = 'u8[2048]{0}', space=vmem, size = 0x800, scoped, tag = 'input window, operand 18, single buffered']
    #allocation8 [shape = 's32[1]{0}', space=sflag, size = 0x4, scoped, tag = 'scoped memory for pose_vqvae_forward.1']
    #allocation9 [shape = 'u8[524288]{0}', space=vmem, size = 0x80000, scoped, tag = 'input window, operand 19, single buffered']
    #allocation10 [shape = 'u8[2048]{0}', space=vmem, size = 0x800, scoped, tag = 'input window, operand 20, single buffered']
    #allocation11 [shape = 's32[1]{0}', space=sflag, size = 0x4, scoped, tag = 'scoped memory for pose_vqvae_forward.1']
    #allocation12 [shape = 'u8[512]{0}', space=vmem, size = 0x400, scoped, tag = 'input window, operand 22, single buffered']
    %31 = vsyncpa [#allocation3], 0
    %32 = vsyncpa [#allocation5], 0
    %33 = vsyncpa [#allocation8], 0
    %34 = vsyncpa [#allocation11], 0
    // Predicated region
    $region2: #{pose_vqvae_forward.1} parent=1 // pred_check
      _
    $region3: #{pose_vqvae_forward.1} parent=1 // pred_check_branch
      %36 = sbr.rel (0) target = $region5
    $region4: #{pose_vqvae_forward.1} parent=1 // pred_region
      _
    $region5: #{pose_vqvae_forward.1} parent=1 // pred_fallthru
      _
    // Predicated region
    $region6: #{pose_vqvae_forward.1} parent=1 // pred_check
      _
    $region7: #{pose_vqvae_forward.1} parent=1 // pred_check_branch
      %38 = sbr.rel (0) target = $region9
    $region8: #{pose_vqvae_forward.1} parent=1 // pred_region
      _
    $region9: #{pose_vqvae_forward.1} parent=1 // pred_fallthru
      _
    // Predicated region
    $region10: #{pose_vqvae_forward.1} parent=1 // pred_check
      _
    $region11: #{pose_vqvae_forward.1} parent=1 // pred_check_branch
      %40 = sbr.rel (0) target = $region13
    $region12: #{pose_vqvae_forward.1} parent=1 // pred_region
      _
    $region13: #{pose_vqvae_forward.1} parent=1 // pred_fallthru
      _
    // Predicated region
    $region14: #{pose_vqvae_forward.1} parent=1 // pred_check
      _
    $region15: #{pose_vqvae_forward.1} parent=1 // pred_check_branch
      %42 = sbr.rel (0) target = $region17
    $region16: #{pose_vqvae_forward.1} parent=1 // pred_region
      _
    $region17: #{pose_vqvae_forward.1} parent=1 // pred_fallthru
      _
    // Predicated region
    $region18: #{pose_vqvae_forward.1} parent=1 // pred_check
      _
    $region19: #{pose_vqvae_forward.1} parent=1 // pred_check_branch
      %44 = sbr.rel (0) target = $region21
    $region20: #{pose_vqvae_forward.1} parent=1 // pred_region
      _
    $region21: #{pose_vqvae_forward.1} parent=1 // pred_fallthru
      _
    // Predicated region
    $region22: #{pose_vqvae_forward.1} parent=1 // pred_check
      _
    $region23: #{pose_vqvae_forward.1} parent=1 // pred_check_branch
      %46 = sbr.rel (0) target = $region25
    $region24: #{pose_vqvae_forward.1} parent=1 // pred_region
      %s48 = ssub.s32 16384, 16384
      %49 = vsyncadd [#allocation3], %s48
      %s50 = sshll.u32 [#allocation2], 4
      %s51 = int_to_ptr.vmem [resolvable:$true] %s50
      %56 = dma.hbm_to_vmem [thread:$0]  %s5, 16384, %s51, [#allocation3], 256, 256, 16
    $region25: #{pose_vqvae_forward.1} parent=1 // pred_fallthru
      _
    // Predicated region
    $region26: #{pose_vqvae_forward.1} parent=1 // pred_check
      _
    $region27: #{pose_vqvae_forward.1} parent=1 // pred_check_branch
      %58 = sbr.rel (0) target = $region29
    $region28: #{pose_vqvae_forward.1} parent=1 // pred_region
      _
    $region29: #{pose_vqvae_forward.1} parent=1 // pred_fallthru
      _
    // Predicated region
    $region30: #{pose_vqvae_forward.1} parent=1 // pred_check
      _
    $region31: #{pose_vqvae_forward.1} parent=1 // pred_check_branch
      %60 = sbr.rel (0) target = $region33
    $region32: #{pose_vqvae_forward.1} parent=1 // pred_region
      %s62 = ssub.s32 16384, 16384
      %63 = vsyncadd [#allocation5], %s62
      %s64 = sshll.u32 [#allocation4], 4
      %s65 = int_to_ptr.vmem [resolvable:$true] %s64
      %70 = dma.hbm_to_vmem [thread:$0]  %s7, 16384, %s65, [#allocation5], 256, 256, 16
    $region33: #{pose_vqvae_forward.1} parent=1 // pred_fallthru
      _
    // Predicated region
    $region34: #{pose_vqvae_forward.1} parent=1 // pred_check
      _
    $region35: #{pose_vqvae_forward.1} parent=1 // pred_check_branch
      %72 = sbr.rel (0) target = $region37
    $region36: #{pose_vqvae_forward.1} parent=1 // pred_region
      _
    $region37: #{pose_vqvae_forward.1} parent=1 // pred_fallthru
      _
    // Predicated region
    $region38: #{pose_vqvae_forward.1} parent=1 // pred_check
      _
    $region39: #{pose_vqvae_forward.1} parent=1 // pred_check_branch
      %74 = sbr.rel (0) target = $region41
    $region40: #{pose_vqvae_forward.1} parent=1 // pred_region
      _
    $region41: #{pose_vqvae_forward.1} parent=1 // pred_fallthru
      _
    // Predicated region
    $region42: #{pose_vqvae_forward.1} parent=1 // pred_check
      _
    $region43: #{pose_vqvae_forward.1} parent=1 // pred_check_branch
      %76 = sbr.rel (0) target = $region45
    $region44: #{pose_vqvae_forward.1} parent=1 // pred_region
      _
    $region45: #{pose_vqvae_forward.1} parent=1 // pred_fallthru
      _
    // Predicated region
    $region46: #{pose_vqvae_forward.1} parent=1 // pred_check
      _
    $region47: #{pose_vqvae_forward.1} parent=1 // pred_check_branch
      %78 = sbr.rel (0) target = $region49
    $region48: #{pose_vqvae_forward.1} parent=1 // pred_region
      _
    $region49: #{pose_vqvae_forward.1} parent=1 // pred_fallthru
      _
    // Predicated region
    $region50: #{pose_vqvae_forward.1} parent=1 // pred_check
      _
    $region51: #{pose_vqvae_forward.1} parent=1 // pred_check_branch
      %80 = sbr.rel (0) target = $region53
    $region52: #{pose_vqvae_forward.1} parent=1 // pred_region
      _
    $region53: #{pose_vqvae_forward.1} parent=1 // pred_fallthru
      _
    // Predicated region
    $region54: #{pose_vqvae_forward.1} parent=1 // pred_check
      _
    $region55: #{pose_vqvae_forward.1} parent=1 // pred_check_branch
      %82 = sbr.rel (0) target = $region57
    $region56: #{pose_vqvae_forward.1} parent=1 // pred_region
      _
    $region57: #{pose_vqvae_forward.1} parent=1 // pred_fallthru
      _
    // Predicated region
    $region58: #{pose_vqvae_forward.1} parent=1 // pred_check
      _
    $region59: #{pose_vqvae_forward.1} parent=1 // pred_check_branch
      %84 = sbr.rel (0) target = $region61
    $region60: #{pose_vqvae_forward.1} parent=1 // pred_region
      _
    $region61: #{pose_vqvae_forward.1} parent=1 // pred_fallthru
      _
    // Predicated region
    $region62: #{pose_vqvae_forward.1} parent=1 // pred_check
      _
    $region63: #{pose_vqvae_forward.1} parent=1 // pred_check_branch
      %86 = sbr.rel (0) target = $region65
    $region64: #{pose_vqvae_forward.1} parent=1 // pred_region
      _
    $region65: #{pose_vqvae_forward.1} parent=1 // pred_fallthru
      _
    // Predicated region
    $region66: #{pose_vqvae_forward.1} parent=1 // pred_check
      _
    $region67: #{pose_vqvae_forward.1} parent=1 // pred_check_branch
      %88 = sbr.rel (0) target = $region69
    $region68: #{pose_vqvae_forward.1} parent=1 // pred_region
      _
    $region69: #{pose_vqvae_forward.1} parent=1 // pred_fallthru
      _
    // Predicated region
    $region70: #{pose_vqvae_forward.1} parent=1 // pred_check
      _
    $region71: #{pose_vqvae_forward.1} parent=1 // pred_check_branch
      %90 = sbr.rel (0) target = $region73
    $region72: #{pose_vqvae_forward.1} parent=1 // pred_region
      %s92 = ssub.s32 16384, 16384
      %93 = vsyncadd [#allocation5], %s92
      %s94 = sshll.u32 [#allocation6], 4
      %s95 = int_to_ptr.vmem [resolvable:$true] %s94
      %100 = dma.hbm_to_vmem [thread:$0]  %s17, 16384, %s95, [#allocation5], 256, 256, 16
    $region73: #{pose_vqvae_forward.1} parent=1 // pred_fallthru
      _
    // Predicated region
    $region74: #{pose_vqvae_forward.1} parent=1 // pred_check
      _
    $region75: #{pose_vqvae_forward.1} parent=1 // pred_check_branch
      %102 = sbr.rel (0) target = $region77
    $region76: #{pose_vqvae_forward.1} parent=1 // pred_region
      %s104 = ssub.s32 64, 64
      %105 = vsyncadd [#allocation8], %s104
      %s107 = sshll.u32 [#allocation7], 4
      %s108 = int_to_ptr.vmem [resolvable:$true] %s107
      %110 = dma.hbm_to_vmem [thread:$0]  %s18, 64, %s108, [#allocation8]
    $region77: #{pose_vqvae_forward.1} parent=1 // pred_fallthru
      _
    // Predicated region
    $region78: #{pose_vqvae_forward.1} parent=1 // pred_check
      _
    $region79: #{pose_vqvae_forward.1} parent=1 // pred_check_branch
      %112 = sbr.rel (0) target = $region81
    $region80: #{pose_vqvae_forward.1} parent=1 // pred_region
      %s114 = ssub.s32 16384, 16384
      %115 = vsyncadd [#allocation8], %s114
      %s116 = sshll.u32 [#allocation9], 4
      %s117 = int_to_ptr.vmem [resolvable:$true] %s116
      %122 = dma.hbm_to_vmem [thread:$0]  %s19, 16384, %s117, [#allocation8], 256, 256, 16
    $region81: #{pose_vqvae_forward.1} parent=1 // pred_fallthru
      _
    // Predicated region
    $region82: #{pose_vqvae_forward.1} parent=1 // pred_check
      _
    $region83: #{pose_vqvae_forward.1} parent=1 // pred_check_branch
      %124 = sbr.rel (0) target = $region85
    $region84: #{pose_vqvae_forward.1} parent=1 // pred_region
      %s126 = ssub.s32 64, 64
      %127 = vsyncadd [#allocation11], %s126
      %s129 = sshll.u32 [#allocation10], 4
      %s130 = int_to_ptr.vmem [resolvable:$true] %s129
      %132 = dma.hbm_to_vmem [thread:$0]  %s20, 64, %s130, [#allocation11]
    $region85: #{pose_vqvae_forward.1} parent=1 // pred_fallthru
      _
    // Predicated region
    $region86: #{pose_vqvae_forward.1} parent=1 // pred_check
      _
    $region87: #{pose_vqvae_forward.1} parent=1 // pred_check_branch
      %134 = sbr.rel (0) target = $region89
    $region88: #{pose_vqvae_forward.1} parent=1 // pred_region
      _
    $region89: #{pose_vqvae_forward.1} parent=1 // pred_fallthru
      _
    // Predicated region
    $region90: #{pose_vqvae_forward.1} parent=1 // pred_check
      _
    $region91: #{pose_vqvae_forward.1} parent=1 // pred_check_branch
      %136 = sbr.rel (0) target = $region93
    $region92: #{pose_vqvae_forward.1} parent=1 // pred_region
      %s138 = ssub.s32 16, 16
      %139 = vsyncadd [#allocation11], %s138
      %s141 = sshll.u32 [#allocation12], 4
      %s142 = int_to_ptr.vmem [resolvable:$true] %s141
      %144 = dma.hbm_to_vmem [thread:$0]  %s22, 16, %s142, [#allocation11]
    $region93: #{pose_vqvae_forward.1} parent=1 // pred_fallthru
      _
    // Predicated region
    $region94: #{pose_vqvae_forward.1} parent=1 // pred_check
      _
    $region95: #{pose_vqvae_forward.1} parent=1 // pred_check_branch
      %146 = sbr.rel (0) target = $region97
    $region96: #{pose_vqvae_forward.1} parent=1 // pred_region
      %147 = dma.done [#allocation3], 16384
    $region97: #{pose_vqvae_forward.1} parent=1 // pred_fallthru
      _
    // Predicated region
    $region98: #{pose_vqvae_forward.1} parent=1 // pred_check
      _
    $region99: #{pose_vqvae_forward.1} parent=1 // pred_check_branch
      %149 = sbr.rel (0) target = $region101
    $region100: #{pose_vqvae_forward.1} parent=1 // pred_region
      %150 = dma.done [#allocation5], 16384
    $region101: #{pose_vqvae_forward.1} parent=1 // pred_fallthru
      _
    // Predicated region
    $region102: #{pose_vqvae_forward.1} parent=1 // pred_check
      _
    $region103: #{pose_vqvae_forward.1} parent=1 // pred_check_branch
      %152 = sbr.rel (0) target = $region105
    $region104: #{pose_vqvae_forward.1} parent=1 // pred_region
      %153 = dma.done [#allocation5], 16384
    $region105: #{pose_vqvae_forward.1} parent=1 // pred_fallthru
      _
    // Predicated region
    $region106: #{pose_vqvae_forward.1} parent=1 // pred_check
      _
    $region107: #{pose_vqvae_forward.1} parent=1 // pred_check_branch
      %155 = sbr.rel (0) target = $region109
    $region108: #{pose_vqvae_forward.1} parent=1 // pred_region
      %156 = dma.done [#allocation8], 64
    $region109: #{pose_vqvae_forward.1} parent=1 // pred_fallthru
      _
    // Predicated region
    $region110: #{pose_vqvae_forward.1} parent=1 // pred_check
      _
    $region111: #{pose_vqvae_forward.1} parent=1 // pred_check_branch
      %158 = sbr.rel (0) target = $region113
    $region112: #{pose_vqvae_forward.1} parent=1 // pred_region
      %159 = dma.done [#allocation8], 16384
    $region113: #{pose_vqvae_forward.1} parent=1 // pred_fallthru
      _
    // Predicated region
    $region114: #{pose_vqvae_forward.1} parent=1 // pred_check
      _
    $region115: #{pose_vqvae_forward.1} parent=1 // pred_check_branch
      %161 = sbr.rel (0) target = $region117
    $region116: #{pose_vqvae_forward.1} parent=1 // pred_region
      %162 = dma.done [#allocation11], 64
    $region117: #{pose_vqvae_forward.1} parent=1 // pred_fallthru
      _
    // Predicated region
    $region118: #{pose_vqvae_forward.1} parent=1 // pred_check
      _
    $region119: #{pose_vqvae_forward.1} parent=1 // pred_check_branch
      %164 = sbr.rel (0) target = $region121
    $region120: #{pose_vqvae_forward.1} parent=1 // pred_region
      %165 = dma.done [#allocation11], 16
    $region121: #{pose_vqvae_forward.1} parent=1 // pred_fallthru
      _
    %v167 = vld [vmem:[%s0] sm:$0xf]
    %v168 = vld [vmem:[%s0 + $0x4] sm:$0xf]
    %v169 = vld [vmem:[%s1] sm:$0xf]
    %v170 = vld [vmem:[%s1 + $0x4] sm:$0xf]
    %v171 = vld [vmem:[%s2] sm:$0xff]
    %v172 = vld [vmem:[%s2 + $0x8] sm:$0xff]
    %v173 = vld [vmem:[%s2 + $0x10] sm:$0xff]
    %v174 = vld [vmem:[%s2 + $0x18] sm:$0xff]
    %v175 = vld [vmem:[%s3] sm:$0xff]
    %v176 = vld [vmem:[%s3 + $0x8] sm:$0xff]
    %v177 = vld [vmem:[%s3 + $0x10] sm:$0xff]
    %v178 = vld [vmem:[%s3 + $0x18] sm:$0xff]
    %v181 = vunpack.c.l.b16 %v169
    %v182 = vunpack.c.l.b16 %v170
    %v183 = vpack.c.b16 %v182, %v181
    %v188 = vunpack.c.l.b16 %v175
    %v189 = vunpack.c.h.b16 %v175
    %v190 = vunpack.c.l.b16 %v176
    %v191 = vunpack.c.h.b16 %v176
    %v192 = vunpack.c.l.b16 %v177
    %v193 = vunpack.c.h.b16 %v177
    %v194 = vunpack.c.l.b16 %v178
    %v195 = vunpack.c.h.b16 %v178
    %v196 = vpack.c.b16 %v192, %v188
    %v197 = vpack.c.b16 %v193, %v189
    %v198 = vpack.c.b16 %v194, %v190
    %v199 = vpack.c.b16 %v195, %v191
    %vm204 = vcmask 130048
    %v206 = vsel %vm204, %v183, 0
    %208 = vmatprep.subr.bf16.mxu0 %v197
    %209 = vmatpush1.bf16.msra.mxu0 %v196
    %210 = vmatprep.subr.bf16.mxu0 0
    %211 = vmatpush1.bf16.msra.mxu0 0
    %212 = vmatprep.subr.bf16.mxu0 0
    %213 = vmatpush1.bf16.msra.mxu0 0
    %214 = vmatprep.subr.bf16.mxu0 0
    %215 = vmatpush1.bf16.msra.mxu0 0
    %216 = vmatprep.subr.bf16.mxu0 0
    %217 = vmatpush1.bf16.msra.mxu0 0
    %218 = vmatprep.subr.bf16.mxu0 0
    %219 = vmatpush1.bf16.msra.mxu0 0
    %220 = vmatprep.subr.bf16.mxu0 0
    %221 = vmatpush1.bf16.msra.mxu0 0
    %222 = vmatprep.subr.bf16.mxu0 0
    %223 = vmatpush1.bf16.msra.mxu0 0
    %224 = vmatprep.subr.bf16.mxu0 0
    %225 = vmatpush1.bf16.msra.mxu0 0
    %226 = vmatprep.subr.bf16.mxu0 0
    %227 = vmatpush1.bf16.msra.mxu0 0
    %228 = vmatprep.subr.bf16.mxu0 0
    %229 = vmatpush1.bf16.msra.mxu0 0
    %230 = vmatprep.subr.bf16.mxu0 0
    %231 = vmatpush1.bf16.msra.mxu0 0
    %232 = vmatprep.subr.bf16.mxu0 0
    %233 = vmatpush1.bf16.msra.mxu0 0
    %234 = vmatprep.subr.bf16.mxu0 0
    %235 = vmatpush1.bf16.msra.mxu0 0
    %236 = vmatprep.subr.bf16.mxu0 0
    %237 = vmatpush1.bf16.msra.mxu0 0
    %238 = vmatprep.subr.bf16.mxu0 0
    %239 = vmatpush1.bf16.msra.mxu0 0
    %240 = vmatprep.mubr.bf16.mxu0 0
    %241 = vmatmul.mubr.bf16.gmra.mrb[0].mxu0 %v206
    %v242 = vpop.f32.mrb[0].mxu0
    %v243 = vadd.f32 0.0, %v242
    %v244 = vpop.f32.mrb[0].mxu0
    %v245 = vadd.f32 0.0, %v244
    %v246 = vpop.f32.mrb[0].mxu0
    %v247 = vadd.f32 0.0, %v246
    %v248 = vpop.f32.mrb[0].mxu0
    %v249 = vadd.f32 0.0, %v248
    %250 = vdwg.mxu0
    %251 = vmatprep.subr.bf16.mxu0 %v199
    %252 = vmatpush1.bf16.msra.mxu0 %v198
    %253 = vmatprep.subr.bf16.mxu0 0
    %254 = vmatpush1.bf16.msra.mxu0 0
    %255 = vmatprep.subr.bf16.mxu0 0
    %256 = vmatpush1.bf16.msra.mxu0 0
    %257 = vmatprep.subr.bf16.mxu0 0
    %258 = vmatpush1.bf16.msra.mxu0 0
    %259 = vmatprep.subr.bf16.mxu0 0
    %260 = vmatpush1.bf16.msra.mxu0 0
    %261 = vmatprep.subr.bf16.mxu0 0
    %262 = vmatpush1.bf16.msra.mxu0 0
    %263 = vmatprep.subr.bf16.mxu0 0
    %264 = vmatpush1.bf16.msra.mxu0 0
    %265 = vmatprep.subr.bf16.mxu0 0
    %266 = vmatpush1.bf16.msra.mxu0 0
    %267 = vmatprep.subr.bf16.mxu0 0
    %268 = vmatpush1.bf16.msra.mxu0 0
    %269 = vmatprep.subr.bf16.mxu0 0
    %270 = vmatpush1.bf16.msra.mxu0 0
    %271 = vmatprep.subr.bf16.mxu0 0
    %272 = vmatpush1.bf16.msra.mxu0 0
    %273 = vmatprep.subr.bf16.mxu0 0
    %274 = vmatpush1.bf16.msra.mxu0 0
    %275 = vmatprep.subr.bf16.mxu0 0
    %276 = vmatpush1.bf16.msra.mxu0 0
    %277 = vmatprep.subr.bf16.mxu0 0
    %278 = vmatpush1.bf16.msra.mxu0 0
    %279 = vmatprep.subr.bf16.mxu0 0
    %280 = vmatpush1.bf16.msra.mxu0 0
    %281 = vmatprep.subr.bf16.mxu0 0
    %282 = vmatpush1.bf16.msra.mxu0 0
    %283 = vmatprep.mubr.bf16.mxu0 0
    %284 = vmatmul.mubr.bf16.gmra.mrb[0].mxu0 %v206
    %v285 = vpop.f32.mrb[0].mxu0
    %v286 = vadd.f32 0.0, %v285
    %v287 = vpop.f32.mrb[0].mxu0
    %v288 = vadd.f32 0.0, %v287
    %v289 = vpop.f32.mrb[0].mxu0
    %v290 = vadd.f32 0.0, %v289
    %v291 = vpop.f32.mrb[0].mxu0
    %v292 = vadd.f32 0.0, %v291
    %293 = vdwg.mxu0
    %v296 = vunpack.c.l.b16 %v167
    %v297 = vunpack.c.l.b16 %v168
    %v298 = vpack.c.b16 %v297, %v296
    %v303 = vunpack.c.l.b16 %v171
    %v304 = vunpack.c.h.b16 %v171
    %v305 = vunpack.c.l.b16 %v172
    %v306 = vunpack.c.h.b16 %v172
    %v307 = vunpack.c.l.b16 %v173
    %v308 = vunpack.c.h.b16 %v173
    %v309 = vunpack.c.l.b16 %v174
    %v310 = vunpack.c.h.b16 %v174
    %v311 = vpack.c.b16 %v307, %v303
    %v312 = vpack.c.b16 %v308, %v304
    %v313 = vpack.c.b16 %v309, %v305
    %v314 = vpack.c.b16 %v310, %v306
    %v320 = vsel %vm204, %v298, 0
    %322 = vmatprep.subr.bf16.mxu0 %v312
    %323 = vmatpush1.bf16.msra.mxu0 %v311
    %324 = vmatprep.subr.bf16.mxu0 0
    %325 = vmatpush1.bf16.msra.mxu0 0
    %326 = vmatprep.subr.bf16.mxu0 0
    %327 = vmatpush1.bf16.msra.mxu0 0
    %328 = vmatprep.subr.bf16.mxu0 0
    %329 = vmatpush1.bf16.msra.mxu0 0
    %330 = vmatprep.subr.bf16.mxu0 0
    %331 = vmatpush1.bf16.msra.mxu0 0
    %332 = vmatprep.subr.bf16.mxu0 0
    %333 = vmatpush1.bf16.msra.mxu0 0
    %334 = vmatprep.subr.bf16.mxu0 0
    %335 = vmatpush1.bf16.msra.mxu0 0
    %336 = vmatprep.subr.bf16.mxu0 0
    %337 = vmatpush1.bf16.msra.mxu0 0
    %338 = vmatprep.subr.bf16.mxu0 0
    %339 = vmatpush1.bf16.msra.mxu0 0
    %340 = vmatprep.subr.bf16.mxu0 0
    %341 = vmatpush1.bf16.msra.mxu0 0
    %342 = vmatprep.subr.bf16.mxu0 0
    %343 = vmatpush1.bf16.msra.mxu0 0
    %344 = vmatprep.subr.bf16.mxu0 0
    %345 = vmatpush1.bf16.msra.mxu0 0
    %346 = vmatprep.subr.bf16.mxu0 0
    %347 = vmatpush1.bf16.msra.mxu0 0
    %348 = vmatprep.subr.bf16.mxu0 0
    %349 = vmatpush1.bf16.msra.mxu0 0
    %350 = vmatprep.subr.bf16.mxu0 0
    %351 = vmatpush1.bf16.msra.mxu0 0
    %352 = vmatprep.subr.bf16.mxu0 0
    %353 = vmatpush1.bf16.msra.mxu0 0
    %354 = vmatprep.mubr.bf16.mxu0 0
    %355 = vmatmul.mubr.bf16.gmra.mrb[0].mxu0 %v320
    %v356 = vpop.f32.mrb[0].mxu0
    %v357 = vadd.f32 %v243, %v356
    %v358 = vpop.f32.mrb[0].mxu0
    %v359 = vadd.f32 %v245, %v358
    %v360 = vpop.f32.mrb[0].mxu0
    %v361 = vadd.f32 %v247, %v360
    %v362 = vpop.f32.mrb[0].mxu0
    %v363 = vadd.f32 %v249, %v362
    %364 = vdwg.mxu0
    %365 = vmatprep.subr.bf16.mxu0 %v314
    %366 = vmatpush1.bf16.msra.mxu0 %v313
    %367 = vmatprep.subr.bf16.mxu0 0
    %368 = vmatpush1.bf16.msra.mxu0 0
    %369 = vmatprep.subr.bf16.mxu0 0
    %370 = vmatpush1.bf16.msra.mxu0 0
    %371 = vmatprep.subr.bf16.mxu0 0
    %372 = vmatpush1.bf16.msra.mxu0 0
    %373 = vmatprep.subr.bf16.mxu0 0
    %374 = vmatpush1.bf16.msra.mxu0 0
    %375 = vmatprep.subr.bf16.mxu0 0
    %376 = vmatpush1.bf16.msra.mxu0 0
    %377 = vmatprep.subr.bf16.mxu0 0
    %378 = vmatpush1.bf16.msra.mxu0 0
    %379 = vmatprep.subr.bf16.mxu0 0
    %380 = vmatpush1.bf16.msra.mxu0 0
    %381 = vmatprep.subr.bf16.mxu0 0
    %382 = vmatpush1.bf16.msra.mxu0 0
    %383 = vmatprep.subr.bf16.mxu0 0
    %384 = vmatpush1.bf16.msra.mxu0 0
    %385 = vmatprep.subr.bf16.mxu0 0
    %386 = vmatpush1.bf16.msra.mxu0 0
    %387 = vmatprep.subr.bf16.mxu0 0
    %388 = vmatpush1.bf16.msra.mxu0 0
    %389 = vmatprep.subr.bf16.mxu0 0
    %390 = vmatpush1.bf16.msra.mxu0 0
    %391 = vmatprep.subr.bf16.mxu0 0
    %392 = vmatpush1.bf16.msra.mxu0 0
    %393 = vmatprep.subr.bf16.mxu0 0
    %394 = vmatpush1.bf16.msra.mxu0 0
    %395 = vmatprep.subr.bf16.mxu0 0
    %396 = vmatpush1.bf16.msra.mxu0 0
    %397 = vmatprep.mubr.bf16.mxu0 0
    %398 = vmatmul.mubr.bf16.gmra.mrb[0].mxu0 %v320
    %v399 = vpop.f32.mrb[0].mxu0
    %v400 = vadd.f32 %v286, %v399
    %v401 = vpop.f32.mrb[0].mxu0
    %v402 = vadd.f32 %v288, %v401
    %v403 = vpop.f32.mrb[0].mxu0
    %v404 = vadd.f32 %v290, %v403
    %v405 = vpop.f32.mrb[0].mxu0
    %v406 = vadd.f32 %v292, %v405
    %407 = vdwg.mxu0
    %v408 = vld [vmem:[%s4] sm:$0xf]
    %v410 = vlaneseq
    %v411 = vshrl.u32 %v410, 7
    %v412 = vsub.s32 0, %v411
    %v413 = vrot.slane %v408, %v412
    %v414 = vlaneseq
    %v415 = vshrl.u32 %v414, 7
    %v416 = vsub.s32 1, %v415
    %v417 = vrot.slane %v408, %v416
    %v418 = vlaneseq
    %v419 = vshrl.u32 %v418, 7
    %v420 = vsub.s32 2, %v419
    %v421 = vrot.slane %v408, %v420
    %v422 = vlaneseq
    %v423 = vshrl.u32 %v422, 7
    %v424 = vsub.s32 3, %v423
    %v425 = vrot.slane %v408, %v424
    %v430 = vadd.f32 %v357, %v413
    %v431 = vadd.f32 %v359, %v417
    %v432 = vadd.f32 %v400, %v421
    %v433 = vadd.f32 %v402, %v425
    %v434 = vadd.f32 %v361, %v413
    %v435 = vadd.f32 %v363, %v417
    %v436 = vadd.f32 %v404, %v421
    %v437 = vadd.f32 %v406, %v425
    %v438 = vmax.f32 %v430, 0.0
    %v439 = vmax.f32 %v431, 0.0
    %v440 = vmax.f32 %v432, 0.0
    %v441 = vmax.f32 %v433, 0.0
    %v442 = vmax.f32 %v434, 0.0
    %v443 = vmax.f32 %v435, 0.0
    %v444 = vmax.f32 %v436, 0.0
    %v445 = vmax.f32 %v437, 0.0
    %v446 = vpack.c.bf16 %v442, %v438
    %v447 = vpack.c.bf16 %v443, %v439
    %v448 = vpack.c.bf16 %v444, %v440
    %v449 = vpack.c.bf16 %v445, %v441
    %v450 = vld [vmem:[#allocation2] sm:$0xff]
    %v451 = vld [vmem:[#allocation2 + $0x8] sm:$0xff]
    %v452 = vld [vmem:[#allocation2 + $0x10] sm:$0xff]
    %v453 = vld [vmem:[#allocation2 + $0x18] sm:$0xff]
    %v454 = vld [vmem:[#allocation2 + $0x20] sm:$0xff]
    %v455 = vld [vmem:[#allocation2 + $0x28] sm:$0xff]
    %v456 = vld [vmem:[#allocation2 + $0x30] sm:$0xff]
    %v457 = vld [vmem:[#allocation2 + $0x38] sm:$0xff]
    %v458 = vld [vmem:[#allocation2 + $0x40] sm:$0xff]
    %v459 = vld [vmem:[#allocation2 + $0x48] sm:$0xff]
    %v460 = vld [vmem:[#allocation2 + $0x50] sm:$0xff]
    %v461 = vld [vmem:[#allocation2 + $0x58] sm:$0xff]
    %v462 = vld [vmem:[#allocation2 + $0x60] sm:$0xff]
    %v463 = vld [vmem:[#allocation2 + $0x68] sm:$0xff]
    %v464 = vld [vmem:[#allocation2 + $0x70] sm:$0xff]
    %v465 = vld [vmem:[#allocation2 + $0x78] sm:$0xff]
    %v466 = vld [vmem:[#allocation2 + $0x80] sm:$0xff]
    %v467 = vld [vmem:[#allocation2 + $0x88] sm:$0xff]
    %v468 = vld [vmem:[#allocation2 + $0x90] sm:$0xff]
    %v469 = vld [vmem:[#allocation2 + $0x98] sm:$0xff]
    %v470 = vld [vmem:[#allocation2 + $0xa0] sm:$0xff]
    %v471 = vld [vmem:[#allocation2 + $0xa8] sm:$0xff]
    %v472 = vld [vmem:[#allocation2 + $0xb0] sm:$0xff]
    %v473 = vld [vmem:[#allocation2 + $0xb8] sm:$0xff]
    %v474 = vld [vmem:[#allocation2 + $0xc0] sm:$0xff]
    %v475 = vld [vmem:[#allocation2 + $0xc8] sm:$0xff]
    %v476 = vld [vmem:[#allocation2 + $0xd0] sm:$0xff]
    %v477 = vld [vmem:[#allocation2 + $0xd8] sm:$0xff]
    %v478 = vld [vmem:[#allocation2 + $0xe0] sm:$0xff]
    %v479 = vld [vmem:[#allocation2 + $0xe8] sm:$0xff]
    %v480 = vld [vmem:[#allocation2 + $0xf0] sm:$0xff]
    %v481 = vld [vmem:[#allocation2 + $0xf8] sm:$0xff]
    %v482 = vld [vmem:[#allocation2 + $0x100] sm:$0xff]
    %v483 = vld [vmem:[#allocation2 + $0x108] sm:$0xff]
    %v484 = vld [vmem:[#allocation2 + $0x110] sm:$0xff]
    %v485 = vld [vmem:[#allocation2 + $0x118] sm:$0xff]
    %v486 = vld [vmem:[#allocation2 + $0x120] sm:$0xff]
    %v487 = vld [vmem:[#allocation2 + $0x128] sm:$0xff]
    %v488 = vld [vmem:[#allocation2 + $0x130] sm:$0xff]
    %v489 = vld [vmem:[#allocation2 + $0x138] sm:$0xff]
    %v490 = vld [vmem:[#allocation2 + $0x140] sm:$0xff]
    %v491 = vld [vmem:[#allocation2 + $0x148] sm:$0xff]
    %v492 = vld [vmem:[#allocation2 + $0x150] sm:$0xff]
    %v493 = vld [vmem:[#allocation2 + $0x158] sm:$0xff]
    %v494 = vld [vmem:[#allocation2 + $0x160] sm:$0xff]
    %v495 = vld [vmem:[#allocation2 + $0x168] sm:$0xff]
    %v496 = vld [vmem:[#allocation2 + $0x170] sm:$0xff]
    %v497 = vld [vmem:[#allocation2 + $0x178] sm:$0xff]
    %v498 = vld [vmem:[#allocation2 + $0x180] sm:$0xff]
    %v499 = vld [vmem:[#allocation2 + $0x188] sm:$0xff]
    %v500 = vld [vmem:[#allocation2 + $0x190] sm:$0xff]
    %v501 = vld [vmem:[#allocation2 + $0x198] sm:$0xff]
    %v502 = vld [vmem:[#allocation2 + $0x1a0] sm:$0xff]
    %v503 = vld [vmem:[#allocation2 + $0x1a8] sm:$0xff]
    %v504 = vld [vmem:[#allocation2 + $0x1b0] sm:$0xff]
    %v505 = vld [vmem:[#allocation2 + $0x1b8] sm:$0xff]
    %v506 = vld [vmem:[#allocation2 + $0x1c0] sm:$0xff]
    %v507 = vld [vmem:[#allocation2 + $0x1c8] sm:$0xff]
    %v508 = vld [vmem:[#allocation2 + $0x1d0] sm:$0xff]
    %v509 = vld [vmem:[#allocation2 + $0x1d8] sm:$0xff]
    %v510 = vld [vmem:[#allocation2 + $0x1e0] sm:$0xff]
    %v511 = vld [vmem:[#allocation2 + $0x1e8] sm:$0xff]
    %v512 = vld [vmem:[#allocation2 + $0x1f0] sm:$0xff]
    %v513 = vld [vmem:[#allocation2 + $0x1f8] sm:$0xff]
    %v514 = vld [vmem:[#allocation2 + $0x200] sm:$0xff]
    %v515 = vld [vmem:[#allocation2 + $0x208] sm:$0xff]
    %v516 = vld [vmem:[#allocation2 + $0x210] sm:$0xff]
    %v517 = vld [vmem:[#allocation2 + $0x218] sm:$0xff]
    %v518 = vld [vmem:[#allocation2 + $0x220] sm:$0xff]
    %v519 = vld [vmem:[#allocation2 + $0x228] sm:$0xff]
    %v520 = vld [vmem:[#allocation2 + $0x230] sm:$0xff]
    %v521 = vld [vmem:[#allocation2 + $0x238] sm:$0xff]
    %v522 = vld [vmem:[#allocation2 + $0x240] sm:$0xff]
    %v523 = vld [vmem:[#allocation2 + $0x248] sm:$0xff]
    %v524 = vld [vmem:[#allocation2 + $0x250] sm:$0xff]
    %v525 = vld [vmem:[#allocation2 + $0x258] sm:$0xff]
    %v526 = vld [vmem:[#allocation2 + $0x260] sm:$0xff]
    %v527 = vld [vmem:[#allocation2 + $0x268] sm:$0xff]
    %v528 = vld [vmem:[#allocation2 + $0x270] sm:$0xff]
    %v529 = vld [vmem:[#allocation2 + $0x278] sm:$0xff]
    %v530 = vld [vmem:[#allocation2 + $0x280] sm:$0xff]
    %v531 = vld [vmem:[#allocation2 + $0x288] sm:$0xff]
    %v532 = vld [vmem:[#allocation2 + $0x290] sm:$0xff]
    %v533 = vld [vmem:[#allocation2 + $0x298] sm:$0xff]
    %v534 = vld [vmem:[#allocation2 + $0x2a0] sm:$0xff]
    %v535 = vld [vmem:[#allocation2 + $0x2a8] sm:$0xff]
    %v536 = vld [vmem:[#allocation2 + $0x2b0] sm:$0xff]
    %v537 = vld [vmem:[#allocation2 + $0x2b8] sm:$0xff]
    %v538 = vld [vmem:[#allocation2 + $0x2c0] sm:$0xff]
    %v539 = vld [vmem:[#allocation2 + $0x2c8] sm:$0xff]
    %v540 = vld [vmem:[#allocation2 + $0x2d0] sm:$0xff]
    %v541 = vld [vmem:[#allocation2 + $0x2d8] sm:$0xff]
    %v542 = vld [vmem:[#allocation2 + $0x2e0] sm:$0xff]
    %v543 = vld [vmem:[#allocation2 + $0x2e8] sm:$0xff]
    %v544 = vld [vmem:[#allocation2 + $0x2f0] sm:$0xff]
    %v545 = vld [vmem:[#allocation2 + $0x2f8] sm:$0xff]
    %v546 = vld [vmem:[#allocation2 + $0x300] sm:$0xff]
    %v547 = vld [vmem:[#allocation2 + $0x308] sm:$0xff]
    %v548 = vld [vmem:[#allocation2 + $0x310] sm:$0xff]
    %v549 = vld [vmem:[#allocation2 + $0x318] sm:$0xff]
    %v550 = vld [vmem:[#allocation2 + $0x320] sm:$0xff]
    %v551 = vld [vmem:[#allocation2 + $0x328] sm:$0xff]
    %v552 = vld [vmem:[#allocation2 + $0x330] sm:$0xff]
    %v553 = vld [vmem:[#allocation2 + $0x338] sm:$0xff]
    %v554 = vld [vmem:[#allocation2 + $0x340] sm:$0xff]
    %v555 = vld [vmem:[#allocation2 + $0x348] sm:$0xff]
    %v556 = vld [vmem:[#allocation2 + $0x350] sm:$0xff]
    %v557 = vld [vmem:[#allocation2 + $0x358] sm:$0xff]
    %v558 = vld [vmem:[#allocation2 + $0x360] sm:$0xff]
    %v559 = vld [vmem:[#allocation2 + $0x368] sm:$0xff]
    %v560 = vld [vmem:[#allocation2 + $0x370] sm:$0xff]
    %v561 = vld [vmem:[#allocation2 + $0x378] sm:$0xff]
    %v562 = vld [vmem:[#allocation2 + $0x380] sm:$0xff]
    %v563 = vld [vmem:[#allocation2 + $0x388] sm:$0xff]
    %v564 = vld [vmem:[#allocation2 + $0x390] sm:$0xff]
    %v565 = vld [vmem:[#allocation2 + $0x398] sm:$0xff]
    %v566 = vld [vmem:[#allocation2 + $0x3a0] sm:$0xff]
    %v567 = vld [vmem:[#allocation2 + $0x3a8] sm:$0xff]
    %v568 = vld [vmem:[#allocation2 + $0x3b0] sm:$0xff]
    %v569 = vld [vmem:[#allocation2 + $0x3b8] sm:$0xff]
    %v570 = vld [vmem:[#allocation2 + $0x3c0] sm:$0xff]
    %v571 = vld [vmem:[#allocation2 + $0x3c8] sm:$0xff]
    %v572 = vld [vmem:[#allocation2 + $0x3d0] sm:$0xff]
    %v573 = vld [vmem:[#allocation2 + $0x3d8] sm:$0xff]
    %v574 = vld [vmem:[#allocation2 + $0x3e0] sm:$0xff]
    %v575 = vld [vmem:[#allocation2 + $0x3e8] sm:$0xff]
    %v576 = vld [vmem:[#allocation2 + $0x3f0] sm:$0xff]
    %v577 = vld [vmem:[#allocation2 + $0x3f8] sm:$0xff]
    %v578 = vld [vmem:[%s6] sm:$0xf]
    %v580 = vlaneseq
    %v581 = vshrl.u32 %v580, 7
    %v582 = vsub.s32 0, %v581
    %v583 = vrot.slane %v578, %v582
    %v584 = vlaneseq
    %v585 = vshrl.u32 %v584, 7
    %v586 = vsub.s32 1, %v585
    %v587 = vrot.slane %v578, %v586
    %v588 = vlaneseq
    %v589 = vshrl.u32 %v588, 7
    %v590 = vsub.s32 2, %v589
    %v591 = vrot.slane %v578, %v590
    %v592 = vlaneseq
    %v593 = vshrl.u32 %v592, 7
    %v594 = vsub.s32 3, %v593
    %v595 = vrot.slane %v578, %v594
    %v728 = vunpack.c.l.b16 %v450
    %v729 = vunpack.c.h.b16 %v450
    %v730 = vunpack.c.l.b16 %v451
    %v731 = vunpack.c.h.b16 %v451
    %v732 = vunpack.c.l.b16 %v452
    %v733 = vunpack.c.h.b16 %v452
    %v734 = vunpack.c.l.b16 %v453
    %v735 = vunpack.c.h.b16 %v453
    %v736 = vunpack.c.l.b16 %v454
    %v737 = vunpack.c.h.b16 %v454
    %v738 = vunpack.c.l.b16 %v455
    %v739 = vunpack.c.h.b16 %v455
    %v740 = vunpack.c.l.b16 %v456
    %v741 = vunpack.c.h.b16 %v456
    %v742 = vunpack.c.l.b16 %v457
    %v743 = vunpack.c.h.b16 %v457
    %v744 = vunpack.c.l.b16 %v458
    %v745 = vunpack.c.h.b16 %v458
    %v746 = vunpack.c.l.b16 %v459
    %v747 = vunpack.c.h.b16 %v459
    %v748 = vunpack.c.l.b16 %v460
    %v749 = vunpack.c.h.b16 %v460
    %v750 = vunpack.c.l.b16 %v461
    %v751 = vunpack.c.h.b16 %v461
    %v752 = vunpack.c.l.b16 %v462
    %v753 = vunpack.c.h.b16 %v462
    %v754 = vunpack.c.l.b16 %v463
    %v755 = vunpack.c.h.b16 %v463
    %v756 = vunpack.c.l.b16 %v464
    %v757 = vunpack.c.h.b16 %v464
    %v758 = vunpack.c.l.b16 %v465
    %v759 = vunpack.c.h.b16 %v465
    %v760 = vunpack.c.l.b16 %v466
    %v761 = vunpack.c.h.b16 %v466
    %v762 = vunpack.c.l.b16 %v467
    %v763 = vunpack.c.h.b16 %v467
    %v764 = vunpack.c.l.b16 %v468
    %v765 = vunpack.c.h.b16 %v468
    %v766 = vunpack.c.l.b16 %v469
    %v767 = vunpack.c.h.b16 %v469
    %v768 = vunpack.c.l.b16 %v470
    %v769 = vunpack.c.h.b16 %v470
    %v770 = vunpack.c.l.b16 %v471
    %v771 = vunpack.c.h.b16 %v471
    %v772 = vunpack.c.l.b16 %v472
    %v773 = vunpack.c.h.b16 %v472
    %v774 = vunpack.c.l.b16 %v473
    %v775 = vunpack.c.h.b16 %v473
    %v776 = vunpack.c.l.b16 %v474
    %v777 = vunpack.c.h.b16 %v474
    %v778 = vunpack.c.l.b16 %v475
    %v779 = vunpack.c.h.b16 %v475
    %v780 = vunpack.c.l.b16 %v476
    %v781 = vunpack.c.h.b16 %v476
    %v782 = vunpack.c.l.b16 %v477
    %v783 = vunpack.c.h.b16 %v477
    %v784 = vunpack.c.l.b16 %v478
    %v785 = vunpack.c.h.b16 %v478
    %v786 = vunpack.c.l.b16 %v479
    %v787 = vunpack.c.h.b16 %v479
    %v788 = vunpack.c.l.b16 %v480
    %v789 = vunpack.c.h.b16 %v480
    %v790 = vunpack.c.l.b16 %v481
    %v791 = vunpack.c.h.b16 %v481
    %v792 = vunpack.c.l.b16 %v482
    %v793 = vunpack.c.h.b16 %v482
    %v794 = vunpack.c.l.b16 %v483
    %v795 = vunpack.c.h.b16 %v483
    %v796 = vunpack.c.l.b16 %v484
    %v797 = vunpack.c.h.b16 %v484
    %v798 = vunpack.c.l.b16 %v485
    %v799 = vunpack.c.h.b16 %v485
    %v800 = vunpack.c.l.b16 %v486
    %v801 = vunpack.c.h.b16 %v486
    %v802 = vunpack.c.l.b16 %v487
    %v803 = vunpack.c.h.b16 %v487
    %v804 = vunpack.c.l.b16 %v488
    %v805 = vunpack.c.h.b16 %v488
    %v806 = vunpack.c.l.b16 %v489
    %v807 = vunpack.c.h.b16 %v489
    %v808 = vunpack.c.l.b16 %v490
    %v809 = vunpack.c.h.b16 %v490
    %v810 = vunpack.c.l.b16 %v491
    %v811 = vunpack.c.h.b16 %v491
    %v812 = vunpack.c.l.b16 %v492
    %v813 = vunpack.c.h.b16 %v492
    %v814 = vunpack.c.l.b16 %v493
    %v815 = vunpack.c.h.b16 %v493
    %v816 = vunpack.c.l.b16 %v494
    %v817 = vunpack.c.h.b16 %v494
    %v818 = vunpack.c.l.b16 %v495
    %v819 = vunpack.c.h.b16 %v495
    %v820 = vunpack.c.l.b16 %v496
    %v821 = vunpack.c.h.b16 %v496
    %v822 = vunpack.c.l.b16 %v497
    %v823 = vunpack.c.h.b16 %v497
    %v824 = vunpack.c.l.b16 %v498
    %v825 = vunpack.c.h.b16 %v498
    %v826 = vunpack.c.l.b16 %v499
    %v827 = vunpack.c.h.b16 %v499
    %v828 = vunpack.c.l.b16 %v500
    %v829 = vunpack.c.h.b16 %v500
    %v830 = vunpack.c.l.b16 %v501
    %v831 = vunpack.c.h.b16 %v501
    %v832 = vunpack.c.l.b16 %v502
    %v833 = vunpack.c.h.b16 %v502
    %v834 = vunpack.c.l.b16 %v503
    %v835 = vunpack.c.h.b16 %v503
    %v836 = vunpack.c.l.b16 %v504
    %v837 = vunpack.c.h.b16 %v504
    %v838 = vunpack.c.l.b16 %v505
    %v839 = vunpack.c.h.b16 %v505
    %v840 = vunpack.c.l.b16 %v506
    %v841 = vunpack.c.h.b16 %v506
    %v842 = vunpack.c.l.b16 %v507
    %v843 = vunpack.c.h.b16 %v507
    %v844 = vunpack.c.l.b16 %v508
    %v845 = vunpack.c.h.b16 %v508
    %v846 = vunpack.c.l.b16 %v509
    %v847 = vunpack.c.h.b16 %v509
    %v848 = vunpack.c.l.b16 %v510
    %v849 = vunpack.c.h.b16 %v510
    %v850 = vunpack.c.l.b16 %v511
    %v851 = vunpack.c.h.b16 %v511
    %v852 = vunpack.c.l.b16 %v512
    %v853 = vunpack.c.h.b16 %v512
    %v854 = vunpack.c.l.b16 %v513
    %v855 = vunpack.c.h.b16 %v513
    %v856 = vunpack.c.l.b16 %v514
    %v857 = vunpack.c.h.b16 %v514
    %v858 = vunpack.c.l.b16 %v515
    %v859 = vunpack.c.h.b16 %v515
    %v860 = vunpack.c.l.b16 %v516
    %v861 = vunpack.c.h.b16 %v516
    %v862 = vunpack.c.l.b16 %v517
    %v863 = vunpack.c.h.b16 %v517
    %v864 = vunpack.c.l.b16 %v518
    %v865 = vunpack.c.h.b16 %v518
    %v866 = vunpack.c.l.b16 %v519
    %v867 = vunpack.c.h.b16 %v519
    %v868 = vunpack.c.l.b16 %v520
    %v869 = vunpack.c.h.b16 %v520
    %v870 = vunpack.c.l.b16 %v521
    %v871 = vunpack.c.h.b16 %v521
    %v872 = vunpack.c.l.b16 %v522
    %v873 = vunpack.c.h.b16 %v522
    %v874 = vunpack.c.l.b16 %v523
    %v875 = vunpack.c.h.b16 %v523
    %v876 = vunpack.c.l.b16 %v524
    %v877 = vunpack.c.h.b16 %v524
    %v878 = vunpack.c.l.b16 %v525
    %v879 = vunpack.c.h.b16 %v525
    %v880 = vunpack.c.l.b16 %v526
    %v881 = vunpack.c.h.b16 %v526
    %v882 = vunpack.c.l.b16 %v527
    %v883 = vunpack.c.h.b16 %v527
    %v884 = vunpack.c.l.b16 %v528
    %v885 = vunpack.c.h.b16 %v528
    %v886 = vunpack.c.l.b16 %v529
    %v887 = vunpack.c.h.b16 %v529
    %v888 = vunpack.c.l.b16 %v530
    %v889 = vunpack.c.h.b16 %v530
    %v890 = vunpack.c.l.b16 %v531
    %v891 = vunpack.c.h.b16 %v531
    %v892 = vunpack.c.l.b16 %v532
    %v893 = vunpack.c.h.b16 %v532
    %v894 = vunpack.c.l.b16 %v533
    %v895 = vunpack.c.h.b16 %v533
    %v896 = vunpack.c.l.b16 %v534
    %v897 = vunpack.c.h.b16 %v534
    %v898 = vunpack.c.l.b16 %v535
    %v899 = vunpack.c.h.b16 %v535
    %v900 = vunpack.c.l.b16 %v536
    %v901 = vunpack.c.h.b16 %v536
    %v902 = vunpack.c.l.b16 %v537
    %v903 = vunpack.c.h.b16 %v537
    %v904 = vunpack.c.l.b16 %v538
    %v905 = vunpack.c.h.b16 %v538
    %v906 = vunpack.c.l.b16 %v539
    %v907 = vunpack.c.h.b16 %v539
    %v908 = vunpack.c.l.b16 %v540
    %v909 = vunpack.c.h.b16 %v540
    %v910 = vunpack.c.l.b16 %v541
    %v911 = vunpack.c.h.b16 %v541
    %v912 = vunpack.c.l.b16 %v542
    %v913 = vunpack.c.h.b16 %v542
    %v914 = vunpack.c.l.b16 %v543
    %v915 = vunpack.c.h.b16 %v543
    %v916 = vunpack.c.l.b16 %v544
    %v917 = vunpack.c.h.b16 %v544
    %v918 = vunpack.c.l.b16 %v545
    %v919 = vunpack.c.h.b16 %v545
    %v920 = vunpack.c.l.b16 %v546
    %v921 = vunpack.c.h.b16 %v546
    %v922 = vunpack.c.l.b16 %v547
    %v923 = vunpack.c.h.b16 %v547
    %v924 = vunpack.c.l.b16 %v548
    %v925 = vunpack.c.h.b16 %v548
    %v926 = vunpack.c.l.b16 %v549
    %v927 = vunpack.c.h.b16 %v549
    %v928 = vunpack.c.l.b16 %v550
    %v929 = vunpack.c.h.b16 %v550
    %v930 = vunpack.c.l.b16 %v551
    %v931 = vunpack.c.h.b16 %v551
    %v932 = vunpack.c.l.b16 %v552
    %v933 = vunpack.c.h.b16 %v552
    %v934 = vunpack.c.l.b16 %v553
    %v935 = vunpack.c.h.b16 %v553
    %v936 = vunpack.c.l.b16 %v554
    %v937 = vunpack.c.h.b16 %v554
    %v938 = vunpack.c.l.b16 %v555
    %v939 = vunpack.c.h.b16 %v555
    %v940 = vunpack.c.l.b16 %v556
    %v941 = vunpack.c.h.b16 %v556
    %v942 = vunpack.c.l.b16 %v557
    %v943 = vunpack.c.h.b16 %v557
    %v944 = vunpack.c.l.b16 %v558
    %v945 = vunpack.c.h.b16 %v558
    %v946 = vunpack.c.l.b16 %v559
    %v947 = vunpack.c.h.b16 %v559
    %v948 = vunpack.c.l.b16 %v560
    %v949 = vunpack.c.h.b16 %v560
    %v950 = vunpack.c.l.b16 %v561
    %v951 = vunpack.c.h.b16 %v561
    %v952 = vunpack.c.l.b16 %v562
    %v953 = vunpack.c.h.b16 %v562
    %v954 = vunpack.c.l.b16 %v563
    %v955 = vunpack.c.h.b16 %v563
    %v956 = vunpack.c.l.b16 %v564
    %v957 = vunpack.c.h.b16 %v564
    %v958 = vunpack.c.l.b16 %v565
    %v959 = vunpack.c.h.b16 %v565
    %v960 = vunpack.c.l.b16 %v566
    %v961 = vunpack.c.h.b16 %v566
    %v962 = vunpack.c.l.b16 %v567
    %v963 = vunpack.c.h.b16 %v567
    %v964 = vunpack.c.l.b16 %v568
    %v965 = vunpack.c.h.b16 %v568
    %v966 = vunpack.c.l.b16 %v569
    %v967 = vunpack.c.h.b16 %v569
    %v968 = vunpack.c.l.b16 %v570
    %v969 = vunpack.c.h.b16 %v570
    %v970 = vunpack.c.l.b16 %v571
    %v971 = vunpack.c.h.b16 %v571
    %v972 = vunpack.c.l.b16 %v572
    %v973 = vunpack.c.h.b16 %v572
    %v974 = vunpack.c.l.b16 %v573
    %v975 = vunpack.c.h.b16 %v573
    %v976 = vunpack.c.l.b16 %v574
    %v977 = vunpack.c.h.b16 %v574
    %v978 = vunpack.c.l.b16 %v575
    %v979 = vunpack.c.h.b16 %v575
    %v980 = vunpack.c.l.b16 %v576
    %v981 = vunpack.c.h.b16 %v576
    %v982 = vunpack.c.l.b16 %v577
    %v983 = vunpack.c.h.b16 %v577
    %v984 = vpack.c.b16 %v732, %v728
    %v985 = vpack.c.b16 %v733, %v729
    %v986 = vpack.c.b16 %v734, %v730
    %v987 = vpack.c.b16 %v735, %v731
    %v988 = vpack.c.b16 %v740, %v736
    %v989 = vpack.c.b16 %v741, %v737
    %v990 = vpack.c.b16 %v742, %v738
    %v991 = vpack.c.b16 %v743, %v739
    %v992 = vpack.c.b16 %v748, %v744
    %v993 = vpack.c.b16 %v749, %v745
    %v994 = vpack.c.b16 %v750, %v746
    %v995 = vpack.c.b16 %v751, %v747
    %v996 = vpack.c.b16 %v756, %v752
    %v997 = vpack.c.b16 %v757, %v753
    %v998 = vpack.c.b16 %v758, %v754
    %v999 = vpack.c.b16 %v759, %v755
    %v1000 = vpack.c.b16 %v764, %v760
    %v1001 = vpack.c.b16 %v765, %v761
    %v1002 = vpack.c.b16 %v766, %v762
    %v1003 = vpack.c.b16 %v767, %v763
    %v1004 = vpack.c.b16 %v772, %v768
    %v1005 = vpack.c.b16 %v773, %v769
    %v1006 = vpack.c.b16 %v774, %v770
    %v1007 = vpack.c.b16 %v775, %v771
    %v1008 = vpack.c.b16 %v780, %v776
    %v1009 = vpack.c.b16 %v781, %v777
    %v1010 = vpack.c.b16 %v782, %v778
    %v1011 = vpack.c.b16 %v783, %v779
    %v1012 = vpack.c.b16 %v788, %v784
    %v1013 = vpack.c.b16 %v789, %v785
    %v1014 = vpack.c.b16 %v790, %v786
    %v1015 = vpack.c.b16 %v791, %v787
    %v1016 = vpack.c.b16 %v796, %v792
    %v1017 = vpack.c.b16 %v797, %v793
    %v1018 = vpack.c.b16 %v798, %v794
    %v1019 = vpack.c.b16 %v799, %v795
    %v1020 = vpack.c.b16 %v804, %v800
    %v1021 = vpack.c.b16 %v805, %v801
    %v1022 = vpack.c.b16 %v806, %v802
    %v1023 = vpack.c.b16 %v807, %v803
    %v1024 = vpack.c.b16 %v812, %v808
    %v1025 = vpack.c.b16 %v813, %v809
    %v1026 = vpack.c.b16 %v814, %v810
    %v1027 = vpack.c.b16 %v815, %v811
    %v1028 = vpack.c.b16 %v820, %v816
    %v1029 = vpack.c.b16 %v821, %v817
    %v1030 = vpack.c.b16 %v822, %v818
    %v1031 = vpack.c.b16 %v823, %v819
    %v1032 = vpack.c.b16 %v828, %v824
    %v1033 = vpack.c.b16 %v829, %v825
    %v1034 = vpack.c.b16 %v830, %v826
    %v1035 = vpack.c.b16 %v831, %v827
    %v1036 = vpack.c.b16 %v836, %v832
    %v1037 = vpack.c.b16 %v837, %v833
    %v1038 = vpack.c.b16 %v838, %v834
    %v1039 = vpack.c.b16 %v839, %v835
    %v1040 = vpack.c.b16 %v844, %v840
    %v1041 = vpack.c.b16 %v845, %v841
    %v1042 = vpack.c.b16 %v846, %v842
    %v1043 = vpack.c.b16 %v847, %v843
    %v1044 = vpack.c.b16 %v852, %v848
    %v1045 = vpack.c.b16 %v853, %v849
    %v1046 = vpack.c.b16 %v854, %v850
    %v1047 = vpack.c.b16 %v855, %v851
    %v1048 = vpack.c.b16 %v860, %v856
    %v1049 = vpack.c.b16 %v861, %v857
    %v1050 = vpack.c.b16 %v862, %v858
    %v1051 = vpack.c.b16 %v863, %v859
    %v1052 = vpack.c.b16 %v868, %v864
    %v1053 = vpack.c.b16 %v869, %v865
    %v1054 = vpack.c.b16 %v870, %v866
    %v1055 = vpack.c.b16 %v871, %v867
    %v1056 = vpack.c.b16 %v876, %v872
    %v1057 = vpack.c.b16 %v877, %v873
    %v1058 = vpack.c.b16 %v878, %v874
    %v1059 = vpack.c.b16 %v879, %v875
    %v1060 = vpack.c.b16 %v884, %v880
    %v1061 = vpack.c.b16 %v885, %v881
    %v1062 = vpack.c.b16 %v886, %v882
    %v1063 = vpack.c.b16 %v887, %v883
    %v1064 = vpack.c.b16 %v892, %v888
    %v1065 = vpack.c.b16 %v893, %v889
    %v1066 = vpack.c.b16 %v894, %v890
    %v1067 = vpack.c.b16 %v895, %v891
    %v1068 = vpack.c.b16 %v900, %v896
    %v1069 = vpack.c.b16 %v901, %v897
    %v1070 = vpack.c.b16 %v902, %v898
    %v1071 = vpack.c.b16 %v903, %v899
    %v1072 = vpack.c.b16 %v908, %v904
    %v1073 = vpack.c.b16 %v909, %v905
    %v1074 = vpack.c.b16 %v910, %v906
    %v1075 = vpack.c.b16 %v911, %v907
    %v1076 = vpack.c.b16 %v916, %v912
    %v1077 = vpack.c.b16 %v917, %v913
    %v1078 = vpack.c.b16 %v918, %v914
    %v1079 = vpack.c.b16 %v919, %v915
    %v1080 = vpack.c.b16 %v924, %v920
    %v1081 = vpack.c.b16 %v925, %v921
    %v1082 = vpack.c.b16 %v926, %v922
    %v1083 = vpack.c.b16 %v927, %v923
    %v1084 = vpack.c.b16 %v932, %v928
    %v1085 = vpack.c.b16 %v933, %v929
    %v1086 = vpack.c.b16 %v934, %v930
    %v1087 = vpack.c.b16 %v935, %v931
    %v1088 = vpack.c.b16 %v940, %v936
    %v1089 = vpack.c.b16 %v941, %v937
    %v1090 = vpack.c.b16 %v942, %v938
    %v1091 = vpack.c.b16 %v943, %v939
    %v1092 = vpack.c.b16 %v948, %v944
    %v1093 = vpack.c.b16 %v949, %v945
    %v1094 = vpack.c.b16 %v950, %v946
    %v1095 = vpack.c.b16 %v951, %v947
    %v1096 = vpack.c.b16 %v956, %v952
    %v1097 = vpack.c.b16 %v957, %v953
    %v1098 = vpack.c.b16 %v958, %v954
    %v1099 = vpack.c.b16 %v959, %v955
    %v1100 = vpack.c.b16 %v964, %v960
    %v1101 = vpack.c.b16 %v965, %v961
    %v1102 = vpack.c.b16 %v966, %v962
    %v1103 = vpack.c.b16 %v967, %v963
    %v1104 = vpack.c.b16 %v972, %v968
    %v1105 = vpack.c.b16 %v973, %v969
    %v1106 = vpack.c.b16 %v974, %v970
    %v1107 = vpack.c.b16 %v975, %v971
    %v1108 = vpack.c.b16 %v980, %v976
    %v1109 = vpack.c.b16 %v981, %v977
    %v1110 = vpack.c.b16 %v982, %v978
    %v1111 = vpack.c.b16 %v983, %v979
    %1240 = vmatprep.subr.bf16.mxu0 %v985
    %1241 = vmatpush1.bf16.msra.mxu0 %v984
    %1242 = vmatprep.subr.bf16.mxu0 %v989
    %1243 = vmatpush1.bf16.msra.mxu0 %v988
    %1244 = vmatprep.subr.bf16.mxu0 %v993
    %1245 = vmatpush1.bf16.msra.mxu0 %v992
    %1246 = vmatprep.subr.bf16.mxu0 %v997
    %1247 = vmatpush1.bf16.msra.mxu0 %v996
    %1248 = vmatprep.subr.bf16.mxu0 %v1001
    %1249 = vmatpush1.bf16.msra.mxu0 %v1000
    %1250 = vmatprep.subr.bf16.mxu0 %v1005
    %1251 = vmatpush1.bf16.msra.mxu0 %v1004
    %1252 = vmatprep.subr.bf16.mxu0 %v1009
    %1253 = vmatpush1.bf16.msra.mxu0 %v1008
    %1254 = vmatprep.subr.bf16.mxu0 %v1013
    %1255 = vmatpush1.bf16.msra.mxu0 %v1012
    %1256 = vmatprep.subr.bf16.mxu0 %v1017
    %1257 = vmatpush1.bf16.msra.mxu0 %v1016
    %1258 = vmatprep.subr.bf16.mxu0 %v1021
    %1259 = vmatpush1.bf16.msra.mxu0 %v1020
    %1260 = vmatprep.subr.bf16.mxu0 %v1025
    %1261 = vmatpush1.bf16.msra.mxu0 %v1024
    %1262 = vmatprep.subr.bf16.mxu0 %v1029
    %1263 = vmatpush1.bf16.msra.mxu0 %v1028
    %1264 = vmatprep.subr.bf16.mxu0 %v1033
    %1265 = vmatpush1.bf16.msra.mxu0 %v1032
    %1266 = vmatprep.subr.bf16.mxu0 %v1037
    %1267 = vmatpush1.bf16.msra.mxu0 %v1036
    %1268 = vmatprep.subr.bf16.mxu0 %v1041
    %1269 = vmatpush1.bf16.msra.mxu0 %v1040
    %1270 = vmatprep.subr.bf16.mxu0 %v1045
    %1271 = vmatpush1.bf16.msra.mxu0 %v1044
    %1272 = vmatprep.mubr.bf16.mxu0 %v447
    %1273 = vmatmul.mubr.bf16.gmra.mrb[0].mxu0 %v446
    %v1274 = vpop.f32.mrb[0].mxu0
    %v1275 = vadd.f32 %v583, %v1274
    %v1276 = vpop.f32.mrb[0].mxu0
    %v1277 = vadd.f32 %v587, %v1276
    %v1278 = vpop.f32.mrb[0].mxu0
    %v1279 = vadd.f32 %v583, %v1278
    %v1280 = vpop.f32.mrb[0].mxu0
    %v1281 = vadd.f32 %v587, %v1280
    %1282 = vdwg.mxu0
    %1283 = vmatprep.subr.bf16.mxu0 %v1049
    %1284 = vmatpush1.bf16.msra.mxu0 %v1048
    %1285 = vmatprep.subr.bf16.mxu0 %v1053
    %1286 = vmatpush1.bf16.msra.mxu0 %v1052
    %1287 = vmatprep.subr.bf16.mxu0 %v1057
    %1288 = vmatpush1.bf16.msra.mxu0 %v1056
    %1289 = vmatprep.subr.bf16.mxu0 %v1061
    %1290 = vmatpush1.bf16.msra.mxu0 %v1060
    %1291 = vmatprep.subr.bf16.mxu0 %v1065
    %1292 = vmatpush1.bf16.msra.mxu0 %v1064
    %1293 = vmatprep.subr.bf16.mxu0 %v1069
    %1294 = vmatpush1.bf16.msra.mxu0 %v1068
    %1295 = vmatprep.subr.bf16.mxu0 %v1073
    %1296 = vmatpush1.bf16.msra.mxu0 %v1072
    %1297 = vmatprep.subr.bf16.mxu0 %v1077
    %1298 = vmatpush1.bf16.msra.mxu0 %v1076
    %1299 = vmatprep.subr.bf16.mxu0 %v1081
    %1300 = vmatpush1.bf16.msra.mxu0 %v1080
    %1301 = vmatprep.subr.bf16.mxu0 %v1085
    %1302 = vmatpush1.bf16.msra.mxu0 %v1084
    %1303 = vmatprep.subr.bf16.mxu0 %v1089
    %1304 = vmatpush1.bf16.msra.mxu0 %v1088
    %1305 = vmatprep.subr.bf16.mxu0 %v1093
    %1306 = vmatpush1.bf16.msra.mxu0 %v1092
    %1307 = vmatprep.subr.bf16.mxu0 %v1097
    %1308 = vmatpush1.bf16.msra.mxu0 %v1096
    %1309 = vmatprep.subr.bf16.mxu0 %v1101
    %1310 = vmatpush1.bf16.msra.mxu0 %v1100
    %1311 = vmatprep.subr.bf16.mxu0 %v1105
    %1312 = vmatpush1.bf16.msra.mxu0 %v1104
    %1313 = vmatprep.subr.bf16.mxu0 %v1109
    %1314 = vmatpush1.bf16.msra.mxu0 %v1108
    %1315 = vmatprep.mubr.bf16.mxu0 %v449
    %1316 = vmatmul.mubr.bf16.gmra.mrb[0].mxu0 %v448
    %v1317 = vpop.f32.mrb[0].mxu0
    %v1318 = vadd.f32 %v1275, %v1317
    %v1319 = vpop.f32.mrb[0].mxu0
    %v1320 = vadd.f32 %v1277, %v1319
    %v1321 = vpop.f32.mrb[0].mxu0
    %v1322 = vadd.f32 %v1279, %v1321
    %v1323 = vpop.f32.mrb[0].mxu0
    %v1324 = vadd.f32 %v1281, %v1323
    %1325 = vdwg.mxu0
    %1326 = vmatprep.subr.bf16.mxu0 %v987
    %1327 = vmatpush1.bf16.msra.mxu0 %v986
    %1328 = vmatprep.subr.bf16.mxu0 %v991
    %1329 = vmatpush1.bf16.msra.mxu0 %v990
    %1330 = vmatprep.subr.bf16.mxu0 %v995
    %1331 = vmatpush1.bf16.msra.mxu0 %v994
    %1332 = vmatprep.subr.bf16.mxu0 %v999
    %1333 = vmatpush1.bf16.msra.mxu0 %v998
    %1334 = vmatprep.subr.bf16.mxu0 %v1003
    %1335 = vmatpush1.bf16.msra.mxu0 %v1002
    %1336 = vmatprep.subr.bf16.mxu0 %v1007
    %1337 = vmatpush1.bf16.msra.mxu0 %v1006
    %1338 = vmatprep.subr.bf16.mxu0 %v1011
    %1339 = vmatpush1.bf16.msra.mxu0 %v1010
    %1340 = vmatprep.subr.bf16.mxu0 %v1015
    %1341 = vmatpush1.bf16.msra.mxu0 %v1014
    %1342 = vmatprep.subr.bf16.mxu0 %v1019
    %1343 = vmatpush1.bf16.msra.mxu0 %v1018
    %1344 = vmatprep.subr.bf16.mxu0 %v1023
    %1345 = vmatpush1.bf16.msra.mxu0 %v1022
    %1346 = vmatprep.subr.bf16.mxu0 %v1027
    %1347 = vmatpush1.bf16.msra.mxu0 %v1026
    %1348 = vmatprep.subr.bf16.mxu0 %v1031
    %1349 = vmatpush1.bf16.msra.mxu0 %v1030
    %1350 = vmatprep.subr.bf16.mxu0 %v1035
    %1351 = vmatpush1.bf16.msra.mxu0 %v1034
    %1352 = vmatprep.subr.bf16.mxu0 %v1039
    %1353 = vmatpush1.bf16.msra.mxu0 %v1038
    %1354 = vmatprep.subr.bf16.mxu0 %v1043
    %1355 = vmatpush1.bf16.msra.mxu0 %v1042
    %1356 = vmatprep.subr.bf16.mxu0 %v1047
    %1357 = vmatpush1.bf16.msra.mxu0 %v1046
    %1358 = vmatprep.mubr.bf16.mxu0 %v447
    %1359 = vmatmul.mubr.bf16.gmra.mrb[0].mxu0 %v446
    %v1360 = vpop.f32.mrb[0].mxu0
    %v1361 = vadd.f32 %v591, %v1360
    %v1362 = vpop.f32.mrb[0].mxu0
    %v1363 = vadd.f32 %v595, %v1362
    %v1364 = vpop.f32.mrb[0].mxu0
    %v1365 = vadd.f32 %v591, %v1364
    %v1366 = vpop.f32.mrb[0].mxu0
    %v1367 = vadd.f32 %v595, %v1366
    %1368 = vdwg.mxu0
    %1369 = vmatprep.subr.bf16.mxu0 %v1051
    %1370 = vmatpush1.bf16.msra.mxu0 %v1050
    %1371 = vmatprep.subr.bf16.mxu0 %v1055
    %1372 = vmatpush1.bf16.msra.mxu0 %v1054
    %1373 = vmatprep.subr.bf16.mxu0 %v1059
    %1374 = vmatpush1.bf16.msra.mxu0 %v1058
    %1375 = vmatprep.subr.bf16.mxu0 %v1063
    %1376 = vmatpush1.bf16.msra.mxu0 %v1062
    %1377 = vmatprep.subr.bf16.mxu0 %v1067
    %1378 = vmatpush1.bf16.msra.mxu0 %v1066
    %1379 = vmatprep.subr.bf16.mxu0 %v1071
    %1380 = vmatpush1.bf16.msra.mxu0 %v1070
    %1381 = vmatprep.subr.bf16.mxu0 %v1075
    %1382 = vmatpush1.bf16.msra.mxu0 %v1074
    %1383 = vmatprep.subr.bf16.mxu0 %v1079
    %1384 = vmatpush1.bf16.msra.mxu0 %v1078
    %1385 = vmatprep.subr.bf16.mxu0 %v1083
    %1386 = vmatpush1.bf16.msra.mxu0 %v1082
    %1387 = vmatprep.subr.bf16.mxu0 %v1087
    %1388 = vmatpush1.bf16.msra.mxu0 %v1086
    %1389 = vmatprep.subr.bf16.mxu0 %v1091
    %1390 = vmatpush1.bf16.msra.mxu0 %v1090
    %1391 = vmatprep.subr.bf16.mxu0 %v1095
    %1392 = vmatpush1.bf16.msra.mxu0 %v1094
    %1393 = vmatprep.subr.bf16.mxu0 %v1099
    %1394 = vmatpush1.bf16.msra.mxu0 %v1098
    %1395 = vmatprep.subr.bf16.mxu0 %v1103
    %1396 = vmatpush1.bf16.msra.mxu0 %v1102
    %1397 = vmatprep.subr.bf16.mxu0 %v1107
    %1398 = vmatpush1.bf16.msra.mxu0 %v1106
    %1399 = vmatprep.subr.bf16.mxu0 %v1111
    %1400 = vmatpush1.bf16.msra.mxu0 %v1110
    %1401 = vmatprep.mubr.bf16.mxu0 %v449
    %1402 = vmatmul.mubr.bf16.gmra.mrb[0].mxu0 %v448
    %v1403 = vpop.f32.mrb[0].mxu0
    %v1404 = vadd.f32 %v1361, %v1403
    %v1405 = vpop.f32.mrb[0].mxu0
    %v1406 = vadd.f32 %v1363, %v1405
    %v1407 = vpop.f32.mrb[0].mxu0
    %v1408 = vadd.f32 %v1365, %v1407
    %v1409 = vpop.f32.mrb[0].mxu0
    %v1410 = vadd.f32 %v1367, %v1409
    %1411 = vdwg.mxu0
    %v1412 = vmax.f32 %v1318, 0.0
    %v1413 = vmax.f32 %v1320, 0.0
    %v1414 = vmax.f32 %v1404, 0.0
    %v1415 = vmax.f32 %v1406, 0.0
    %v1416 = vmax.f32 %v1322, 0.0
    %v1417 = vmax.f32 %v1324, 0.0
    %v1418 = vmax.f32 %v1408, 0.0
    %v1419 = vmax.f32 %v1410, 0.0
    %v1420 = vpack.c.bf16 %v1416, %v1412
    %v1421 = vpack.c.bf16 %v1417, %v1413
    %v1422 = vpack.c.bf16 %v1418, %v1414
    %v1423 = vpack.c.bf16 %v1419, %v1415
    %v1424 = vld [vmem:[#allocation4] sm:$0xff]
    %v1425 = vld [vmem:[#allocation4 + $0x8] sm:$0xff]
    %v1426 = vld [vmem:[#allocation4 + $0x10] sm:$0xff]
    %v1427 = vld [vmem:[#allocation4 + $0x18] sm:$0xff]
    %v1428 = vld [vmem:[#allocation4 + $0x20] sm:$0xff]
    %v1429 = vld [vmem:[#allocation4 + $0x28] sm:$0xff]
    %v1430 = vld [vmem:[#allocation4 + $0x30] sm:$0xff]
    %v1431 = vld [vmem:[#allocation4 + $0x38] sm:$0xff]
    %v1432 = vld [vmem:[#allocation4 + $0x40] sm:$0xff]
    %v1433 = vld [vmem:[#allocation4 + $0x48] sm:$0xff]
    %v1434 = vld [vmem:[#allocation4 + $0x50] sm:$0xff]
    %v1435 = vld [vmem:[#allocation4 + $0x58] sm:$0xff]
    %v1436 = vld [vmem:[#allocation4 + $0x60] sm:$0xff]
    %v1437 = vld [vmem:[#allocation4 + $0x68] sm:$0xff]
    %v1438 = vld [vmem:[#allocation4 + $0x70] sm:$0xff]
    %v1439 = vld [vmem:[#allocation4 + $0x78] sm:$0xff]
    %v1440 = vld [vmem:[#allocation4 + $0x80] sm:$0xff]
    %v1441 = vld [vmem:[#allocation4 + $0x88] sm:$0xff]
    %v1442 = vld [vmem:[#allocation4 + $0x90] sm:$0xff]
    %v1443 = vld [vmem:[#allocation4 + $0x98] sm:$0xff]
    %v1444 = vld [vmem:[#allocation4 + $0xa0] sm:$0xff]
    %v1445 = vld [vmem:[#allocation4 + $0xa8] sm:$0xff]
    %v1446 = vld [vmem:[#allocation4 + $0xb0] sm:$0xff]
    %v1447 = vld [vmem:[#allocation4 + $0xb8] sm:$0xff]
    %v1448 = vld [vmem:[#allocation4 + $0xc0] sm:$0xff]
    %v1449 = vld [vmem:[#allocation4 + $0xc8] sm:$0xff]
    %v1450 = vld [vmem:[#allocation4 + $0xd0] sm:$0xff]
    %v1451 = vld [vmem:[#allocation4 + $0xd8] sm:$0xff]
    %v1452 = vld [vmem:[#allocation4 + $0xe0] sm:$0xff]
    %v1453 = vld [vmem:[#allocation4 + $0xe8] sm:$0xff]
    %v1454 = vld [vmem:[#allocation4 + $0xf0] sm:$0xff]
    %v1455 = vld [vmem:[#allocation4 + $0xf8] sm:$0xff]
    %v1456 = vld [vmem:[#allocation4 + $0x100] sm:$0xff]
    %v1457 = vld [vmem:[#allocation4 + $0x108] sm:$0xff]
    %v1458 = vld [vmem:[#allocation4 + $0x110] sm:$0xff]
    %v1459 = vld [vmem:[#allocation4 + $0x118] sm:$0xff]
    %v1460 = vld [vmem:[#allocation4 + $0x120] sm:$0xff]
    %v1461 = vld [vmem:[#allocation4 + $0x128] sm:$0xff]
    %v1462 = vld [vmem:[#allocation4 + $0x130] sm:$0xff]
    %v1463 = vld [vmem:[#allocation4 + $0x138] sm:$0xff]
    %v1464 = vld [vmem:[#allocation4 + $0x140] sm:$0xff]
    %v1465 = vld [vmem:[#allocation4 + $0x148] sm:$0xff]
    %v1466 = vld [vmem:[#allocation4 + $0x150] sm:$0xff]
    %v1467 = vld [vmem:[#allocation4 + $0x158] sm:$0xff]
    %v1468 = vld [vmem:[#allocation4 + $0x160] sm:$0xff]
    %v1469 = vld [vmem:[#allocation4 + $0x168] sm:$0xff]
    %v1470 = vld [vmem:[#allocation4 + $0x170] sm:$0xff]
    %v1471 = vld [vmem:[#allocation4 + $0x178] sm:$0xff]
    %v1472 = vld [vmem:[#allocation4 + $0x180] sm:$0xff]
    %v1473 = vld [vmem:[#allocation4 + $0x188] sm:$0xff]
    %v1474 = vld [vmem:[#allocation4 + $0x190] sm:$0xff]
    %v1475 = vld [vmem:[#allocation4 + $0x198] sm:$0xff]
    %v1476 = vld [vmem:[#allocation4 + $0x1a0] sm:$0xff]
    %v1477 = vld [vmem:[#allocation4 + $0x1a8] sm:$0xff]
    %v1478 = vld [vmem:[#allocation4 + $0x1b0] sm:$0xff]
    %v1479 = vld [vmem:[#allocation4 + $0x1b8] sm:$0xff]
    %v1480 = vld [vmem:[#allocation4 + $0x1c0] sm:$0xff]
    %v1481 = vld [vmem:[#allocation4 + $0x1c8] sm:$0xff]
    %v1482 = vld [vmem:[#allocation4 + $0x1d0] sm:$0xff]
    %v1483 = vld [vmem:[#allocation4 + $0x1d8] sm:$0xff]
    %v1484 = vld [vmem:[#allocation4 + $0x1e0] sm:$0xff]
    %v1485 = vld [vmem:[#allocation4 + $0x1e8] sm:$0xff]
    %v1486 = vld [vmem:[#allocation4 + $0x1f0] sm:$0xff]
    %v1487 = vld [vmem:[#allocation4 + $0x1f8] sm:$0xff]
    %v1488 = vld [vmem:[#allocation4 + $0x200] sm:$0xff]
    %v1489 = vld [vmem:[#allocation4 + $0x208] sm:$0xff]
    %v1490 = vld [vmem:[#allocation4 + $0x210] sm:$0xff]
    %v1491 = vld [vmem:[#allocation4 + $0x218] sm:$0xff]
    %v1492 = vld [vmem:[#allocation4 + $0x220] sm:$0xff]
    %v1493 = vld [vmem:[#allocation4 + $0x228] sm:$0xff]
    %v1494 = vld [vmem:[#allocation4 + $0x230] sm:$0xff]
    %v1495 = vld [vmem:[#allocation4 + $0x238] sm:$0xff]
    %v1496 = vld [vmem:[#allocation4 + $0x240] sm:$0xff]
    %v1497 = vld [vmem:[#allocation4 + $0x248] sm:$0xff]
    %v1498 = vld [vmem:[#allocation4 + $0x250] sm:$0xff]
    %v1499 = vld [vmem:[#allocation4 + $0x258] sm:$0xff]
    %v1500 = vld [vmem:[#allocation4 + $0x260] sm:$0xff]
    %v1501 = vld [vmem:[#allocation4 + $0x268] sm:$0xff]
    %v1502 = vld [vmem:[#allocation4 + $0x270] sm:$0xff]
    %v1503 = vld [vmem:[#allocation4 + $0x278] sm:$0xff]
    %v1504 = vld [vmem:[#allocation4 + $0x280] sm:$0xff]
    %v1505 = vld [vmem:[#allocation4 + $0x288] sm:$0xff]
    %v1506 = vld [vmem:[#allocation4 + $0x290] sm:$0xff]
    %v1507 = vld [vmem:[#allocation4 + $0x298] sm:$0xff]
    %v1508 = vld [vmem:[#allocation4 + $0x2a0] sm:$0xff]
    %v1509 = vld [vmem:[#allocation4 + $0x2a8] sm:$0xff]
    %v1510 = vld [vmem:[#allocation4 + $0x2b0] sm:$0xff]
    %v1511 = vld [vmem:[#allocation4 + $0x2b8] sm:$0xff]
    %v1512 = vld [vmem:[#allocation4 + $0x2c0] sm:$0xff]
    %v1513 = vld [vmem:[#allocation4 + $0x2c8] sm:$0xff]
    %v1514 = vld [vmem:[#allocation4 + $0x2d0] sm:$0xff]
    %v1515 = vld [vmem:[#allocation4 + $0x2d8] sm:$0xff]
    %v1516 = vld [vmem:[#allocation4 + $0x2e0] sm:$0xff]
    %v1517 = vld [vmem:[#allocation4 + $0x2e8] sm:$0xff]
    %v1518 = vld [vmem:[#allocation4 + $0x2f0] sm:$0xff]
    %v1519 = vld [vmem:[#allocation4 + $0x2f8] sm:$0xff]
    %v1520 = vld [vmem:[#allocation4 + $0x300] sm:$0xff]
    %v1521 = vld [vmem:[#allocation4 + $0x308] sm:$0xff]
    %v1522 = vld [vmem:[#allocation4 + $0x310] sm:$0xff]
    %v1523 = vld [vmem:[#allocation4 + $0x318] sm:$0xff]
    %v1524 = vld [vmem:[#allocation4 + $0x320] sm:$0xff]
    %v1525 = vld [vmem:[#allocation4 + $0x328] sm:$0xff]
    %v1526 = vld [vmem:[#allocation4 + $0x330] sm:$0xff]
    %v1527 = vld [vmem:[#allocation4 + $0x338] sm:$0xff]
    %v1528 = vld [vmem:[#allocation4 + $0x340] sm:$0xff]
    %v1529 = vld [vmem:[#allocation4 + $0x348] sm:$0xff]
    %v1530 = vld [vmem:[#allocation4 + $0x350] sm:$0xff]
    %v1531 = vld [vmem:[#allocation4 + $0x358] sm:$0xff]
    %v1532 = vld [vmem:[#allocation4 + $0x360] sm:$0xff]
    %v1533 = vld [vmem:[#allocation4 + $0x368] sm:$0xff]
    %v1534 = vld [vmem:[#allocation4 + $0x370] sm:$0xff]
    %v1535 = vld [vmem:[#allocation4 + $0x378] sm:$0xff]
    %v1536 = vld [vmem:[#allocation4 + $0x380] sm:$0xff]
    %v1537 = vld [vmem:[#allocation4 + $0x388] sm:$0xff]
    %v1538 = vld [vmem:[#allocation4 + $0x390] sm:$0xff]
    %v1539 = vld [vmem:[#allocation4 + $0x398] sm:$0xff]
    %v1540 = vld [vmem:[#allocation4 + $0x3a0] sm:$0xff]
    %v1541 = vld [vmem:[#allocation4 + $0x3a8] sm:$0xff]
    %v1542 = vld [vmem:[#allocation4 + $0x3b0] sm:$0xff]
    %v1543 = vld [vmem:[#allocation4 + $0x3b8] sm:$0xff]
    %v1544 = vld [vmem:[#allocation4 + $0x3c0] sm:$0xff]
    %v1545 = vld [vmem:[#allocation4 + $0x3c8] sm:$0xff]
    %v1546 = vld [vmem:[#allocation4 + $0x3d0] sm:$0xff]
    %v1547 = vld [vmem:[#allocation4 + $0x3d8] sm:$0xff]
    %v1548 = vld [vmem:[#allocation4 + $0x3e0] sm:$0xff]
    %v1549 = vld [vmem:[#allocation4 + $0x3e8] sm:$0xff]
    %v1550 = vld [vmem:[#allocation4 + $0x3f0] sm:$0xff]
    %v1551 = vld [vmem:[#allocation4 + $0x3f8] sm:$0xff]
    %v1552 = vld [vmem:[%s8] sm:$0xf]
    %v1554 = vlaneseq
    %v1555 = vshrl.u32 %v1554, 7
    %v1556 = vsub.s32 0, %v1555
    %v1557 = vrot.slane %v1552, %v1556
    %v1558 = vlaneseq
    %v1559 = vshrl.u32 %v1558, 7
    %v1560 = vsub.s32 1, %v1559
    %v1561 = vrot.slane %v1552, %v1560
    %v1562 = vlaneseq
    %v1563 = vshrl.u32 %v1562, 7
    %v1564 = vsub.s32 2, %v1563
    %v1565 = vrot.slane %v1552, %v1564
    %v1566 = vlaneseq
    %v1567 = vshrl.u32 %v1566, 7
    %v1568 = vsub.s32 3, %v1567
    %v1569 = vrot.slane %v1552, %v1568
    %v1702 = vunpack.c.l.b16 %v1424
    %v1703 = vunpack.c.h.b16 %v1424
    %v1704 = vunpack.c.l.b16 %v1425
    %v1705 = vunpack.c.h.b16 %v1425
    %v1706 = vunpack.c.l.b16 %v1426
    %v1707 = vunpack.c.h.b16 %v1426
    %v1708 = vunpack.c.l.b16 %v1427
    %v1709 = vunpack.c.h.b16 %v1427
    %v1710 = vunpack.c.l.b16 %v1428
    %v1711 = vunpack.c.h.b16 %v1428
    %v1712 = vunpack.c.l.b16 %v1429
    %v1713 = vunpack.c.h.b16 %v1429
    %v1714 = vunpack.c.l.b16 %v1430
    %v1715 = vunpack.c.h.b16 %v1430
    %v1716 = vunpack.c.l.b16 %v1431
    %v1717 = vunpack.c.h.b16 %v1431
    %v1718 = vunpack.c.l.b16 %v1432
    %v1719 = vunpack.c.h.b16 %v1432
    %v1720 = vunpack.c.l.b16 %v1433
    %v1721 = vunpack.c.h.b16 %v1433
    %v1722 = vunpack.c.l.b16 %v1434
    %v1723 = vunpack.c.h.b16 %v1434
    %v1724 = vunpack.c.l.b16 %v1435
    %v1725 = vunpack.c.h.b16 %v1435
    %v1726 = vunpack.c.l.b16 %v1436
    %v1727 = vunpack.c.h.b16 %v1436
    %v1728 = vunpack.c.l.b16 %v1437
    %v1729 = vunpack.c.h.b16 %v1437
    %v1730 = vunpack.c.l.b16 %v1438
    %v1731 = vunpack.c.h.b16 %v1438
    %v1732 = vunpack.c.l.b16 %v1439
    %v1733 = vunpack.c.h.b16 %v1439
    %v1734 = vunpack.c.l.b16 %v1440
    %v1735 = vunpack.c.h.b16 %v1440
    %v1736 = vunpack.c.l.b16 %v1441
    %v1737 = vunpack.c.h.b16 %v1441
    %v1738 = vunpack.c.l.b16 %v1442
    %v1739 = vunpack.c.h.b16 %v1442
    %v1740 = vunpack.c.l.b16 %v1443
    %v1741 = vunpack.c.h.b16 %v1443
    %v1742 = vunpack.c.l.b16 %v1444
    %v1743 = vunpack.c.h.b16 %v1444
    %v1744 = vunpack.c.l.b16 %v1445
    %v1745 = vunpack.c.h.b16 %v1445
    %v1746 = vunpack.c.l.b16 %v1446
    %v1747 = vunpack.c.h.b16 %v1446
    %v1748 = vunpack.c.l.b16 %v1447
    %v1749 = vunpack.c.h.b16 %v1447
    %v1750 = vunpack.c.l.b16 %v1448
    %v1751 = vunpack.c.h.b16 %v1448
    %v1752 = vunpack.c.l.b16 %v1449
    %v1753 = vunpack.c.h.b16 %v1449
    %v1754 = vunpack.c.l.b16 %v1450
    %v1755 = vunpack.c.h.b16 %v1450
    %v1756 = vunpack.c.l.b16 %v1451
    %v1757 = vunpack.c.h.b16 %v1451
    %v1758 = vunpack.c.l.b16 %v1452
    %v1759 = vunpack.c.h.b16 %v1452
    %v1760 = vunpack.c.l.b16 %v1453
    %v1761 = vunpack.c.h.b16 %v1453
    %v1762 = vunpack.c.l.b16 %v1454
    %v1763 = vunpack.c.h.b16 %v1454
    %v1764 = vunpack.c.l.b16 %v1455
    %v1765 = vunpack.c.h.b16 %v1455
    %v1766 = vunpack.c.l.b16 %v1456
    %v1767 = vunpack.c.h.b16 %v1456
    %v1768 = vunpack.c.l.b16 %v1457
    %v1769 = vunpack.c.h.b16 %v1457
    %v1770 = vunpack.c.l.b16 %v1458
    %v1771 = vunpack.c.h.b16 %v1458
    %v1772 = vunpack.c.l.b16 %v1459
    %v1773 = vunpack.c.h.b16 %v1459
    %v1774 = vunpack.c.l.b16 %v1460
    %v1775 = vunpack.c.h.b16 %v1460
    %v1776 = vunpack.c.l.b16 %v1461
    %v1777 = vunpack.c.h.b16 %v1461
    %v1778 = vunpack.c.l.b16 %v1462
    %v1779 = vunpack.c.h.b16 %v1462
    %v1780 = vunpack.c.l.b16 %v1463
    %v1781 = vunpack.c.h.b16 %v1463
    %v1782 = vunpack.c.l.b16 %v1464
    %v1783 = vunpack.c.h.b16 %v1464
    %v1784 = vunpack.c.l.b16 %v1465
    %v1785 = vunpack.c.h.b16 %v1465
    %v1786 = vunpack.c.l.b16 %v1466
    %v1787 = vunpack.c.h.b16 %v1466
    %v1788 = vunpack.c.l.b16 %v1467
    %v1789 = vunpack.c.h.b16 %v1467
    %v1790 = vunpack.c.l.b16 %v1468
    %v1791 = vunpack.c.h.b16 %v1468
    %v1792 = vunpack.c.l.b16 %v1469
    %v1793 = vunpack.c.h.b16 %v1469
    %v1794 = vunpack.c.l.b16 %v1470
    %v1795 = vunpack.c.h.b16 %v1470
    %v1796 = vunpack.c.l.b16 %v1471
    %v1797 = vunpack.c.h.b16 %v1471
    %v1798 = vunpack.c.l.b16 %v1472
    %v1799 = vunpack.c.h.b16 %v1472
    %v1800 = vunpack.c.l.b16 %v1473
    %v1801 = vunpack.c.h.b16 %v1473
    %v1802 = vunpack.c.l.b16 %v1474
    %v1803 = vunpack.c.h.b16 %v1474
    %v1804 = vunpack.c.l.b16 %v1475
    %v1805 = vunpack.c.h.b16 %v1475
    %v1806 = vunpack.c.l.b16 %v1476
    %v1807 = vunpack.c.h.b16 %v1476
    %v1808 = vunpack.c.l.b16 %v1477
    %v1809 = vunpack.c.h.b16 %v1477
    %v1810 = vunpack.c.l.b16 %v1478
    %v1811 = vunpack.c.h.b16 %v1478
    %v1812 = vunpack.c.l.b16 %v1479
    %v1813 = vunpack.c.h.b16 %v1479
    %v1814 = vunpack.c.l.b16 %v1480
    %v1815 = vunpack.c.h.b16 %v1480
    %v1816 = vunpack.c.l.b16 %v1481
    %v1817 = vunpack.c.h.b16 %v1481
    %v1818 = vunpack.c.l.b16 %v1482
    %v1819 = vunpack.c.h.b16 %v1482
    %v1820 = vunpack.c.l.b16 %v1483
    %v1821 = vunpack.c.h.b16 %v1483
    %v1822 = vunpack.c.l.b16 %v1484
    %v1823 = vunpack.c.h.b16 %v1484
    %v1824 = vunpack.c.l.b16 %v1485
    %v1825 = vunpack.c.h.b16 %v1485
    %v1826 = vunpack.c.l.b16 %v1486
    %v1827 = vunpack.c.h.b16 %v1486
    %v1828 = vunpack.c.l.b16 %v1487
    %v1829 = vunpack.c.h.b16 %v1487
    %v1830 = vunpack.c.l.b16 %v1488
    %v1831 = vunpack.c.h.b16 %v1488
    %v1832 = vunpack.c.l.b16 %v1489
    %v1833 = vunpack.c.h.b16 %v1489
    %v1834 = vunpack.c.l.b16 %v1490
    %v1835 = vunpack.c.h.b16 %v1490
    %v1836 = vunpack.c.l.b16 %v1491
    %v1837 = vunpack.c.h.b16 %v1491
    %v1838 = vunpack.c.l.b16 %v1492
    %v1839 = vunpack.c.h.b16 %v1492
    %v1840 = vunpack.c.l.b16 %v1493
    %v1841 = vunpack.c.h.b16 %v1493
    %v1842 = vunpack.c.l.b16 %v1494
    %v1843 = vunpack.c.h.b16 %v1494
    %v1844 = vunpack.c.l.b16 %v1495
    %v1845 = vunpack.c.h.b16 %v1495
    %v1846 = vunpack.c.l.b16 %v1496
    %v1847 = vunpack.c.h.b16 %v1496
    %v1848 = vunpack.c.l.b16 %v1497
    %v1849 = vunpack.c.h.b16 %v1497
    %v1850 = vunpack.c.l.b16 %v1498
    %v1851 = vunpack.c.h.b16 %v1498
    %v1852 = vunpack.c.l.b16 %v1499
    %v1853 = vunpack.c.h.b16 %v1499
    %v1854 = vunpack.c.l.b16 %v1500
    %v1855 = vunpack.c.h.b16 %v1500
    %v1856 = vunpack.c.l.b16 %v1501
    %v1857 = vunpack.c.h.b16 %v1501
    %v1858 = vunpack.c.l.b16 %v1502
    %v1859 = vunpack.c.h.b16 %v1502
    %v1860 = vunpack.c.l.b16 %v1503
    %v1861 = vunpack.c.h.b16 %v1503
    %v1862 = vunpack.c.l.b16 %v1504
    %v1863 = vunpack.c.h.b16 %v1504
    %v1864 = vunpack.c.l.b16 %v1505
    %v1865 = vunpack.c.h.b16 %v1505
    %v1866 = vunpack.c.l.b16 %v1506
    %v1867 = vunpack.c.h.b16 %v1506
    %v1868 = vunpack.c.l.b16 %v1507
    %v1869 = vunpack.c.h.b16 %v1507
    %v1870 = vunpack.c.l.b16 %v1508
    %v1871 = vunpack.c.h.b16 %v1508
    %v1872 = vunpack.c.l.b16 %v1509
    %v1873 = vunpack.c.h.b16 %v1509
    %v1874 = vunpack.c.l.b16 %v1510
    %v1875 = vunpack.c.h.b16 %v1510
    %v1876 = vunpack.c.l.b16 %v1511
    %v1877 = vunpack.c.h.b16 %v1511
    %v1878 = vunpack.c.l.b16 %v1512
    %v1879 = vunpack.c.h.b16 %v1512
    %v1880 = vunpack.c.l.b16 %v1513
    %v1881 = vunpack.c.h.b16 %v1513
    %v1882 = vunpack.c.l.b16 %v1514
    %v1883 = vunpack.c.h.b16 %v1514
    %v1884 = vunpack.c.l.b16 %v1515
    %v1885 = vunpack.c.h.b16 %v1515
    %v1886 = vunpack.c.l.b16 %v1516
    %v1887 = vunpack.c.h.b16 %v1516
    %v1888 = vunpack.c.l.b16 %v1517
    %v1889 = vunpack.c.h.b16 %v1517
    %v1890 = vunpack.c.l.b16 %v1518
    %v1891 = vunpack.c.h.b16 %v1518
    %v1892 = vunpack.c.l.b16 %v1519
    %v1893 = vunpack.c.h.b16 %v1519
    %v1894 = vunpack.c.l.b16 %v1520
    %v1895 = vunpack.c.h.b16 %v1520
    %v1896 = vunpack.c.l.b16 %v1521
    %v1897 = vunpack.c.h.b16 %v1521
    %v1898 = vunpack.c.l.b16 %v1522
    %v1899 = vunpack.c.h.b16 %v1522
    %v1900 = vunpack.c.l.b16 %v1523
    %v1901 = vunpack.c.h.b16 %v1523
    %v1902 = vunpack.c.l.b16 %v1524
    %v1903 = vunpack.c.h.b16 %v1524
    %v1904 = vunpack.c.l.b16 %v1525
    %v1905 = vunpack.c.h.b16 %v1525
    %v1906 = vunpack.c.l.b16 %v1526
    %v1907 = vunpack.c.h.b16 %v1526
    %v1908 = vunpack.c.l.b16 %v1527
    %v1909 = vunpack.c.h.b16 %v1527
    %v1910 = vunpack.c.l.b16 %v1528
    %v1911 = vunpack.c.h.b16 %v1528
    %v1912 = vunpack.c.l.b16 %v1529
    %v1913 = vunpack.c.h.b16 %v1529
    %v1914 = vunpack.c.l.b16 %v1530
    %v1915 = vunpack.c.h.b16 %v1530
    %v1916 = vunpack.c.l.b16 %v1531
    %v1917 = vunpack.c.h.b16 %v1531
    %v1918 = vunpack.c.l.b16 %v1532
    %v1919 = vunpack.c.h.b16 %v1532
    %v1920 = vunpack.c.l.b16 %v1533
    %v1921 = vunpack.c.h.b16 %v1533
    %v1922 = vunpack.c.l.b16 %v1534
    %v1923 = vunpack.c.h.b16 %v1534
    %v1924 = vunpack.c.l.b16 %v1535
    %v1925 = vunpack.c.h.b16 %v1535
    %v1926 = vunpack.c.l.b16 %v1536
    %v1927 = vunpack.c.h.b16 %v1536
    %v1928 = vunpack.c.l.b16 %v1537
    %v1929 = vunpack.c.h.b16 %v1537
    %v1930 = vunpack.c.l.b16 %v1538
    %v1931 = vunpack.c.h.b16 %v1538
    %v1932 = vunpack.c.l.b16 %v1539
    %v1933 = vunpack.c.h.b16 %v1539
    %v1934 = vunpack.c.l.b16 %v1540
    %v1935 = vunpack.c.h.b16 %v1540
    %v1936 = vunpack.c.l.b16 %v1541
    %v1937 = vunpack.c.h.b16 %v1541
    %v1938 = vunpack.c.l.b16 %v1542
    %v1939 = vunpack.c.h.b16 %v1542
    %v1940 = vunpack.c.l.b16 %v1543
    %v1941 = vunpack.c.h.b16 %v1543
    %v1942 = vunpack.c.l.b16 %v1544
    %v1943 = vunpack.c.h.b16 %v1544
    %v1944 = vunpack.c.l.b16 %v1545
    %v1945 = vunpack.c.h.b16 %v1545
    %v1946 = vunpack.c.l.b16 %v1546
    %v1947 = vunpack.c.h.b16 %v1546
    %v1948 = vunpack.c.l.b16 %v1547
    %v1949 = vunpack.c.h.b16 %v1547
    %v1950 = vunpack.c.l.b16 %v1548
    %v1951 = vunpack.c.h.b16 %v1548
    %v1952 = vunpack.c.l.b16 %v1549
    %v1953 = vunpack.c.h.b16 %v1549
    %v1954 = vunpack.c.l.b16 %v1550
    %v1955 = vunpack.c.h.b16 %v1550
    %v1956 = vunpack.c.l.b16 %v1551
    %v1957 = vunpack.c.h.b16 %v1551
    %v1958 = vpack.c.b16 %v1706, %v1702
    %v1959 = vpack.c.b16 %v1707, %v1703
    %v1960 = vpack.c.b16 %v1708, %v1704
    %v1961 = vpack.c.b16 %v1709, %v1705
    %v1962 = vpack.c.b16 %v1714, %v1710
    %v1963 = vpack.c.b16 %v1715, %v1711
    %v1964 = vpack.c.b16 %v1716, %v1712
    %v1965 = vpack.c.b16 %v1717, %v1713
    %v1966 = vpack.c.b16 %v1722, %v1718
    %v1967 = vpack.c.b16 %v1723, %v1719
    %v1968 = vpack.c.b16 %v1724, %v1720
    %v1969 = vpack.c.b16 %v1725, %v1721
    %v1970 = vpack.c.b16 %v1730, %v1726
    %v1971 = vpack.c.b16 %v1731, %v1727
    %v1972 = vpack.c.b16 %v1732, %v1728
    %v1973 = vpack.c.b16 %v1733, %v1729
    %v1974 = vpack.c.b16 %v1738, %v1734
    %v1975 = vpack.c.b16 %v1739, %v1735
    %v1976 = vpack.c.b16 %v1740, %v1736
    %v1977 = vpack.c.b16 %v1741, %v1737
    %v1978 = vpack.c.b16 %v1746, %v1742
    %v1979 = vpack.c.b16 %v1747, %v1743
    %v1980 = vpack.c.b16 %v1748, %v1744
    %v1981 = vpack.c.b16 %v1749, %v1745
    %v1982 = vpack.c.b16 %v1754, %v1750
    %v1983 = vpack.c.b16 %v1755, %v1751
    %v1984 = vpack.c.b16 %v1756, %v1752
    %v1985 = vpack.c.b16 %v1757, %v1753
    %v1986 = vpack.c.b16 %v1762, %v1758
    %v1987 = vpack.c.b16 %v1763, %v1759
    %v1988 = vpack.c.b16 %v1764, %v1760
    %v1989 = vpack.c.b16 %v1765, %v1761
    %v1990 = vpack.c.b16 %v1770, %v1766
    %v1991 = vpack.c.b16 %v1771, %v1767
    %v1992 = vpack.c.b16 %v1772, %v1768
    %v1993 = vpack.c.b16 %v1773, %v1769
    %v1994 = vpack.c.b16 %v1778, %v1774
    %v1995 = vpack.c.b16 %v1779, %v1775
    %v1996 = vpack.c.b16 %v1780, %v1776
    %v1997 = vpack.c.b16 %v1781, %v1777
    %v1998 = vpack.c.b16 %v1786, %v1782
    %v1999 = vpack.c.b16 %v1787, %v1783
    %v2000 = vpack.c.b16 %v1788, %v1784
    %v2001 = vpack.c.b16 %v1789, %v1785
    %v2002 = vpack.c.b16 %v1794, %v1790
    %v2003 = vpack.c.b16 %v1795, %v1791
    %v2004 = vpack.c.b16 %v1796, %v1792
    %v2005 = vpack.c.b16 %v1797, %v1793
    %v2006 = vpack.c.b16 %v1802, %v1798
    %v2007 = vpack.c.b16 %v1803, %v1799
    %v2008 = vpack.c.b16 %v1804, %v1800
    %v2009 = vpack.c.b16 %v1805, %v1801
    %v2010 = vpack.c.b16 %v1810, %v1806
    %v2011 = vpack.c.b16 %v1811, %v1807
    %v2012 = vpack.c.b16 %v1812, %v1808
    %v2013 = vpack.c.b16 %v1813, %v1809
    %v2014 = vpack.c.b16 %v1818, %v1814
    %v2015 = vpack.c.b16 %v1819, %v1815
    %v2016 = vpack.c.b16 %v1820, %v1816
    %v2017 = vpack.c.b16 %v1821, %v1817
    %v2018 = vpack.c.b16 %v1826, %v1822
    %v2019 = vpack.c.b16 %v1827, %v1823
    %v2020 = vpack.c.b16 %v1828, %v1824
    %v2021 = vpack.c.b16 %v1829, %v1825
    %v2022 = vpack.c.b16 %v1834, %v1830
    %v2023 = vpack.c.b16 %v1835, %v1831
    %v2024 = vpack.c.b16 %v1836, %v1832
    %v2025 = vpack.c.b16 %v1837, %v1833
    %v2026 = vpack.c.b16 %v1842, %v1838
    %v2027 = vpack.c.b16 %v1843, %v1839
    %v2028 = vpack.c.b16 %v1844, %v1840
    %v2029 = vpack.c.b16 %v1845, %v1841
    %v2030 = vpack.c.b16 %v1850, %v1846
    %v2031 = vpack.c.b16 %v1851, %v1847
    %v2032 = vpack.c.b16 %v1852, %v1848
    %v2033 = vpack.c.b16 %v1853, %v1849
    %v2034 = vpack.c.b16 %v1858, %v1854
    %v2035 = vpack.c.b16 %v1859, %v1855
    %v2036 = vpack.c.b16 %v1860, %v1856
    %v2037 = vpack.c.b16 %v1861, %v1857
    %v2038 = vpack.c.b16 %v1866, %v1862
    %v2039 = vpack.c.b16 %v1867, %v1863
    %v2040 = vpack.c.b16 %v1868, %v1864
    %v2041 = vpack.c.b16 %v1869, %v1865
    %v2042 = vpack.c.b16 %v1874, %v1870
    %v2043 = vpack.c.b16 %v1875, %v1871
    %v2044 = vpack.c.b16 %v1876, %v1872
    %v2045 = vpack.c.b16 %v1877, %v1873
    %v2046 = vpack.c.b16 %v1882, %v1878
    %v2047 = vpack.c.b16 %v1883, %v1879
    %v2048 = vpack.c.b16 %v1884, %v1880
    %v2049 = vpack.c.b16 %v1885, %v1881
    %v2050 = vpack.c.b16 %v1890, %v1886
    %v2051 = vpack.c.b16 %v1891, %v1887
    %v2052 = vpack.c.b16 %v1892, %v1888
    %v2053 = vpack.c.b16 %v1893, %v1889
    %v2054 = vpack.c.b16 %v1898, %v1894
    %v2055 = vpack.c.b16 %v1899, %v1895
    %v2056 = vpack.c.b16 %v1900, %v1896
    %v2057 = vpack.c.b16 %v1901, %v1897
    %v2058 = vpack.c.b16 %v1906, %v1902
    %v2059 = vpack.c.b16 %v1907, %v1903
    %v2060 = vpack.c.b16 %v1908, %v1904
    %v2061 = vpack.c.b16 %v1909, %v1905
    %v2062 = vpack.c.b16 %v1914, %v1910
    %v2063 = vpack.c.b16 %v1915, %v1911
    %v2064 = vpack.c.b16 %v1916, %v1912
    %v2065 = vpack.c.b16 %v1917, %v1913
    %v2066 = vpack.c.b16 %v1922, %v1918
    %v2067 = vpack.c.b16 %v1923, %v1919
    %v2068 = vpack.c.b16 %v1924, %v1920
    %v2069 = vpack.c.b16 %v1925, %v1921
    %v2070 = vpack.c.b16 %v1930, %v1926
    %v2071 = vpack.c.b16 %v1931, %v1927
    %v2072 = vpack.c.b16 %v1932, %v1928
    %v2073 = vpack.c.b16 %v1933, %v1929
    %v2074 = vpack.c.b16 %v1938, %v1934
    %v2075 = vpack.c.b16 %v1939, %v1935
    %v2076 = vpack.c.b16 %v1940, %v1936
    %v2077 = vpack.c.b16 %v1941, %v1937
    %v2078 = vpack.c.b16 %v1946, %v1942
    %v2079 = vpack.c.b16 %v1947, %v1943
    %v2080 = vpack.c.b16 %v1948, %v1944
    %v2081 = vpack.c.b16 %v1949, %v1945
    %v2082 = vpack.c.b16 %v1954, %v1950
    %v2083 = vpack.c.b16 %v1955, %v1951
    %v2084 = vpack.c.b16 %v1956, %v1952
    %v2085 = vpack.c.b16 %v1957, %v1953
    %2214 = vmatprep.subr.bf16.mxu0 %v1959
    %2215 = vmatpush1.bf16.msra.mxu0 %v1958
    %2216 = vmatprep.subr.bf16.mxu0 %v1963
    %2217 = vmatpush1.bf16.msra.mxu0 %v1962
    %2218 = vmatprep.subr.bf16.mxu0 %v1967
    %2219 = vmatpush1.bf16.msra.mxu0 %v1966
    %2220 = vmatprep.subr.bf16.mxu0 %v1971
    %2221 = vmatpush1.bf16.msra.mxu0 %v1970
    %2222 = vmatprep.subr.bf16.mxu0 %v1975
    %2223 = vmatpush1.bf16.msra.mxu0 %v1974
    %2224 = vmatprep.subr.bf16.mxu0 %v1979
    %2225 = vmatpush1.bf16.msra.mxu0 %v1978
    %2226 = vmatprep.subr.bf16.mxu0 %v1983
    %2227 = vmatpush1.bf16.msra.mxu0 %v1982
    %2228 = vmatprep.subr.bf16.mxu0 %v1987
    %2229 = vmatpush1.bf16.msra.mxu0 %v1986
    %2230 = vmatprep.subr.bf16.mxu0 %v1991
    %2231 = vmatpush1.bf16.msra.mxu0 %v1990
    %2232 = vmatprep.subr.bf16.mxu0 %v1995
    %2233 = vmatpush1.bf16.msra.mxu0 %v1994
    %2234 = vmatprep.subr.bf16.mxu0 %v1999
    %2235 = vmatpush1.bf16.msra.mxu0 %v1998
    %2236 = vmatprep.subr.bf16.mxu0 %v2003
    %2237 = vmatpush1.bf16.msra.mxu0 %v2002
    %2238 = vmatprep.subr.bf16.mxu0 %v2007
    %2239 = vmatpush1.bf16.msra.mxu0 %v2006
    %2240 = vmatprep.subr.bf16.mxu0 %v2011
    %2241 = vmatpush1.bf16.msra.mxu0 %v2010
    %2242 = vmatprep.subr.bf16.mxu0 %v2015
    %2243 = vmatpush1.bf16.msra.mxu0 %v2014
    %2244 = vmatprep.subr.bf16.mxu0 %v2019
    %2245 = vmatpush1.bf16.msra.mxu0 %v2018
    %2246 = vmatprep.mubr.bf16.mxu0 %v1421
    %2247 = vmatmul.mubr.bf16.gmra.mrb[0].mxu0 %v1420
    %v2248 = vpop.f32.mrb[0].mxu0
    %v2249 = vadd.f32 %v1557, %v2248
    %v2250 = vpop.f32.mrb[0].mxu0
    %v2251 = vadd.f32 %v1561, %v2250
    %v2252 = vpop.f32.mrb[0].mxu0
    %v2253 = vadd.f32 %v1557, %v2252
    %v2254 = vpop.f32.mrb[0].mxu0
    %v2255 = vadd.f32 %v1561, %v2254
    %2256 = vdwg.mxu0
    %2257 = vmatprep.subr.bf16.mxu0 %v2023
    %2258 = vmatpush1.bf16.msra.mxu0 %v2022
    %2259 = vmatprep.subr.bf16.mxu0 %v2027
    %2260 = vmatpush1.bf16.msra.mxu0 %v2026
    %2261 = vmatprep.subr.bf16.mxu0 %v2031
    %2262 = vmatpush1.bf16.msra.mxu0 %v2030
    %2263 = vmatprep.subr.bf16.mxu0 %v2035
    %2264 = vmatpush1.bf16.msra.mxu0 %v2034
    %2265 = vmatprep.subr.bf16.mxu0 %v2039
    %2266 = vmatpush1.bf16.msra.mxu0 %v2038
    %2267 = vmatprep.subr.bf16.mxu0 %v2043
    %2268 = vmatpush1.bf16.msra.mxu0 %v2042
    %2269 = vmatprep.subr.bf16.mxu0 %v2047
    %2270 = vmatpush1.bf16.msra.mxu0 %v2046
    %2271 = vmatprep.subr.bf16.mxu0 %v2051
    %2272 = vmatpush1.bf16.msra.mxu0 %v2050
    %2273 = vmatprep.subr.bf16.mxu0 %v2055
    %2274 = vmatpush1.bf16.msra.mxu0 %v2054
    %2275 = vmatprep.subr.bf16.mxu0 %v2059
    %2276 = vmatpush1.bf16.msra.mxu0 %v2058
    %2277 = vmatprep.subr.bf16.mxu0 %v2063
    %2278 = vmatpush1.bf16.msra.mxu0 %v2062
    %2279 = vmatprep.subr.bf16.mxu0 %v2067
    %2280 = vmatpush1.bf16.msra.mxu0 %v2066
    %2281 = vmatprep.subr.bf16.mxu0 %v2071
    %2282 = vmatpush1.bf16.msra.mxu0 %v2070
    %2283 = vmatprep.subr.bf16.mxu0 %v2075
    %2284 = vmatpush1.bf16.msra.mxu0 %v2074
    %2285 = vmatprep.subr.bf16.mxu0 %v2079
    %2286 = vmatpush1.bf16.msra.mxu0 %v2078
    %2287 = vmatprep.subr.bf16.mxu0 %v2083
    %2288 = vmatpush1.bf16.msra.mxu0 %v2082
    %2289 = vmatprep.mubr.bf16.mxu0 %v1423
    %2290 = vmatmul.mubr.bf16.gmra.mrb[0].mxu0 %v1422
    %v2291 = vpop.f32.mrb[0].mxu0
    %v2292 = vadd.f32 %v2249, %v2291
    %v2293 = vpop.f32.mrb[0].mxu0
    %v2294 = vadd.f32 %v2251, %v2293
    %v2295 = vpop.f32.mrb[0].mxu0
    %v2296 = vadd.f32 %v2253, %v2295
    %v2297 = vpop.f32.mrb[0].mxu0
    %v2298 = vadd.f32 %v2255, %v2297
    %2299 = vdwg.mxu0
    %2300 = vmatprep.subr.bf16.mxu0 %v1961
    %2301 = vmatpush1.bf16.msra.mxu0 %v1960
    %2302 = vmatprep.subr.bf16.mxu0 %v1965
    %2303 = vmatpush1.bf16.msra.mxu0 %v1964
    %2304 = vmatprep.subr.bf16.mxu0 %v1969
    %2305 = vmatpush1.bf16.msra.mxu0 %v1968
    %2306 = vmatprep.subr.bf16.mxu0 %v1973
    %2307 = vmatpush1.bf16.msra.mxu0 %v1972
    %2308 = vmatprep.subr.bf16.mxu0 %v1977
    %2309 = vmatpush1.bf16.msra.mxu0 %v1976
    %2310 = vmatprep.subr.bf16.mxu0 %v1981
    %2311 = vmatpush1.bf16.msra.mxu0 %v1980
    %2312 = vmatprep.subr.bf16.mxu0 %v1985
    %2313 = vmatpush1.bf16.msra.mxu0 %v1984
    %2314 = vmatprep.subr.bf16.mxu0 %v1989
    %2315 = vmatpush1.bf16.msra.mxu0 %v1988
    %2316 = vmatprep.subr.bf16.mxu0 %v1993
    %2317 = vmatpush1.bf16.msra.mxu0 %v1992
    %2318 = vmatprep.subr.bf16.mxu0 %v1997
    %2319 = vmatpush1.bf16.msra.mxu0 %v1996
    %2320 = vmatprep.subr.bf16.mxu0 %v2001
    %2321 = vmatpush1.bf16.msra.mxu0 %v2000
    %2322 = vmatprep.subr.bf16.mxu0 %v2005
    %2323 = vmatpush1.bf16.msra.mxu0 %v2004
    %2324 = vmatprep.subr.bf16.mxu0 %v2009
    %2325 = vmatpush1.bf16.msra.mxu0 %v2008
    %2326 = vmatprep.subr.bf16.mxu0 %v2013
    %2327 = vmatpush1.bf16.msra.mxu0 %v2012
    %2328 = vmatprep.subr.bf16.mxu0 %v2017
    %2329 = vmatpush1.bf16.msra.mxu0 %v2016
    %2330 = vmatprep.subr.bf16.mxu0 %v2021
    %2331 = vmatpush1.bf16.msra.mxu0 %v2020
    %2332 = vmatprep.mubr.bf16.mxu0 %v1421
    %2333 = vmatmul.mubr.bf16.gmra.mrb[0].mxu0 %v1420
    %v2334 = vpop.f32.mrb[0].mxu0
    %v2335 = vadd.f32 %v1565, %v2334
    %v2336 = vpop.f32.mrb[0].mxu0
    %v2337 = vadd.f32 %v1569, %v2336
    %v2338 = vpop.f32.mrb[0].mxu0
    %v2339 = vadd.f32 %v1565, %v2338
    %v2340 = vpop.f32.mrb[0].mxu0
    %v2341 = vadd.f32 %v1569, %v2340
    %2342 = vdwg.mxu0
    %2343 = vmatprep.subr.bf16.mxu0 %v2025
    %2344 = vmatpush1.bf16.msra.mxu0 %v2024
    %2345 = vmatprep.subr.bf16.mxu0 %v2029
    %2346 = vmatpush1.bf16.msra.mxu0 %v2028
    %2347 = vmatprep.subr.bf16.mxu0 %v2033
    %2348 = vmatpush1.bf16.msra.mxu0 %v2032
    %2349 = vmatprep.subr.bf16.mxu0 %v2037
    %2350 = vmatpush1.bf16.msra.mxu0 %v2036
    %2351 = vmatprep.subr.bf16.mxu0 %v2041
    %2352 = vmatpush1.bf16.msra.mxu0 %v2040
    %2353 = vmatprep.subr.bf16.mxu0 %v2045
    %2354 = vmatpush1.bf16.msra.mxu0 %v2044
    %2355 = vmatprep.subr.bf16.mxu0 %v2049
    %2356 = vmatpush1.bf16.msra.mxu0 %v2048
    %2357 = vmatprep.subr.bf16.mxu0 %v2053
    %2358 = vmatpush1.bf16.msra.mxu0 %v2052
    %2359 = vmatprep.subr.bf16.mxu0 %v2057
    %2360 = vmatpush1.bf16.msra.mxu0 %v2056
    %2361 = vmatprep.subr.bf16.mxu0 %v2061
    %2362 = vmatpush1.bf16.msra.mxu0 %v2060
    %2363 = vmatprep.subr.bf16.mxu0 %v2065
    %2364 = vmatpush1.bf16.msra.mxu0 %v2064
    %2365 = vmatprep.subr.bf16.mxu0 %v2069
    %2366 = vmatpush1.bf16.msra.mxu0 %v2068
    %2367 = vmatprep.subr.bf16.mxu0 %v2073
    %2368 = vmatpush1.bf16.msra.mxu0 %v2072
    %2369 = vmatprep.subr.bf16.mxu0 %v2077
    %2370 = vmatpush1.bf16.msra.mxu0 %v2076
    %2371 = vmatprep.subr.bf16.mxu0 %v2081
    %2372 = vmatpush1.bf16.msra.mxu0 %v2080
    %2373 = vmatprep.subr.bf16.mxu0 %v2085
    %2374 = vmatpush1.bf16.msra.mxu0 %v2084
    %2375 = vmatprep.mubr.bf16.mxu0 %v1423
    %2376 = vmatmul.mubr.bf16.gmra.mrb[0].mxu0 %v1422
    %v2377 = vpop.f32.mrb[0].mxu0
    %v2378 = vadd.f32 %v2335, %v2377
    %v2379 = vpop.f32.mrb[0].mxu0
    %v2380 = vadd.f32 %v2337, %v2379
    %v2381 = vpop.f32.mrb[0].mxu0
    %v2382 = vadd.f32 %v2339, %v2381
    %v2383 = vpop.f32.mrb[0].mxu0
    %v2384 = vadd.f32 %v2341, %v2383
    %2385 = vdwg.mxu0
    %v2386 = vmax.f32 %v2292, 0.0
    %v2387 = vmax.f32 %v2294, 0.0
    %v2388 = vmax.f32 %v2378, 0.0
    %v2389 = vmax.f32 %v2380, 0.0
    %v2390 = vmax.f32 %v2296, 0.0
    %v2391 = vmax.f32 %v2298, 0.0
    %v2392 = vmax.f32 %v2382, 0.0
    %v2393 = vmax.f32 %v2384, 0.0
    %v2394 = vpack.c.bf16 %v2390, %v2386
    %v2395 = vpack.c.bf16 %v2391, %v2387
    %v2396 = vpack.c.bf16 %v2392, %v2388
    %v2397 = vpack.c.bf16 %v2393, %v2389
    %v2398 = vld [vmem:[%s9] sm:$0xf]
    %v2399 = vld [vmem:[%s9 + $0x4] sm:$0xf]
    %v2400 = vld [vmem:[%s9 + $0x8] sm:$0xf]
    %v2401 = vld [vmem:[%s9 + $0xc] sm:$0xf]
    %v2402 = vld [vmem:[%s9 + $0x10] sm:$0xf]
    %v2403 = vld [vmem:[%s9 + $0x14] sm:$0xf]
    %v2404 = vld [vmem:[%s9 + $0x18] sm:$0xf]
    %v2405 = vld [vmem:[%s9 + $0x1c] sm:$0xf]
    %v2406 = vld [vmem:[%s9 + $0x20] sm:$0xf]
    %v2407 = vld [vmem:[%s9 + $0x24] sm:$0xf]
    %v2408 = vld [vmem:[%s9 + $0x28] sm:$0xf]
    %v2409 = vld [vmem:[%s9 + $0x2c] sm:$0xf]
    %v2410 = vld [vmem:[%s9 + $0x30] sm:$0xf]
    %v2411 = vld [vmem:[%s9 + $0x34] sm:$0xf]
    %v2412 = vld [vmem:[%s9 + $0x38] sm:$0xf]
    %v2413 = vld [vmem:[%s9 + $0x3c] sm:$0xf]
    %v2414 = vld [vmem:[%s9 + $0x40] sm:$0xf]
    %v2415 = vld [vmem:[%s9 + $0x44] sm:$0xf]
    %v2416 = vld [vmem:[%s9 + $0x48] sm:$0xf]
    %v2417 = vld [vmem:[%s9 + $0x4c] sm:$0xf]
    %v2418 = vld [vmem:[%s9 + $0x50] sm:$0xf]
    %v2419 = vld [vmem:[%s9 + $0x54] sm:$0xf]
    %v2420 = vld [vmem:[%s9 + $0x58] sm:$0xf]
    %v2421 = vld [vmem:[%s9 + $0x5c] sm:$0xf]
    %v2422 = vld [vmem:[%s9 + $0x60] sm:$0xf]
    %v2423 = vld [vmem:[%s9 + $0x64] sm:$0xf]
    %v2424 = vld [vmem:[%s9 + $0x68] sm:$0xf]
    %v2425 = vld [vmem:[%s9 + $0x6c] sm:$0xf]
    %v2426 = vld [vmem:[%s9 + $0x70] sm:$0xf]
    %v2427 = vld [vmem:[%s9 + $0x74] sm:$0xf]
    %v2428 = vld [vmem:[%s9 + $0x78] sm:$0xf]
    %v2429 = vld [vmem:[%s9 + $0x7c] sm:$0xf]
    %v2430 = vld [vmem:[%s9 + $0x80] sm:$0xf]
    %v2431 = vld [vmem:[%s9 + $0x84] sm:$0xf]
    %v2432 = vld [vmem:[%s9 + $0x88] sm:$0xf]
    %v2433 = vld [vmem:[%s9 + $0x8c] sm:$0xf]
    %v2434 = vld [vmem:[%s9 + $0x90] sm:$0xf]
    %v2435 = vld [vmem:[%s9 + $0x94] sm:$0xf]
    %v2436 = vld [vmem:[%s9 + $0x98] sm:$0xf]
    %v2437 = vld [vmem:[%s9 + $0x9c] sm:$0xf]
    %v2438 = vld [vmem:[%s9 + $0xa0] sm:$0xf]
    %v2439 = vld [vmem:[%s9 + $0xa4] sm:$0xf]
    %v2440 = vld [vmem:[%s9 + $0xa8] sm:$0xf]
    %v2441 = vld [vmem:[%s9 + $0xac] sm:$0xf]
    %v2442 = vld [vmem:[%s9 + $0xb0] sm:$0xf]
    %v2443 = vld [vmem:[%s9 + $0xb4] sm:$0xf]
    %v2444 = vld [vmem:[%s9 + $0xb8] sm:$0xf]
    %v2445 = vld [vmem:[%s9 + $0xbc] sm:$0xf]
    %v2446 = vld [vmem:[%s9 + $0xc0] sm:$0xf]
    %v2447 = vld [vmem:[%s9 + $0xc4] sm:$0xf]
    %v2448 = vld [vmem:[%s9 + $0xc8] sm:$0xf]
    %v2449 = vld [vmem:[%s9 + $0xcc] sm:$0xf]
    %v2450 = vld [vmem:[%s9 + $0xd0] sm:$0xf]
    %v2451 = vld [vmem:[%s9 + $0xd4] sm:$0xf]
    %v2452 = vld [vmem:[%s9 + $0xd8] sm:$0xf]
    %v2453 = vld [vmem:[%s9 + $0xdc] sm:$0xf]
    %v2454 = vld [vmem:[%s9 + $0xe0] sm:$0xf]
    %v2455 = vld [vmem:[%s9 + $0xe4] sm:$0xf]
    %v2456 = vld [vmem:[%s9 + $0xe8] sm:$0xf]
    %v2457 = vld [vmem:[%s9 + $0xec] sm:$0xf]
    %v2458 = vld [vmem:[%s9 + $0xf0] sm:$0xf]
    %v2459 = vld [vmem:[%s9 + $0xf4] sm:$0xf]
    %v2460 = vld [vmem:[%s9 + $0xf8] sm:$0xf]
    %v2461 = vld [vmem:[%s9 + $0xfc] sm:$0xf]
    %v2462 = vld [vmem:[%s10] sm:$0x1]
    %v2464 = vlaneseq
    %v2465 = vshrl.u32 %v2464, 7
    %v2466 = vsub.s32 0, %v2465
    %v2467 = vrot.slane %v2462, %v2466
    %v2533 = vunpack.c.l.b16 %v2398
    %v2534 = vunpack.c.l.b16 %v2399
    %v2535 = vunpack.c.l.b16 %v2400
    %v2536 = vunpack.c.l.b16 %v2401
    %v2537 = vunpack.c.l.b16 %v2402
    %v2538 = vunpack.c.l.b16 %v2403
    %v2539 = vunpack.c.l.b16 %v2404
    %v2540 = vunpack.c.l.b16 %v2405
    %v2541 = vunpack.c.l.b16 %v2406
    %v2542 = vunpack.c.l.b16 %v2407
    %v2543 = vunpack.c.l.b16 %v2408
    %v2544 = vunpack.c.l.b16 %v2409
    %v2545 = vunpack.c.l.b16 %v2410
    %v2546 = vunpack.c.l.b16 %v2411
    %v2547 = vunpack.c.l.b16 %v2412
    %v2548 = vunpack.c.l.b16 %v2413
    %v2549 = vunpack.c.l.b16 %v2414
    %v2550 = vunpack.c.l.b16 %v2415
    %v2551 = vunpack.c.l.b16 %v2416
    %v2552 = vunpack.c.l.b16 %v2417
    %v2553 = vunpack.c.l.b16 %v2418
    %v2554 = vunpack.c.l.b16 %v2419
    %v2555 = vunpack.c.l.b16 %v2420
    %v2556 = vunpack.c.l.b16 %v2421
    %v2557 = vunpack.c.l.b16 %v2422
    %v2558 = vunpack.c.l.b16 %v2423
    %v2559 = vunpack.c.l.b16 %v2424
    %v2560 = vunpack.c.l.b16 %v2425
    %v2561 = vunpack.c.l.b16 %v2426
    %v2562 = vunpack.c.l.b16 %v2427
    %v2563 = vunpack.c.l.b16 %v2428
    %v2564 = vunpack.c.l.b16 %v2429
    %v2565 = vunpack.c.l.b16 %v2430
    %v2566 = vunpack.c.l.b16 %v2431
    %v2567 = vunpack.c.l.b16 %v2432
    %v2568 = vunpack.c.l.b16 %v2433
    %v2569 = vunpack.c.l.b16 %v2434
    %v2570 = vunpack.c.l.b16 %v2435
    %v2571 = vunpack.c.l.b16 %v2436
    %v2572 = vunpack.c.l.b16 %v2437
    %v2573 = vunpack.c.l.b16 %v2438
    %v2574 = vunpack.c.l.b16 %v2439
    %v2575 = vunpack.c.l.b16 %v2440
    %v2576 = vunpack.c.l.b16 %v2441
    %v2577 = vunpack.c.l.b16 %v2442
    %v2578 = vunpack.c.l.b16 %v2443
    %v2579 = vunpack.c.l.b16 %v2444
    %v2580 = vunpack.c.l.b16 %v2445
    %v2581 = vunpack.c.l.b16 %v2446
    %v2582 = vunpack.c.l.b16 %v2447
    %v2583 = vunpack.c.l.b16 %v2448
    %v2584 = vunpack.c.l.b16 %v2449
    %v2585 = vunpack.c.l.b16 %v2450
    %v2586 = vunpack.c.l.b16 %v2451
    %v2587 = vunpack.c.l.b16 %v2452
    %v2588 = vunpack.c.l.b16 %v2453
    %v2589 = vunpack.c.l.b16 %v2454
    %v2590 = vunpack.c.l.b16 %v2455
    %v2591 = vunpack.c.l.b16 %v2456
    %v2592 = vunpack.c.l.b16 %v2457
    %v2593 = vunpack.c.l.b16 %v2458
    %v2594 = vunpack.c.l.b16 %v2459
    %v2595 = vunpack.c.l.b16 %v2460
    %v2596 = vunpack.c.l.b16 %v2461
    %v2597 = vpack.c.b16 %v2534, %v2533
    %v2598 = vpack.c.b16 %v2536, %v2535
    %v2599 = vpack.c.b16 %v2538, %v2537
    %v2600 = vpack.c.b16 %v2540, %v2539
    %v2601 = vpack.c.b16 %v2542, %v2541
    %v2602 = vpack.c.b16 %v2544, %v2543
    %v2603 = vpack.c.b16 %v2546, %v2545
    %v2604 = vpack.c.b16 %v2548, %v2547
    %v2605 = vpack.c.b16 %v2550, %v2549
    %v2606 = vpack.c.b16 %v2552, %v2551
    %v2607 = vpack.c.b16 %v2554, %v2553
    %v2608 = vpack.c.b16 %v2556, %v2555
    %v2609 = vpack.c.b16 %v2558, %v2557
    %v2610 = vpack.c.b16 %v2560, %v2559
    %v2611 = vpack.c.b16 %v2562, %v2561
    %v2612 = vpack.c.b16 %v2564, %v2563
    %v2613 = vpack.c.b16 %v2566, %v2565
    %v2614 = vpack.c.b16 %v2568, %v2567
    %v2615 = vpack.c.b16 %v2570, %v2569
    %v2616 = vpack.c.b16 %v2572, %v2571
    %v2617 = vpack.c.b16 %v2574, %v2573
    %v2618 = vpack.c.b16 %v2576, %v2575
    %v2619 = vpack.c.b16 %v2578, %v2577
    %v2620 = vpack.c.b16 %v2580, %v2579
    %v2621 = vpack.c.b16 %v2582, %v2581
    %v2622 = vpack.c.b16 %v2584, %v2583
    %v2623 = vpack.c.b16 %v2586, %v2585
    %v2624 = vpack.c.b16 %v2588, %v2587
    %v2625 = vpack.c.b16 %v2590, %v2589
    %v2626 = vpack.c.b16 %v2592, %v2591
    %v2627 = vpack.c.b16 %v2594, %v2593
    %v2628 = vpack.c.b16 %v2596, %v2595
    %2661 = vmatprep.subr.bf16.mxu0 0
    %2662 = vmatpush1.bf16.msra.mxu0 %v2597
    %2663 = vmatprep.subr.bf16.mxu0 0
    %2664 = vmatpush1.bf16.msra.mxu0 %v2598
    %2665 = vmatprep.subr.bf16.mxu0 0
    %2666 = vmatpush1.bf16.msra.mxu0 %v2599
    %2667 = vmatprep.subr.bf16.mxu0 0
    %2668 = vmatpush1.bf16.msra.mxu0 %v2600
    %2669 = vmatprep.subr.bf16.mxu0 0
    %2670 = vmatpush1.bf16.msra.mxu0 %v2601
    %2671 = vmatprep.subr.bf16.mxu0 0
    %2672 = vmatpush1.bf16.msra.mxu0 %v2602
    %2673 = vmatprep.subr.bf16.mxu0 0
    %2674 = vmatpush1.bf16.msra.mxu0 %v2603
    %2675 = vmatprep.subr.bf16.mxu0 0
    %2676 = vmatpush1.bf16.msra.mxu0 %v2604
    %2677 = vmatprep.subr.bf16.mxu0 0
    %2678 = vmatpush1.bf16.msra.mxu0 %v2605
    %2679 = vmatprep.subr.bf16.mxu0 0
    %2680 = vmatpush1.bf16.msra.mxu0 %v2606
    %2681 = vmatprep.subr.bf16.mxu0 0
    %2682 = vmatpush1.bf16.msra.mxu0 %v2607
    %2683 = vmatprep.subr.bf16.mxu0 0
    %2684 = vmatpush1.bf16.msra.mxu0 %v2608
    %2685 = vmatprep.subr.bf16.mxu0 0
    %2686 = vmatpush1.bf16.msra.mxu0 %v2609
    %2687 = vmatprep.subr.bf16.mxu0 0
    %2688 = vmatpush1.bf16.msra.mxu0 %v2610
    %2689 = vmatprep.subr.bf16.mxu0 0
    %2690 = vmatpush1.bf16.msra.mxu0 %v2611
    %2691 = vmatprep.subr.bf16.mxu0 0
    %2692 = vmatpush1.bf16.msra.mxu0 %v2612
    %2693 = vmatprep.mubr.bf16.mxu0 %v2395
    %2694 = vmatmul.mubr.bf16.gmra.mrb[0].mxu0 %v2394
    %v2695 = vpop.f32.mrb[0].mxu0
    %v2696 = vadd.f32 %v2467, %v2695
    %v2697 = vpop.f32.mrb[0].mxu0
    %v2698 = vpop.f32.mrb[0].mxu0
    %v2699 = vadd.f32 %v2467, %v2698
    %v2700 = vpop.f32.mrb[0].mxu0
    %2701 = vdwg.mxu0
    %2702 = vmatprep.subr.bf16.mxu0 0
    %2703 = vmatpush1.bf16.msra.mxu0 %v2613
    %2704 = vmatprep.subr.bf16.mxu0 0
    %2705 = vmatpush1.bf16.msra.mxu0 %v2614
    %2706 = vmatprep.subr.bf16.mxu0 0
    %2707 = vmatpush1.bf16.msra.mxu0 %v2615
    %2708 = vmatprep.subr.bf16.mxu0 0
    %2709 = vmatpush1.bf16.msra.mxu0 %v2616
    %2710 = vmatprep.subr.bf16.mxu0 0
    %2711 = vmatpush1.bf16.msra.mxu0 %v2617
    %2712 = vmatprep.subr.bf16.mxu0 0
    %2713 = vmatpush1.bf16.msra.mxu0 %v2618
    %2714 = vmatprep.subr.bf16.mxu0 0
    %2715 = vmatpush1.bf16.msra.mxu0 %v2619
    %2716 = vmatprep.subr.bf16.mxu0 0
    %2717 = vmatpush1.bf16.msra.mxu0 %v2620
    %2718 = vmatprep.subr.bf16.mxu0 0
    %2719 = vmatpush1.bf16.msra.mxu0 %v2621
    %2720 = vmatprep.subr.bf16.mxu0 0
    %2721 = vmatpush1.bf16.msra.mxu0 %v2622
    %2722 = vmatprep.subr.bf16.mxu0 0
    %2723 = vmatpush1.bf16.msra.mxu0 %v2623
    %2724 = vmatprep.subr.bf16.mxu0 0
    %2725 = vmatpush1.bf16.msra.mxu0 %v2624
    %2726 = vmatprep.subr.bf16.mxu0 0
    %2727 = vmatpush1.bf16.msra.mxu0 %v2625
    %2728 = vmatprep.subr.bf16.mxu0 0
    %2729 = vmatpush1.bf16.msra.mxu0 %v2626
    %2730 = vmatprep.subr.bf16.mxu0 0
    %2731 = vmatpush1.bf16.msra.mxu0 %v2627
    %2732 = vmatprep.subr.bf16.mxu0 0
    %2733 = vmatpush1.bf16.msra.mxu0 %v2628
    %2734 = vmatprep.mubr.bf16.mxu0 %v2397
    %2735 = vmatmul.mubr.bf16.gmra.mrb[0].mxu0 %v2396
    %v2736 = vpop.f32.mrb[0].mxu0
    %v2737 = vadd.f32 %v2696, %v2736
    %v2738 = vpop.f32.mrb[0].mxu0
    %v2739 = vpop.f32.mrb[0].mxu0
    %v2740 = vadd.f32 %v2699, %v2739
    %v2741 = vpop.f32.mrb[0].mxu0
    %2742 = vdwg.mxu0
    %v2743 = vld [vmem:[%s13] sm:$0x1]
    %v2744 = vpack.c.bf16 %v2740, %v2737
    %v2745 = vld [vmem:[%s11] sm:$0xf]
    %v2746 = vld [vmem:[%s11 + $0x4] sm:$0xf]
    %v2747 = vld [vmem:[%s11 + $0x8] sm:$0xf]
    %v2748 = vld [vmem:[%s11 + $0xc] sm:$0xf]
    %v2753 = vunpack.c.l.b16 %v2745
    %v2754 = vunpack.c.l.b16 %v2746
    %v2755 = vunpack.c.l.b16 %v2747
    %v2756 = vunpack.c.l.b16 %v2748
    %v2757 = vpack.c.b16 %v2754, %v2753
    %v2758 = vpack.c.b16 %v2756, %v2755
    %vm2761 = vcmask 261120
    %v2763 = vsel %vm2761, %v2744, 0
    %2765 = vmatprep.subr.bf16.mxu0 0
    %2766 = vmatpush1.bf16.msra.mxu0 %v2757
    %2767 = vmatprep.subr.bf16.mxu0 0
    %2768 = vmatpush1.bf16.msra.mxu0 %v2758
    %2769 = vmatprep.subr.bf16.mxu0 0
    %2770 = vmatpush1.bf16.msra.mxu0 0
    %2771 = vmatprep.subr.bf16.mxu0 0
    %2772 = vmatpush1.bf16.msra.mxu0 0
    %2773 = vmatprep.subr.bf16.mxu0 0
    %2774 = vmatpush1.bf16.msra.mxu0 0
    %2775 = vmatprep.subr.bf16.mxu0 0
    %2776 = vmatpush1.bf16.msra.mxu0 0
    %2777 = vmatprep.subr.bf16.mxu0 0
    %2778 = vmatpush1.bf16.msra.mxu0 0
    %2779 = vmatprep.subr.bf16.mxu0 0
    %2780 = vmatpush1.bf16.msra.mxu0 0
    %2781 = vmatprep.subr.bf16.mxu0 0
    %2782 = vmatpush1.bf16.msra.mxu0 0
    %2783 = vmatprep.subr.bf16.mxu0 0
    %2784 = vmatpush1.bf16.msra.mxu0 0
    %2785 = vmatprep.subr.bf16.mxu0 0
    %2786 = vmatpush1.bf16.msra.mxu0 0
    %2787 = vmatprep.subr.bf16.mxu0 0
    %2788 = vmatpush1.bf16.msra.mxu0 0
    %2789 = vmatprep.subr.bf16.mxu0 0
    %2790 = vmatpush1.bf16.msra.mxu0 0
    %2791 = vmatprep.subr.bf16.mxu0 0
    %2792 = vmatpush1.bf16.msra.mxu0 0
    %2793 = vmatprep.subr.bf16.mxu0 0
    %2794 = vmatpush1.bf16.msra.mxu0 0
    %2795 = vmatprep.subr.bf16.mxu0 0
    %2796 = vmatpush1.bf16.msra.mxu0 0
    %2797 = vmatprep.mubr.bf16.mxu0 0
    %2798 = vmatmul.mubr.bf16.gmra.mrb[0].mxu0 %v2763
    %v2799 = vpop.f32.mrb[0].mxu0
    %v2800 = vadd.f32 0.0, %v2799
    %v2801 = vpop.f32.mrb[0].mxu0
    %v2802 = vpop.f32.mrb[0].mxu0
    %v2803 = vadd.f32 0.0, %v2802
    %v2804 = vpop.f32.mrb[0].mxu0
    %2805 = vdwg.mxu0
    %v2807 = vlaneseq
    %v2808 = vshrl.u32 %v2807, 7
    %v2809 = vsub.s32 0, %v2808
    %v2810 = vrot.slane %v2743, %v2809
    %v2812 = vadd.f32 %v2810, %v2800
    %v2813 = vadd.f32 %v2810, %v2803
    %2814 = vmin.xlane.f32.xlu0 %v2812
    %v2815 = vpop.xlane.xlu0 %2814
    %2816 = vmin.xlane.f32.xlu0 %v2813
    %v2817 = vpop.xlane.xlu0 %2816
    %v2818 = vlaneseq
    %v2819 = vand.u32 %v2818, 127
    %vm2820 = vcmp.eq.f32.partialorder %v2812, %v2815
    %vm2821 = vcmp.eq.f32.partialorder %v2813, %v2817
    %v2822 = vsel %vm2820, %v2819, 128
    %v2823 = vsel %vm2821, %v2819, 128
    %v2824 = vand.u32 %v2822, 65535
    %v2825 = vshra.s32 %v2822, 16
    %v2826 = vcvt.s32.f32 %v2824
    %v2827 = vcvt.s32.f32 %v2825
    %2828 = vmin.xlane.f32.xlu0 %v2827
    %v2829 = vpop.xlane.xlu0 %2828
    %vm2830 = vcmp.eq.f32.partialorder %v2827, %v2829
    %v2831 = vsel %vm2830, %v2826, inf
    %2832 = vmin.xlane.f32.xlu0 %v2831
    %v2833 = vpop.xlane.xlu0 %2832
    %v2834 = vcvt.f32.s32 %v2833
    %v2835 = vcvt.f32.s32 %v2829
    %v2836 = vshll.u32 %v2835, 16
    %v2837 = vadd.s32 %v2836, %v2834
    %v2838 = vand.u32 %v2823, 65535
    %v2839 = vshra.s32 %v2823, 16
    %v2840 = vcvt.s32.f32 %v2838
    %v2841 = vcvt.s32.f32 %v2839
    %2842 = vmin.xlane.f32.xlu0 %v2841
    %v2843 = vpop.xlane.xlu0 %2842
    %vm2844 = vcmp.eq.f32.partialorder %v2841, %v2843
    %v2845 = vsel %vm2844, %v2840, inf
    %2846 = vmin.xlane.f32.xlu0 %v2845
    %v2847 = vpop.xlane.xlu0 %2846
    %v2848 = vcvt.f32.s32 %v2847
    %v2849 = vcvt.f32.s32 %v2843
    %v2850 = vshll.u32 %v2849, 16
    %v2851 = vadd.s32 %v2850, %v2848
    %vm2852 = vcmask 7168
    %2853 = vst.msk [vmem:[%s25] sm:$0xff] %vm2852, %v2837
    %2854 = vst.msk [vmem:[%s25 + $0x8] sm:$0xff] %vm2852, %v2851
    %vm2855 = vcmp.eq.s32.totalorder %v2819, %v2837
    %vm2856 = vcmp.eq.s32.totalorder %v2819, %v2851
    %v2857 = vsel %vm2855, 1, 0
    %v2858 = vsel %vm2856, 1, 0
    %v2859 = vcvt.s32.f32 %v2857
    %v2860 = vcvt.s32.f32 %v2858
    %v2861 = vpack.c.bf16 %v2860, %v2859
    %v2862 = vld [vmem:[%s12] sm:$0xf]
    %v2863 = vld [vmem:[%s12 + $0x4] sm:$0xf]
    %v2864 = vld [vmem:[%s12 + $0x8] sm:$0xf]
    %v2865 = vld [vmem:[%s12 + $0xc] sm:$0xf]
    %v2866 = vld [vmem:[%s12 + $0x10] sm:$0xf]
    %v2867 = vld [vmem:[%s12 + $0x14] sm:$0xf]
    %v2868 = vld [vmem:[%s12 + $0x18] sm:$0xf]
    %v2869 = vld [vmem:[%s12 + $0x1c] sm:$0xf]
    %v2870 = vld [vmem:[%s12 + $0x20] sm:$0xf]
    %v2871 = vld [vmem:[%s12 + $0x24] sm:$0xf]
    %v2872 = vld [vmem:[%s12 + $0x28] sm:$0xf]
    %v2873 = vld [vmem:[%s12 + $0x2c] sm:$0xf]
    %v2874 = vld [vmem:[%s12 + $0x30] sm:$0xf]
    %v2875 = vld [vmem:[%s12 + $0x34] sm:$0xf]
    %v2876 = vld [vmem:[%s12 + $0x38] sm:$0xf]
    %v2877 = vld [vmem:[%s12 + $0x3c] sm:$0xf]
    %v2894 = vunpack.c.l.b16 %v2862
    %v2895 = vunpack.c.l.b16 %v2863
    %v2896 = vunpack.c.l.b16 %v2864
    %v2897 = vunpack.c.l.b16 %v2865
    %v2898 = vunpack.c.l.b16 %v2866
    %v2899 = vunpack.c.l.b16 %v2867
    %v2900 = vunpack.c.l.b16 %v2868
    %v2901 = vunpack.c.l.b16 %v2869
    %v2902 = vunpack.c.l.b16 %v2870
    %v2903 = vunpack.c.l.b16 %v2871
    %v2904 = vunpack.c.l.b16 %v2872
    %v2905 = vunpack.c.l.b16 %v2873
    %v2906 = vunpack.c.l.b16 %v2874
    %v2907 = vunpack.c.l.b16 %v2875
    %v2908 = vunpack.c.l.b16 %v2876
    %v2909 = vunpack.c.l.b16 %v2877
    %v2910 = vpack.c.b16 %v2895, %v2894
    %v2911 = vpack.c.b16 %v2897, %v2896
    %v2912 = vpack.c.b16 %v2899, %v2898
    %v2913 = vpack.c.b16 %v2901, %v2900
    %v2914 = vpack.c.b16 %v2903, %v2902
    %v2915 = vpack.c.b16 %v2905, %v2904
    %v2916 = vpack.c.b16 %v2907, %v2906
    %v2917 = vpack.c.b16 %v2909, %v2908
    %2926 = vmatprep.subr.bf16.mxu0 0
    %2927 = vmatpush1.bf16.msra.mxu0 %v2910
    %2928 = vmatprep.subr.bf16.mxu0 0
    %2929 = vmatpush1.bf16.msra.mxu0 %v2911
    %2930 = vmatprep.subr.bf16.mxu0 0
    %2931 = vmatpush1.bf16.msra.mxu0 %v2912
    %2932 = vmatprep.subr.bf16.mxu0 0
    %2933 = vmatpush1.bf16.msra.mxu0 %v2913
    %2934 = vmatprep.subr.bf16.mxu0 0
    %2935 = vmatpush1.bf16.msra.mxu0 %v2914
    %2936 = vmatprep.subr.bf16.mxu0 0
    %2937 = vmatpush1.bf16.msra.mxu0 %v2915
    %2938 = vmatprep.subr.bf16.mxu0 0
    %2939 = vmatpush1.bf16.msra.mxu0 %v2916
    %2940 = vmatprep.subr.bf16.mxu0 0
    %2941 = vmatpush1.bf16.msra.mxu0 %v2917
    %2942 = vmatprep.subr.bf16.mxu0 0
    %2943 = vmatpush1.bf16.msra.mxu0 0
    %2944 = vmatprep.subr.bf16.mxu0 0
    %2945 = vmatpush1.bf16.msra.mxu0 0
    %2946 = vmatprep.subr.bf16.mxu0 0
    %2947 = vmatpush1.bf16.msra.mxu0 0
    %2948 = vmatprep.subr.bf16.mxu0 0
    %2949 = vmatpush1.bf16.msra.mxu0 0
    %2950 = vmatprep.subr.bf16.mxu0 0
    %2951 = vmatpush1.bf16.msra.mxu0 0
    %2952 = vmatprep.subr.bf16.mxu0 0
    %2953 = vmatpush1.bf16.msra.mxu0 0
    %2954 = vmatprep.subr.bf16.mxu0 0
    %2955 = vmatpush1.bf16.msra.mxu0 0
    %2956 = vmatprep.subr.bf16.mxu0 0
    %2957 = vmatpush1.bf16.msra.mxu0 0
    %2958 = vmatprep.mubr.bf16.mxu0 0
    %2959 = vmatmul.mubr.bf16.gmra.mrb[0].mxu0 %v2861
    %v2960 = vpop.f32.mrb[0].mxu0
    %v2961 = vadd.f32 0.0, %v2960
    %v2962 = vpop.f32.mrb[0].mxu0
    %v2963 = vpop.f32.mrb[0].mxu0
    %v2964 = vadd.f32 0.0, %v2963
    %v2965 = vpop.f32.mrb[0].mxu0
    %2966 = vdwg.mxu0
    %v2967 = vsub.f32 %v2961, %v2737
    %v2968 = vsub.f32 %v2964, %v2740
    %v2969 = vmul.f32 %v2967, %v2967
    %v2970 = vmul.f32 %v2968, %v2968
    %v2971 = vsel %vm2761, %v2969, 0.0
    %2972 = vadd.xlane.f32.xlu0 %v2971
    %v2973 = vpop.xlane.xlu0 %2972
    %v2974 = vsel %vm2761, %v2970, 0.0
    %2975 = vadd.xlane.f32.xlu0 %v2974
    %v2976 = vpop.xlane.xlu0 %2975
    %2977 = vst.msk [vmem:[%s24] sm:$0xff] %vm2852, %v2973
    %2978 = vst.msk [vmem:[%s24 + $0x8] sm:$0xff] %vm2852, %v2976
    %v2979 = vpack.c.bf16 %v2964, %v2961
    %v2980 = vld [vmem:[%s14] sm:$0xff]
    %v2981 = vld [vmem:[%s14 + $0x8] sm:$0xff]
    %v2982 = vld [vmem:[%s14 + $0x10] sm:$0xff]
    %v2983 = vld [vmem:[%s14 + $0x18] sm:$0xff]
    %v2984 = vld [vmem:[%s14 + $0x20] sm:$0xff]
    %v2985 = vld [vmem:[%s14 + $0x28] sm:$0xff]
    %v2986 = vld [vmem:[%s14 + $0x30] sm:$0xff]
    %v2987 = vld [vmem:[%s14 + $0x38] sm:$0xff]
    %v2988 = vld [vmem:[%s15] sm:$0xff]
    %v2989 = vld [vmem:[%s15 + $0x8] sm:$0xff]
    %v2990 = vld [vmem:[%s15 + $0x10] sm:$0xff]
    %v2991 = vld [vmem:[%s15 + $0x18] sm:$0xff]
    %v2996 = vunpack.c.l.b16 %v2988
    %v2997 = vunpack.c.h.b16 %v2988
    %v2998 = vunpack.c.l.b16 %v2989
    %v2999 = vunpack.c.h.b16 %v2989
    %v3000 = vunpack.c.l.b16 %v2990
    %v3001 = vunpack.c.h.b16 %v2990
    %v3002 = vunpack.c.l.b16 %v2991
    %v3003 = vunpack.c.h.b16 %v2991
    %v3004 = vpack.c.b16 %v3000, %v2996
    %v3005 = vpack.c.b16 %v3001, %v2997
    %v3006 = vpack.c.b16 %v3002, %v2998
    %v3007 = vpack.c.b16 %v3003, %v2999
    %3012 = vmatprep.subr.bf16.mxu0 %v3005
    %3013 = vmatpush1.bf16.msra.mxu0 %v3004
    %3014 = vmatprep.subr.bf16.mxu0 0
    %3015 = vmatpush1.bf16.msra.mxu0 0
    %3016 = vmatprep.subr.bf16.mxu0 0
    %3017 = vmatpush1.bf16.msra.mxu0 0
    %3018 = vmatprep.subr.bf16.mxu0 0
    %3019 = vmatpush1.bf16.msra.mxu0 0
    %3020 = vmatprep.subr.bf16.mxu0 0
    %3021 = vmatpush1.bf16.msra.mxu0 0
    %3022 = vmatprep.subr.bf16.mxu0 0
    %3023 = vmatpush1.bf16.msra.mxu0 0
    %3024 = vmatprep.subr.bf16.mxu0 0
    %3025 = vmatpush1.bf16.msra.mxu0 0
    %3026 = vmatprep.subr.bf16.mxu0 0
    %3027 = vmatpush1.bf16.msra.mxu0 0
    %3028 = vmatprep.subr.bf16.mxu0 0
    %3029 = vmatpush1.bf16.msra.mxu0 0
    %3030 = vmatprep.subr.bf16.mxu0 0
    %3031 = vmatpush1.bf16.msra.mxu0 0
    %3032 = vmatprep.subr.bf16.mxu0 0
    %3033 = vmatpush1.bf16.msra.mxu0 0
    %3034 = vmatprep.subr.bf16.mxu0 0
    %3035 = vmatpush1.bf16.msra.mxu0 0
    %3036 = vmatprep.subr.bf16.mxu0 0
    %3037 = vmatpush1.bf16.msra.mxu0 0
    %3038 = vmatprep.subr.bf16.mxu0 0
    %3039 = vmatpush1.bf16.msra.mxu0 0
    %3040 = vmatprep.subr.bf16.mxu0 0
    %3041 = vmatpush1.bf16.msra.mxu0 0
    %3042 = vmatprep.subr.bf16.mxu0 0
    %3043 = vmatpush1.bf16.msra.mxu0 0
    %3044 = vmatprep.mubr.bf16.mxu0 0
    %3045 = vmatmul.mubr.bf16.gmra.mrb[0].mxu0 %v206
    %v3046 = vpop.f32.mrb[0].mxu0
    %v3047 = vadd.f32 0.0, %v3046
    %v3048 = vpop.f32.mrb[0].mxu0
    %v3049 = vadd.f32 0.0, %v3048
    %v3050 = vpop.f32.mrb[0].mxu0
    %v3051 = vadd.f32 0.0, %v3050
    %v3052 = vpop.f32.mrb[0].mxu0
    %v3053 = vadd.f32 0.0, %v3052
    %3054 = vdwg.mxu0
    %3055 = vmatprep.subr.bf16.mxu0 %v3007
    %3056 = vmatpush1.bf16.msra.mxu0 %v3006
    %3057 = vmatprep.subr.bf16.mxu0 0
    %3058 = vmatpush1.bf16.msra.mxu0 0
    %3059 = vmatprep.subr.bf16.mxu0 0
    %3060 = vmatpush1.bf16.msra.mxu0 0
    %3061 = vmatprep.subr.bf16.mxu0 0
    %3062 = vmatpush1.bf16.msra.mxu0 0
    %3063 = vmatprep.subr.bf16.mxu0 0
    %3064 = vmatpush1.bf16.msra.mxu0 0
    %3065 = vmatprep.subr.bf16.mxu0 0
    %3066 = vmatpush1.bf16.msra.mxu0 0
    %3067 = vmatprep.subr.bf16.mxu0 0
    %3068 = vmatpush1.bf16.msra.mxu0 0
    %3069 = vmatprep.subr.bf16.mxu0 0
    %3070 = vmatpush1.bf16.msra.mxu0 0
    %3071 = vmatprep.subr.bf16.mxu0 0
    %3072 = vmatpush1.bf16.msra.mxu0 0
    %3073 = vmatprep.subr.bf16.mxu0 0
    %3074 = vmatpush1.bf16.msra.mxu0 0
    %3075 = vmatprep.subr.bf16.mxu0 0
    %3076 = vmatpush1.bf16.msra.mxu0 0
    %3077 = vmatprep.subr.bf16.mxu0 0
    %3078 = vmatpush1.bf16.msra.mxu0 0
    %3079 = vmatprep.subr.bf16.mxu0 0
    %3080 = vmatpush1.bf16.msra.mxu0 0
    %3081 = vmatprep.subr.bf16.mxu0 0
    %3082 = vmatpush1.bf16.msra.mxu0 0
    %3083 = vmatprep.subr.bf16.mxu0 0
    %3084 = vmatpush1.bf16.msra.mxu0 0
    %3085 = vmatprep.subr.bf16.mxu0 0
    %3086 = vmatpush1.bf16.msra.mxu0 0
    %3087 = vmatprep.mubr.bf16.mxu0 0
    %3088 = vmatmul.mubr.bf16.gmra.mrb[0].mxu0 %v206
    %v3089 = vpop.f32.mrb[0].mxu0
    %v3090 = vadd.f32 0.0, %v3089
    %v3091 = vpop.f32.mrb[0].mxu0
    %v3092 = vadd.f32 0.0, %v3091
    %v3093 = vpop.f32.mrb[0].mxu0
    %v3094 = vadd.f32 0.0, %v3093
    %v3095 = vpop.f32.mrb[0].mxu0
    %v3096 = vadd.f32 0.0, %v3095
    %3097 = vdwg.mxu0
    %v3106 = vunpack.c.l.b16 %v2980
    %v3107 = vunpack.c.h.b16 %v2980
    %v3108 = vunpack.c.l.b16 %v2981
    %v3109 = vunpack.c.h.b16 %v2981
    %v3110 = vunpack.c.l.b16 %v2982
    %v3111 = vunpack.c.h.b16 %v2982
    %v3112 = vunpack.c.l.b16 %v2983
    %v3113 = vunpack.c.h.b16 %v2983
    %v3114 = vunpack.c.l.b16 %v2984
    %v3115 = vunpack.c.h.b16 %v2984
    %v3116 = vunpack.c.l.b16 %v2985
    %v3117 = vunpack.c.h.b16 %v2985
    %v3118 = vunpack.c.l.b16 %v2986
    %v3119 = vunpack.c.h.b16 %v2986
    %v3120 = vunpack.c.l.b16 %v2987
    %v3121 = vunpack.c.h.b16 %v2987
    %v3122 = vpack.c.b16 %v3110, %v3106
    %v3123 = vpack.c.b16 %v3111, %v3107
    %v3124 = vpack.c.b16 %v3112, %v3108
    %v3125 = vpack.c.b16 %v3113, %v3109
    %v3126 = vpack.c.b16 %v3118, %v3114
    %v3127 = vpack.c.b16 %v3119, %v3115
    %v3128 = vpack.c.b16 %v3120, %v3116
    %v3129 = vpack.c.b16 %v3121, %v3117
    %v3139 = vsel %vm2761, %v2979, 0
    %3141 = vmatprep.subr.bf16.mxu0 %v3123
    %3142 = vmatpush1.bf16.msra.mxu0 %v3122
    %3143 = vmatprep.subr.bf16.mxu0 %v3127
    %3144 = vmatpush1.bf16.msra.mxu0 %v3126
    %3145 = vmatprep.subr.bf16.mxu0 0
    %3146 = vmatpush1.bf16.msra.mxu0 0
    %3147 = vmatprep.subr.bf16.mxu0 0
    %3148 = vmatpush1.bf16.msra.mxu0 0
    %3149 = vmatprep.subr.bf16.mxu0 0
    %3150 = vmatpush1.bf16.msra.mxu0 0
    %3151 = vmatprep.subr.bf16.mxu0 0
    %3152 = vmatpush1.bf16.msra.mxu0 0
    %3153 = vmatprep.subr.bf16.mxu0 0
    %3154 = vmatpush1.bf16.msra.mxu0 0
    %3155 = vmatprep.subr.bf16.mxu0 0
    %3156 = vmatpush1.bf16.msra.mxu0 0
    %3157 = vmatprep.subr.bf16.mxu0 0
    %3158 = vmatpush1.bf16.msra.mxu0 0
    %3159 = vmatprep.subr.bf16.mxu0 0
    %3160 = vmatpush1.bf16.msra.mxu0 0
    %3161 = vmatprep.subr.bf16.mxu0 0
    %3162 = vmatpush1.bf16.msra.mxu0 0
    %3163 = vmatprep.subr.bf16.mxu0 0
    %3164 = vmatpush1.bf16.msra.mxu0 0
    %3165 = vmatprep.subr.bf16.mxu0 0
    %3166 = vmatpush1.bf16.msra.mxu0 0
    %3167 = vmatprep.subr.bf16.mxu0 0
    %3168 = vmatpush1.bf16.msra.mxu0 0
    %3169 = vmatprep.subr.bf16.mxu0 0
    %3170 = vmatpush1.bf16.msra.mxu0 0
    %3171 = vmatprep.subr.bf16.mxu0 0
    %3172 = vmatpush1.bf16.msra.mxu0 0
    %3173 = vmatprep.mubr.bf16.mxu0 0
    %3174 = vmatmul.mubr.bf16.gmra.mrb[0].mxu0 %v3139
    %v3175 = vpop.f32.mrb[0].mxu0
    %v3176 = vadd.f32 %v3047, %v3175
    %v3177 = vpop.f32.mrb[0].mxu0
    %v3178 = vadd.f32 %v3049, %v3177
    %v3179 = vpop.f32.mrb[0].mxu0
    %v3180 = vadd.f32 %v3051, %v3179
    %v3181 = vpop.f32.mrb[0].mxu0
    %v3182 = vadd.f32 %v3053, %v3181
    %3183 = vdwg.mxu0
    %3184 = vmatprep.subr.bf16.mxu0 %v3125
    %3185 = vmatpush1.bf16.msra.mxu0 %v3124
    %3186 = vmatprep.subr.bf16.mxu0 %v3129
    %3187 = vmatpush1.bf16.msra.mxu0 %v3128
    %3188 = vmatprep.subr.bf16.mxu0 0
    %3189 = vmatpush1.bf16.msra.mxu0 0
    %3190 = vmatprep.subr.bf16.mxu0 0
    %3191 = vmatpush1.bf16.msra.mxu0 0
    %3192 = vmatprep.subr.bf16.mxu0 0
    %3193 = vmatpush1.bf16.msra.mxu0 0
    %3194 = vmatprep.subr.bf16.mxu0 0
    %3195 = vmatpush1.bf16.msra.mxu0 0
    %3196 = vmatprep.subr.bf16.mxu0 0
    %3197 = vmatpush1.bf16.msra.mxu0 0
    %3198 = vmatprep.subr.bf16.mxu0 0
    %3199 = vmatpush1.bf16.msra.mxu0 0
    %3200 = vmatprep.subr.bf16.mxu0 0
    %3201 = vmatpush1.bf16.msra.mxu0 0
    %3202 = vmatprep.subr.bf16.mxu0 0
    %3203 = vmatpush1.bf16.msra.mxu0 0
    %3204 = vmatprep.subr.bf16.mxu0 0
    %3205 = vmatpush1.bf16.msra.mxu0 0
    %3206 = vmatprep.subr.bf16.mxu0 0
    %3207 = vmatpush1.bf16.msra.mxu0 0
    %3208 = vmatprep.subr.bf16.mxu0 0
    %3209 = vmatpush1.bf16.msra.mxu0 0
    %3210 = vmatprep.subr.bf16.mxu0 0
    %3211 = vmatpush1.bf16.msra.mxu0 0
    %3212 = vmatprep.subr.bf16.mxu0 0
    %3213 = vmatpush1.bf16.msra.mxu0 0
    %3214 = vmatprep.subr.bf16.mxu0 0
    %3215 = vmatpush1.bf16.msra.mxu0 0
    %3216 = vmatprep.mubr.bf16.mxu0 0
    %3217 = vmatmul.mubr.bf16.gmra.mrb[0].mxu0 %v3139
    %v3218 = vpop.f32.mrb[0].mxu0
    %v3219 = vadd.f32 %v3090, %v3218
    %v3220 = vpop.f32.mrb[0].mxu0
    %v3221 = vadd.f32 %v3092, %v3220
    %v3222 = vpop.f32.mrb[0].mxu0
    %v3223 = vadd.f32 %v3094, %v3222
    %v3224 = vpop.f32.mrb[0].mxu0
    %v3225 = vadd.f32 %v3096, %v3224
    %3226 = vdwg.mxu0
    %v3227 = vld [vmem:[%s16] sm:$0xf]
    %v3229 = vlaneseq
    %v3230 = vshrl.u32 %v3229, 7
    %v3231 = vsub.s32 0, %v3230
    %v3232 = vrot.slane %v3227, %v3231
    %v3233 = vlaneseq
    %v3234 = vshrl.u32 %v3233, 7
    %v3235 = vsub.s32 1, %v3234
    %v3236 = vrot.slane %v3227, %v3235
    %v3237 = vlaneseq
    %v3238 = vshrl.u32 %v3237, 7
    %v3239 = vsub.s32 2, %v3238
    %v3240 = vrot.slane %v3227, %v3239
    %v3241 = vlaneseq
    %v3242 = vshrl.u32 %v3241, 7
    %v3243 = vsub.s32 3, %v3242
    %v3244 = vrot.slane %v3227, %v3243
    %v3249 = vadd.f32 %v3176, %v3232
    %v3250 = vadd.f32 %v3178, %v3236
    %v3251 = vadd.f32 %v3219, %v3240
    %v3252 = vadd.f32 %v3221, %v3244
    %v3253 = vadd.f32 %v3180, %v3232
    %v3254 = vadd.f32 %v3182, %v3236
    %v3255 = vadd.f32 %v3223, %v3240
    %v3256 = vadd.f32 %v3225, %v3244
    %v3257 = vmax.f32 %v3249, 0.0
    %v3258 = vmax.f32 %v3250, 0.0
    %v3259 = vmax.f32 %v3251, 0.0
    %v3260 = vmax.f32 %v3252, 0.0
    %v3261 = vmax.f32 %v3253, 0.0
    %v3262 = vmax.f32 %v3254, 0.0
    %v3263 = vmax.f32 %v3255, 0.0
    %v3264 = vmax.f32 %v3256, 0.0
    %v3265 = vpack.c.bf16 %v3261, %v3257
    %v3266 = vpack.c.bf16 %v3262, %v3258
    %v3267 = vpack.c.bf16 %v3263, %v3259
    %v3268 = vpack.c.bf16 %v3264, %v3260
    %v3269 = vld [vmem:[#allocation6] sm:$0xff]
    %v3270 = vld [vmem:[#allocation6 + $0x8] sm:$0xff]
    %v3271 = vld [vmem:[#allocation6 + $0x10] sm:$0xff]
    %v3272 = vld [vmem:[#allocation6 + $0x18] sm:$0xff]
    %v3273 = vld [vmem:[#allocation6 + $0x20] sm:$0xff]
    %v3274 = vld [vmem:[#allocation6 + $0x28] sm:$0xff]
    %v3275 = vld [vmem:[#allocation6 + $0x30] sm:$0xff]
    %v3276 = vld [vmem:[#allocation6 + $0x38] sm:$0xff]
    %v3277 = vld [vmem:[#allocation6 + $0x40] sm:$0xff]
    %v3278 = vld [vmem:[#allocation6 + $0x48] sm:$0xff]
    %v3279 = vld [vmem:[#allocation6 + $0x50] sm:$0xff]
    %v3280 = vld [vmem:[#allocation6 + $0x58] sm:$0xff]
    %v3281 = vld [vmem:[#allocation6 + $0x60] sm:$0xff]
    %v3282 = vld [vmem:[#allocation6 + $0x68] sm:$0xff]
    %v3283 = vld [vmem:[#allocation6 + $0x70] sm:$0xff]
    %v3284 = vld [vmem:[#allocation6 + $0x78] sm:$0xff]
    %v3285 = vld [vmem:[#allocation6 + $0x80] sm:$0xff]
    %v3286 = vld [vmem:[#allocation6 + $0x88] sm:$0xff]
    %v3287 = vld [vmem:[#allocation6 + $0x90] sm:$0xff]
    %v3288 = vld [vmem:[#allocation6 + $0x98] sm:$0xff]
    %v3289 = vld [vmem:[#allocation6 + $0xa0] sm:$0xff]
    %v3290 = vld [vmem:[#allocation6 + $0xa8] sm:$0xff]
    %v3291 = vld [vmem:[#allocation6 + $0xb0] sm:$0xff]
    %v3292 = vld [vmem:[#allocation6 + $0xb8] sm:$0xff]
    %v3293 = vld [vmem:[#allocation6 + $0xc0] sm:$0xff]
    %v3294 = vld [vmem:[#allocation6 + $0xc8] sm:$0xff]
    %v3295 = vld [vmem:[#allocation6 + $0xd0] sm:$0xff]
    %v3296 = vld [vmem:[#allocation6 + $0xd8] sm:$0xff]
    %v3297 = vld [vmem:[#allocation6 + $0xe0] sm:$0xff]
    %v3298 = vld [vmem:[#allocation6 + $0xe8] sm:$0xff]
    %v3299 = vld [vmem:[#allocation6 + $0xf0] sm:$0xff]
    %v3300 = vld [vmem:[#allocation6 + $0xf8] sm:$0xff]
    %v3301 = vld [vmem:[#allocation6 + $0x100] sm:$0xff]
    %v3302 = vld [vmem:[#allocation6 + $0x108] sm:$0xff]
    %v3303 = vld [vmem:[#allocation6 + $0x110] sm:$0xff]
    %v3304 = vld [vmem:[#allocation6 + $0x118] sm:$0xff]
    %v3305 = vld [vmem:[#allocation6 + $0x120] sm:$0xff]
    %v3306 = vld [vmem:[#allocation6 + $0x128] sm:$0xff]
    %v3307 = vld [vmem:[#allocation6 + $0x130] sm:$0xff]
    %v3308 = vld [vmem:[#allocation6 + $0x138] sm:$0xff]
    %v3309 = vld [vmem:[#allocation6 + $0x140] sm:$0xff]
    %v3310 = vld [vmem:[#allocation6 + $0x148] sm:$0xff]
    %v3311 = vld [vmem:[#allocation6 + $0x150] sm:$0xff]
    %v3312 = vld [vmem:[#allocation6 + $0x158] sm:$0xff]
    %v3313 = vld [vmem:[#allocation6 + $0x160] sm:$0xff]
    %v3314 = vld [vmem:[#allocation6 + $0x168] sm:$0xff]
    %v3315 = vld [vmem:[#allocation6 + $0x170] sm:$0xff]
    %v3316 = vld [vmem:[#allocation6 + $0x178] sm:$0xff]
    %v3317 = vld [vmem:[#allocation6 + $0x180] sm:$0xff]
    %v3318 = vld [vmem:[#allocation6 + $0x188] sm:$0xff]
    %v3319 = vld [vmem:[#allocation6 + $0x190] sm:$0xff]
    %v3320 = vld [vmem:[#allocation6 + $0x198] sm:$0xff]
    %v3321 = vld [vmem:[#allocation6 + $0x1a0] sm:$0xff]
    %v3322 = vld [vmem:[#allocation6 + $0x1a8] sm:$0xff]
    %v3323 = vld [vmem:[#allocation6 + $0x1b0] sm:$0xff]
    %v3324 = vld [vmem:[#allocation6 + $0x1b8] sm:$0xff]
    %v3325 = vld [vmem:[#allocation6 + $0x1c0] sm:$0xff]
    %v3326 = vld [vmem:[#allocation6 + $0x1c8] sm:$0xff]
    %v3327 = vld [vmem:[#allocation6 + $0x1d0] sm:$0xff]
    %v3328 = vld [vmem:[#allocation6 + $0x1d8] sm:$0xff]
    %v3329 = vld [vmem:[#allocation6 + $0x1e0] sm:$0xff]
    %v3330 = vld [vmem:[#allocation6 + $0x1e8] sm:$0xff]
    %v3331 = vld [vmem:[#allocation6 + $0x1f0] sm:$0xff]
    %v3332 = vld [vmem:[#allocation6 + $0x1f8] sm:$0xff]
    %v3333 = vld [vmem:[#allocation6 + $0x200] sm:$0xff]
    %v3334 = vld [vmem:[#allocation6 + $0x208] sm:$0xff]
    %v3335 = vld [vmem:[#allocation6 + $0x210] sm:$0xff]
    %v3336 = vld [vmem:[#allocation6 + $0x218] sm:$0xff]
    %v3337 = vld [vmem:[#allocation6 + $0x220] sm:$0xff]
    %v3338 = vld [vmem:[#allocation6 + $0x228] sm:$0xff]
    %v3339 = vld [vmem:[#allocation6 + $0x230] sm:$0xff]
    %v3340 = vld [vmem:[#allocation6 + $0x238] sm:$0xff]
    %v3341 = vld [vmem:[#allocation6 + $0x240] sm:$0xff]
    %v3342 = vld [vmem:[#allocation6 + $0x248] sm:$0xff]
    %v3343 = vld [vmem:[#allocation6 + $0x250] sm:$0xff]
    %v3344 = vld [vmem:[#allocation6 + $0x258] sm:$0xff]
    %v3345 = vld [vmem:[#allocation6 + $0x260] sm:$0xff]
    %v3346 = vld [vmem:[#allocation6 + $0x268] sm:$0xff]
    %v3347 = vld [vmem:[#allocation6 + $0x270] sm:$0xff]
    %v3348 = vld [vmem:[#allocation6 + $0x278] sm:$0xff]
    %v3349 = vld [vmem:[#allocation6 + $0x280] sm:$0xff]
    %v3350 = vld [vmem:[#allocation6 + $0x288] sm:$0xff]
    %v3351 = vld [vmem:[#allocation6 + $0x290] sm:$0xff]
    %v3352 = vld [vmem:[#allocation6 + $0x298] sm:$0xff]
    %v3353 = vld [vmem:[#allocation6 + $0x2a0] sm:$0xff]
    %v3354 = vld [vmem:[#allocation6 + $0x2a8] sm:$0xff]
    %v3355 = vld [vmem:[#allocation6 + $0x2b0] sm:$0xff]
    %v3356 = vld [vmem:[#allocation6 + $0x2b8] sm:$0xff]
    %v3357 = vld [vmem:[#allocation6 + $0x2c0] sm:$0xff]
    %v3358 = vld [vmem:[#allocation6 + $0x2c8] sm:$0xff]
    %v3359 = vld [vmem:[#allocation6 + $0x2d0] sm:$0xff]
    %v3360 = vld [vmem:[#allocation6 + $0x2d8] sm:$0xff]
    %v3361 = vld [vmem:[#allocation6 + $0x2e0] sm:$0xff]
    %v3362 = vld [vmem:[#allocation6 + $0x2e8] sm:$0xff]
    %v3363 = vld [vmem:[#allocation6 + $0x2f0] sm:$0xff]
    %v3364 = vld [vmem:[#allocation6 + $0x2f8] sm:$0xff]
    %v3365 = vld [vmem:[#allocation6 + $0x300] sm:$0xff]
    %v3366 = vld [vmem:[#allocation6 + $0x308] sm:$0xff]
    %v3367 = vld [vmem:[#allocation6 + $0x310] sm:$0xff]
    %v3368 = vld [vmem:[#allocation6 + $0x318] sm:$0xff]
    %v3369 = vld [vmem:[#allocation6 + $0x320] sm:$0xff]
    %v3370 = vld [vmem:[#allocation6 + $0x328] sm:$0xff]
    %v3371 = vld [vmem:[#allocation6 + $0x330] sm:$0xff]
    %v3372 = vld [vmem:[#allocation6 + $0x338] sm:$0xff]
    %v3373 = vld [vmem:[#allocation6 + $0x340] sm:$0xff]
    %v3374 = vld [vmem:[#allocation6 + $0x348] sm:$0xff]
    %v3375 = vld [vmem:[#allocation6 + $0x350] sm:$0xff]
    %v3376 = vld [vmem:[#allocation6 + $0x358] sm:$0xff]
    %v3377 = vld [vmem:[#allocation6 + $0x360] sm:$0xff]
    %v3378 = vld [vmem:[#allocation6 + $0x368] sm:$0xff]
    %v3379 = vld [vmem:[#allocation6 + $0x370] sm:$0xff]
    %v3380 = vld [vmem:[#allocation6 + $0x378] sm:$0xff]
    %v3381 = vld [vmem:[#allocation6 + $0x380] sm:$0xff]
    %v3382 = vld [vmem:[#allocation6 + $0x388] sm:$0xff]
    %v3383 = vld [vmem:[#allocation6 + $0x390] sm:$0xff]
    %v3384 = vld [vmem:[#allocation6 + $0x398] sm:$0xff]
    %v3385 = vld [vmem:[#allocation6 + $0x3a0] sm:$0xff]
    %v3386 = vld [vmem:[#allocation6 + $0x3a8] sm:$0xff]
    %v3387 = vld [vmem:[#allocation6 + $0x3b0] sm:$0xff]
    %v3388 = vld [vmem:[#allocation6 + $0x3b8] sm:$0xff]
    %v3389 = vld [vmem:[#allocation6 + $0x3c0] sm:$0xff]
    %v3390 = vld [vmem:[#allocation6 + $0x3c8] sm:$0xff]
    %v3391 = vld [vmem:[#allocation6 + $0x3d0] sm:$0xff]
    %v3392 = vld [vmem:[#allocation6 + $0x3d8] sm:$0xff]
    %v3393 = vld [vmem:[#allocation6 + $0x3e0] sm:$0xff]
    %v3394 = vld [vmem:[#allocation6 + $0x3e8] sm:$0xff]
    %v3395 = vld [vmem:[#allocation6 + $0x3f0] sm:$0xff]
    %v3396 = vld [vmem:[#allocation6 + $0x3f8] sm:$0xff]
    %v3397 = vld [vmem:[#allocation7] sm:$0xf]
    %v3399 = vlaneseq
    %v3400 = vshrl.u32 %v3399, 7
    %v3401 = vsub.s32 0, %v3400
    %v3402 = vrot.slane %v3397, %v3401
    %v3403 = vlaneseq
    %v3404 = vshrl.u32 %v3403, 7
    %v3405 = vsub.s32 1, %v3404
    %v3406 = vrot.slane %v3397, %v3405
    %v3407 = vlaneseq
    %v3408 = vshrl.u32 %v3407, 7
    %v3409 = vsub.s32 2, %v3408
    %v3410 = vrot.slane %v3397, %v3409
    %v3411 = vlaneseq
    %v3412 = vshrl.u32 %v3411, 7
    %v3413 = vsub.s32 3, %v3412
    %v3414 = vrot.slane %v3397, %v3413
    %v3547 = vunpack.c.l.b16 %v3269
    %v3548 = vunpack.c.h.b16 %v3269
    %v3549 = vunpack.c.l.b16 %v3270
    %v3550 = vunpack.c.h.b16 %v3270
    %v3551 = vunpack.c.l.b16 %v3271
    %v3552 = vunpack.c.h.b16 %v3271
    %v3553 = vunpack.c.l.b16 %v3272
    %v3554 = vunpack.c.h.b16 %v3272
    %v3555 = vunpack.c.l.b16 %v3273
    %v3556 = vunpack.c.h.b16 %v3273
    %v3557 = vunpack.c.l.b16 %v3274
    %v3558 = vunpack.c.h.b16 %v3274
    %v3559 = vunpack.c.l.b16 %v3275
    %v3560 = vunpack.c.h.b16 %v3275
    %v3561 = vunpack.c.l.b16 %v3276
    %v3562 = vunpack.c.h.b16 %v3276
    %v3563 = vunpack.c.l.b16 %v3277
    %v3564 = vunpack.c.h.b16 %v3277
    %v3565 = vunpack.c.l.b16 %v3278
    %v3566 = vunpack.c.h.b16 %v3278
    %v3567 = vunpack.c.l.b16 %v3279
    %v3568 = vunpack.c.h.b16 %v3279
    %v3569 = vunpack.c.l.b16 %v3280
    %v3570 = vunpack.c.h.b16 %v3280
    %v3571 = vunpack.c.l.b16 %v3281
    %v3572 = vunpack.c.h.b16 %v3281
    %v3573 = vunpack.c.l.b16 %v3282
    %v3574 = vunpack.c.h.b16 %v3282
    %v3575 = vunpack.c.l.b16 %v3283
    %v3576 = vunpack.c.h.b16 %v3283
    %v3577 = vunpack.c.l.b16 %v3284
    %v3578 = vunpack.c.h.b16 %v3284
    %v3579 = vunpack.c.l.b16 %v3285
    %v3580 = vunpack.c.h.b16 %v3285
    %v3581 = vunpack.c.l.b16 %v3286
    %v3582 = vunpack.c.h.b16 %v3286
    %v3583 = vunpack.c.l.b16 %v3287
    %v3584 = vunpack.c.h.b16 %v3287
    %v3585 = vunpack.c.l.b16 %v3288
    %v3586 = vunpack.c.h.b16 %v3288
    %v3587 = vunpack.c.l.b16 %v3289
    %v3588 = vunpack.c.h.b16 %v3289
    %v3589 = vunpack.c.l.b16 %v3290
    %v3590 = vunpack.c.h.b16 %v3290
    %v3591 = vunpack.c.l.b16 %v3291
    %v3592 = vunpack.c.h.b16 %v3291
    %v3593 = vunpack.c.l.b16 %v3292
    %v3594 = vunpack.c.h.b16 %v3292
    %v3595 = vunpack.c.l.b16 %v3293
    %v3596 = vunpack.c.h.b16 %v3293
    %v3597 = vunpack.c.l.b16 %v3294
    %v3598 = vunpack.c.h.b16 %v3294
    %v3599 = vunpack.c.l.b16 %v3295
    %v3600 = vunpack.c.h.b16 %v3295
    %v3601 = vunpack.c.l.b16 %v3296
    %v3602 = vunpack.c.h.b16 %v3296
    %v3603 = vunpack.c.l.b16 %v3297
    %v3604 = vunpack.c.h.b16 %v3297
    %v3605 = vunpack.c.l.b16 %v3298
    %v3606 = vunpack.c.h.b16 %v3298
    %v3607 = vunpack.c.l.b16 %v3299
    %v3608 = vunpack.c.h.b16 %v3299
    %v3609 = vunpack.c.l.b16 %v3300
    %v3610 = vunpack.c.h.b16 %v3300
    %v3611 = vunpack.c.l.b16 %v3301
    %v3612 = vunpack.c.h.b16 %v3301
    %v3613 = vunpack.c.l.b16 %v3302
    %v3614 = vunpack.c.h.b16 %v3302
    %v3615 = vunpack.c.l.b16 %v3303
    %v3616 = vunpack.c.h.b16 %v3303
    %v3617 = vunpack.c.l.b16 %v3304
    %v3618 = vunpack.c.h.b16 %v3304
    %v3619 = vunpack.c.l.b16 %v3305
    %v3620 = vunpack.c.h.b16 %v3305
    %v3621 = vunpack.c.l.b16 %v3306
    %v3622 = vunpack.c.h.b16 %v3306
    %v3623 = vunpack.c.l.b16 %v3307
    %v3624 = vunpack.c.h.b16 %v3307
    %v3625 = vunpack.c.l.b16 %v3308
    %v3626 = vunpack.c.h.b16 %v3308
    %v3627 = vunpack.c.l.b16 %v3309
    %v3628 = vunpack.c.h.b16 %v3309
    %v3629 = vunpack.c.l.b16 %v3310
    %v3630 = vunpack.c.h.b16 %v3310
    %v3631 = vunpack.c.l.b16 %v3311
    %v3632 = vunpack.c.h.b16 %v3311
    %v3633 = vunpack.c.l.b16 %v3312
    %v3634 = vunpack.c.h.b16 %v3312
    %v3635 = vunpack.c.l.b16 %v3313
    %v3636 = vunpack.c.h.b16 %v3313
    %v3637 = vunpack.c.l.b16 %v3314
    %v3638 = vunpack.c.h.b16 %v3314
    %v3639 = vunpack.c.l.b16 %v3315
    %v3640 = vunpack.c.h.b16 %v3315
    %v3641 = vunpack.c.l.b16 %v3316
    %v3642 = vunpack.c.h.b16 %v3316
    %v3643 = vunpack.c.l.b16 %v3317
    %v3644 = vunpack.c.h.b16 %v3317
    %v3645 = vunpack.c.l.b16 %v3318
    %v3646 = vunpack.c.h.b16 %v3318
    %v3647 = vunpack.c.l.b16 %v3319
    %v3648 = vunpack.c.h.b16 %v3319
    %v3649 = vunpack.c.l.b16 %v3320
    %v3650 = vunpack.c.h.b16 %v3320
    %v3651 = vunpack.c.l.b16 %v3321
    %v3652 = vunpack.c.h.b16 %v3321
    %v3653 = vunpack.c.l.b16 %v3322
    %v3654 = vunpack.c.h.b16 %v3322
    %v3655 = vunpack.c.l.b16 %v3323
    %v3656 = vunpack.c.h.b16 %v3323
    %v3657 = vunpack.c.l.b16 %v3324
    %v3658 = vunpack.c.h.b16 %v3324
    %v3659 = vunpack.c.l.b16 %v3325
    %v3660 = vunpack.c.h.b16 %v3325
    %v3661 = vunpack.c.l.b16 %v3326
    %v3662 = vunpack.c.h.b16 %v3326
    %v3663 = vunpack.c.l.b16 %v3327
    %v3664 = vunpack.c.h.b16 %v3327
    %v3665 = vunpack.c.l.b16 %v3328
    %v3666 = vunpack.c.h.b16 %v3328
    %v3667 = vunpack.c.l.b16 %v3329
    %v3668 = vunpack.c.h.b16 %v3329
    %v3669 = vunpack.c.l.b16 %v3330
    %v3670 = vunpack.c.h.b16 %v3330
    %v3671 = vunpack.c.l.b16 %v3331
    %v3672 = vunpack.c.h.b16 %v3331
    %v3673 = vunpack.c.l.b16 %v3332
    %v3674 = vunpack.c.h.b16 %v3332
    %v3675 = vunpack.c.l.b16 %v3333
    %v3676 = vunpack.c.h.b16 %v3333
    %v3677 = vunpack.c.l.b16 %v3334
    %v3678 = vunpack.c.h.b16 %v3334
    %v3679 = vunpack.c.l.b16 %v3335
    %v3680 = vunpack.c.h.b16 %v3335
    %v3681 = vunpack.c.l.b16 %v3336
    %v3682 = vunpack.c.h.b16 %v3336
    %v3683 = vunpack.c.l.b16 %v3337
    %v3684 = vunpack.c.h.b16 %v3337
    %v3685 = vunpack.c.l.b16 %v3338
    %v3686 = vunpack.c.h.b16 %v3338
    %v3687 = vunpack.c.l.b16 %v3339
    %v3688 = vunpack.c.h.b16 %v3339
    %v3689 = vunpack.c.l.b16 %v3340
    %v3690 = vunpack.c.h.b16 %v3340
    %v3691 = vunpack.c.l.b16 %v3341
    %v3692 = vunpack.c.h.b16 %v3341
    %v3693 = vunpack.c.l.b16 %v3342
    %v3694 = vunpack.c.h.b16 %v3342
    %v3695 = vunpack.c.l.b16 %v3343
    %v3696 = vunpack.c.h.b16 %v3343
    %v3697 = vunpack.c.l.b16 %v3344
    %v3698 = vunpack.c.h.b16 %v3344
    %v3699 = vunpack.c.l.b16 %v3345
    %v3700 = vunpack.c.h.b16 %v3345
    %v3701 = vunpack.c.l.b16 %v3346
    %v3702 = vunpack.c.h.b16 %v3346
    %v3703 = vunpack.c.l.b16 %v3347
    %v3704 = vunpack.c.h.b16 %v3347
    %v3705 = vunpack.c.l.b16 %v3348
    %v3706 = vunpack.c.h.b16 %v3348
    %v3707 = vunpack.c.l.b16 %v3349
    %v3708 = vunpack.c.h.b16 %v3349
    %v3709 = vunpack.c.l.b16 %v3350
    %v3710 = vunpack.c.h.b16 %v3350
    %v3711 = vunpack.c.l.b16 %v3351
    %v3712 = vunpack.c.h.b16 %v3351
    %v3713 = vunpack.c.l.b16 %v3352
    %v3714 = vunpack.c.h.b16 %v3352
    %v3715 = vunpack.c.l.b16 %v3353
    %v3716 = vunpack.c.h.b16 %v3353
    %v3717 = vunpack.c.l.b16 %v3354
    %v3718 = vunpack.c.h.b16 %v3354
    %v3719 = vunpack.c.l.b16 %v3355
    %v3720 = vunpack.c.h.b16 %v3355
    %v3721 = vunpack.c.l.b16 %v3356
    %v3722 = vunpack.c.h.b16 %v3356
    %v3723 = vunpack.c.l.b16 %v3357
    %v3724 = vunpack.c.h.b16 %v3357
    %v3725 = vunpack.c.l.b16 %v3358
    %v3726 = vunpack.c.h.b16 %v3358
    %v3727 = vunpack.c.l.b16 %v3359
    %v3728 = vunpack.c.h.b16 %v3359
    %v3729 = vunpack.c.l.b16 %v3360
    %v3730 = vunpack.c.h.b16 %v3360
    %v3731 = vunpack.c.l.b16 %v3361
    %v3732 = vunpack.c.h.b16 %v3361
    %v3733 = vunpack.c.l.b16 %v3362
    %v3734 = vunpack.c.h.b16 %v3362
    %v3735 = vunpack.c.l.b16 %v3363
    %v3736 = vunpack.c.h.b16 %v3363
    %v3737 = vunpack.c.l.b16 %v3364
    %v3738 = vunpack.c.h.b16 %v3364
    %v3739 = vunpack.c.l.b16 %v3365
    %v3740 = vunpack.c.h.b16 %v3365
    %v3741 = vunpack.c.l.b16 %v3366
    %v3742 = vunpack.c.h.b16 %v3366
    %v3743 = vunpack.c.l.b16 %v3367
    %v3744 = vunpack.c.h.b16 %v3367
    %v3745 = vunpack.c.l.b16 %v3368
    %v3746 = vunpack.c.h.b16 %v3368
    %v3747 = vunpack.c.l.b16 %v3369
    %v3748 = vunpack.c.h.b16 %v3369
    %v3749 = vunpack.c.l.b16 %v3370
    %v3750 = vunpack.c.h.b16 %v3370
    %v3751 = vunpack.c.l.b16 %v3371
    %v3752 = vunpack.c.h.b16 %v3371
    %v3753 = vunpack.c.l.b16 %v3372
    %v3754 = vunpack.c.h.b16 %v3372
    %v3755 = vunpack.c.l.b16 %v3373
    %v3756 = vunpack.c.h.b16 %v3373
    %v3757 = vunpack.c.l.b16 %v3374
    %v3758 = vunpack.c.h.b16 %v3374
    %v3759 = vunpack.c.l.b16 %v3375
    %v3760 = vunpack.c.h.b16 %v3375
    %v3761 = vunpack.c.l.b16 %v3376
    %v3762 = vunpack.c.h.b16 %v3376
    %v3763 = vunpack.c.l.b16 %v3377
    %v3764 = vunpack.c.h.b16 %v3377
    %v3765 = vunpack.c.l.b16 %v3378
    %v3766 = vunpack.c.h.b16 %v3378
    %v3767 = vunpack.c.l.b16 %v3379
    %v3768 = vunpack.c.h.b16 %v3379
    %v3769 = vunpack.c.l.b16 %v3380
    %v3770 = vunpack.c.h.b16 %v3380
    %v3771 = vunpack.c.l.b16 %v3381
    %v3772 = vunpack.c.h.b16 %v3381
    %v3773 = vunpack.c.l.b16 %v3382
    %v3774 = vunpack.c.h.b16 %v3382
    %v3775 = vunpack.c.l.b16 %v3383
    %v3776 = vunpack.c.h.b16 %v3383
    %v3777 = vunpack.c.l.b16 %v3384
    %v3778 = vunpack.c.h.b16 %v3384
    %v3779 = vunpack.c.l.b16 %v3385
    %v3780 = vunpack.c.h.b16 %v3385
    %v3781 = vunpack.c.l.b16 %v3386
    %v3782 = vunpack.c.h.b16 %v3386
    %v3783 = vunpack.c.l.b16 %v3387
    %v3784 = vunpack.c.h.b16 %v3387
    %v3785 = vunpack.c.l.b16 %v3388
    %v3786 = vunpack.c.h.b16 %v3388
    %v3787 = vunpack.c.l.b16 %v3389
    %v3788 = vunpack.c.h.b16 %v3389
    %v3789 = vunpack.c.l.b16 %v3390
    %v3790 = vunpack.c.h.b16 %v3390
    %v3791 = vunpack.c.l.b16 %v3391
    %v3792 = vunpack.c.h.b16 %v3391
    %v3793 = vunpack.c.l.b16 %v3392
    %v3794 = vunpack.c.h.b16 %v3392
    %v3795 = vunpack.c.l.b16 %v3393
    %v3796 = vunpack.c.h.b16 %v3393
    %v3797 = vunpack.c.l.b16 %v3394
    %v3798 = vunpack.c.h.b16 %v3394
    %v3799 = vunpack.c.l.b16 %v3395
    %v3800 = vunpack.c.h.b16 %v3395
    %v3801 = vunpack.c.l.b16 %v3396
    %v3802 = vunpack.c.h.b16 %v3396
    %v3803 = vpack.c.b16 %v3551, %v3547
    %v3804 = vpack.c.b16 %v3552, %v3548
    %v3805 = vpack.c.b16 %v3553, %v3549
    %v3806 = vpack.c.b16 %v3554, %v3550
    %v3807 = vpack.c.b16 %v3559, %v3555
    %v3808 = vpack.c.b16 %v3560, %v3556
    %v3809 = vpack.c.b16 %v3561, %v3557
    %v3810 = vpack.c.b16 %v3562, %v3558
    %v3811 = vpack.c.b16 %v3567, %v3563
    %v3812 = vpack.c.b16 %v3568, %v3564
    %v3813 = vpack.c.b16 %v3569, %v3565
    %v3814 = vpack.c.b16 %v3570, %v3566
    %v3815 = vpack.c.b16 %v3575, %v3571
    %v3816 = vpack.c.b16 %v3576, %v3572
    %v3817 = vpack.c.b16 %v3577, %v3573
    %v3818 = vpack.c.b16 %v3578, %v3574
    %v3819 = vpack.c.b16 %v3583, %v3579
    %v3820 = vpack.c.b16 %v3584, %v3580
    %v3821 = vpack.c.b16 %v3585, %v3581
    %v3822 = vpack.c.b16 %v3586, %v3582
    %v3823 = vpack.c.b16 %v3591, %v3587
    %v3824 = vpack.c.b16 %v3592, %v3588
    %v3825 = vpack.c.b16 %v3593, %v3589
    %v3826 = vpack.c.b16 %v3594, %v3590
    %v3827 = vpack.c.b16 %v3599, %v3595
    %v3828 = vpack.c.b16 %v3600, %v3596
    %v3829 = vpack.c.b16 %v3601, %v3597
    %v3830 = vpack.c.b16 %v3602, %v3598
    %v3831 = vpack.c.b16 %v3607, %v3603
    %v3832 = vpack.c.b16 %v3608, %v3604
    %v3833 = vpack.c.b16 %v3609, %v3605
    %v3834 = vpack.c.b16 %v3610, %v3606
    %v3835 = vpack.c.b16 %v3615, %v3611
    %v3836 = vpack.c.b16 %v3616, %v3612
    %v3837 = vpack.c.b16 %v3617, %v3613
    %v3838 = vpack.c.b16 %v3618, %v3614
    %v3839 = vpack.c.b16 %v3623, %v3619
    %v3840 = vpack.c.b16 %v3624, %v3620
    %v3841 = vpack.c.b16 %v3625, %v3621
    %v3842 = vpack.c.b16 %v3626, %v3622
    %v3843 = vpack.c.b16 %v3631, %v3627
    %v3844 = vpack.c.b16 %v3632, %v3628
    %v3845 = vpack.c.b16 %v3633, %v3629
    %v3846 = vpack.c.b16 %v3634, %v3630
    %v3847 = vpack.c.b16 %v3639, %v3635
    %v3848 = vpack.c.b16 %v3640, %v3636
    %v3849 = vpack.c.b16 %v3641, %v3637
    %v3850 = vpack.c.b16 %v3642, %v3638
    %v3851 = vpack.c.b16 %v3647, %v3643
    %v3852 = vpack.c.b16 %v3648, %v3644
    %v3853 = vpack.c.b16 %v3649, %v3645
    %v3854 = vpack.c.b16 %v3650, %v3646
    %v3855 = vpack.c.b16 %v3655, %v3651
    %v3856 = vpack.c.b16 %v3656, %v3652
    %v3857 = vpack.c.b16 %v3657, %v3653
    %v3858 = vpack.c.b16 %v3658, %v3654
    %v3859 = vpack.c.b16 %v3663, %v3659
    %v3860 = vpack.c.b16 %v3664, %v3660
    %v3861 = vpack.c.b16 %v3665, %v3661
    %v3862 = vpack.c.b16 %v3666, %v3662
    %v3863 = vpack.c.b16 %v3671, %v3667
    %v3864 = vpack.c.b16 %v3672, %v3668
    %v3865 = vpack.c.b16 %v3673, %v3669
    %v3866 = vpack.c.b16 %v3674, %v3670
    %v3867 = vpack.c.b16 %v3679, %v3675
    %v3868 = vpack.c.b16 %v3680, %v3676
    %v3869 = vpack.c.b16 %v3681, %v3677
    %v3870 = vpack.c.b16 %v3682, %v3678
    %v3871 = vpack.c.b16 %v3687, %v3683
    %v3872 = vpack.c.b16 %v3688, %v3684
    %v3873 = vpack.c.b16 %v3689, %v3685
    %v3874 = vpack.c.b16 %v3690, %v3686
    %v3875 = vpack.c.b16 %v3695, %v3691
    %v3876 = vpack.c.b16 %v3696, %v3692
    %v3877 = vpack.c.b16 %v3697, %v3693
    %v3878 = vpack.c.b16 %v3698, %v3694
    %v3879 = vpack.c.b16 %v3703, %v3699
    %v3880 = vpack.c.b16 %v3704, %v3700
    %v3881 = vpack.c.b16 %v3705, %v3701
    %v3882 = vpack.c.b16 %v3706, %v3702
    %v3883 = vpack.c.b16 %v3711, %v3707
    %v3884 = vpack.c.b16 %v3712, %v3708
    %v3885 = vpack.c.b16 %v3713, %v3709
    %v3886 = vpack.c.b16 %v3714, %v3710
    %v3887 = vpack.c.b16 %v3719, %v3715
    %v3888 = vpack.c.b16 %v3720, %v3716
    %v3889 = vpack.c.b16 %v3721, %v3717
    %v3890 = vpack.c.b16 %v3722, %v3718
    %v3891 = vpack.c.b16 %v3727, %v3723
    %v3892 = vpack.c.b16 %v3728, %v3724
    %v3893 = vpack.c.b16 %v3729, %v3725
    %v3894 = vpack.c.b16 %v3730, %v3726
    %v3895 = vpack.c.b16 %v3735, %v3731
    %v3896 = vpack.c.b16 %v3736, %v3732
    %v3897 = vpack.c.b16 %v3737, %v3733
    %v3898 = vpack.c.b16 %v3738, %v3734
    %v3899 = vpack.c.b16 %v3743, %v3739
    %v3900 = vpack.c.b16 %v3744, %v3740
    %v3901 = vpack.c.b16 %v3745, %v3741
    %v3902 = vpack.c.b16 %v3746, %v3742
    %v3903 = vpack.c.b16 %v3751, %v3747
    %v3904 = vpack.c.b16 %v3752, %v3748
    %v3905 = vpack.c.b16 %v3753, %v3749
    %v3906 = vpack.c.b16 %v3754, %v3750
    %v3907 = vpack.c.b16 %v3759, %v3755
    %v3908 = vpack.c.b16 %v3760, %v3756
    %v3909 = vpack.c.b16 %v3761, %v3757
    %v3910 = vpack.c.b16 %v3762, %v3758
    %v3911 = vpack.c.b16 %v3767, %v3763
    %v3912 = vpack.c.b16 %v3768, %v3764
    %v3913 = vpack.c.b16 %v3769, %v3765
    %v3914 = vpack.c.b16 %v3770, %v3766
    %v3915 = vpack.c.b16 %v3775, %v3771
    %v3916 = vpack.c.b16 %v3776, %v3772
    %v3917 = vpack.c.b16 %v3777, %v3773
    %v3918 = vpack.c.b16 %v3778, %v3774
    %v3919 = vpack.c.b16 %v3783, %v3779
    %v3920 = vpack.c.b16 %v3784, %v3780
    %v3921 = vpack.c.b16 %v3785, %v3781
    %v3922 = vpack.c.b16 %v3786, %v3782
    %v3923 = vpack.c.b16 %v3791, %v3787
    %v3924 = vpack.c.b16 %v3792, %v3788
    %v3925 = vpack.c.b16 %v3793, %v3789
    %v3926 = vpack.c.b16 %v3794, %v3790
    %v3927 = vpack.c.b16 %v3799, %v3795
    %v3928 = vpack.c.b16 %v3800, %v3796
    %v3929 = vpack.c.b16 %v3801, %v3797
    %v3930 = vpack.c.b16 %v3802, %v3798
    %4059 = vmatprep.subr.bf16.mxu0 %v3804
    %4060 = vmatpush1.bf16.msra.mxu0 %v3803
    %4061 = vmatprep.subr.bf16.mxu0 %v3808
    %4062 = vmatpush1.bf16.msra.mxu0 %v3807
    %4063 = vmatprep.subr.bf16.mxu0 %v3812
    %4064 = vmatpush1.bf16.msra.mxu0 %v3811
    %4065 = vmatprep.subr.bf16.mxu0 %v3816
    %4066 = vmatpush1.bf16.msra.mxu0 %v3815
    %4067 = vmatprep.subr.bf16.mxu0 %v3820
    %4068 = vmatpush1.bf16.msra.mxu0 %v3819
    %4069 = vmatprep.subr.bf16.mxu0 %v3824
    %4070 = vmatpush1.bf16.msra.mxu0 %v3823
    %4071 = vmatprep.subr.bf16.mxu0 %v3828
    %4072 = vmatpush1.bf16.msra.mxu0 %v3827
    %4073 = vmatprep.subr.bf16.mxu0 %v3832
    %4074 = vmatpush1.bf16.msra.mxu0 %v3831
    %4075 = vmatprep.subr.bf16.mxu0 %v3836
    %4076 = vmatpush1.bf16.msra.mxu0 %v3835
    %4077 = vmatprep.subr.bf16.mxu0 %v3840
    %4078 = vmatpush1.bf16.msra.mxu0 %v3839
    %4079 = vmatprep.subr.bf16.mxu0 %v3844
    %4080 = vmatpush1.bf16.msra.mxu0 %v3843
    %4081 = vmatprep.subr.bf16.mxu0 %v3848
    %4082 = vmatpush1.bf16.msra.mxu0 %v3847
    %4083 = vmatprep.subr.bf16.mxu0 %v3852
    %4084 = vmatpush1.bf16.msra.mxu0 %v3851
    %4085 = vmatprep.subr.bf16.mxu0 %v3856
    %4086 = vmatpush1.bf16.msra.mxu0 %v3855
    %4087 = vmatprep.subr.bf16.mxu0 %v3860
    %4088 = vmatpush1.bf16.msra.mxu0 %v3859
    %4089 = vmatprep.subr.bf16.mxu0 %v3864
    %4090 = vmatpush1.bf16.msra.mxu0 %v3863
    %4091 = vmatprep.mubr.bf16.mxu0 %v3266
    %4092 = vmatmul.mubr.bf16.gmra.mrb[0].mxu0 %v3265
    %v4093 = vpop.f32.mrb[0].mxu0
    %v4094 = vadd.f32 %v3402, %v4093
    %v4095 = vpop.f32.mrb[0].mxu0
    %v4096 = vadd.f32 %v3406, %v4095
    %v4097 = vpop.f32.mrb[0].mxu0
    %v4098 = vadd.f32 %v3402, %v4097
    %v4099 = vpop.f32.mrb[0].mxu0
    %v4100 = vadd.f32 %v3406, %v4099
    %4101 = vdwg.mxu0
    %4102 = vmatprep.subr.bf16.mxu0 %v3868
    %4103 = vmatpush1.bf16.msra.mxu0 %v3867
    %4104 = vmatprep.subr.bf16.mxu0 %v3872
    %4105 = vmatpush1.bf16.msra.mxu0 %v3871
    %4106 = vmatprep.subr.bf16.mxu0 %v3876
    %4107 = vmatpush1.bf16.msra.mxu0 %v3875
    %4108 = vmatprep.subr.bf16.mxu0 %v3880
    %4109 = vmatpush1.bf16.msra.mxu0 %v3879
    %4110 = vmatprep.subr.bf16.mxu0 %v3884
    %4111 = vmatpush1.bf16.msra.mxu0 %v3883
    %4112 = vmatprep.subr.bf16.mxu0 %v3888
    %4113 = vmatpush1.bf16.msra.mxu0 %v3887
    %4114 = vmatprep.subr.bf16.mxu0 %v3892
    %4115 = vmatpush1.bf16.msra.mxu0 %v3891
    %4116 = vmatprep.subr.bf16.mxu0 %v3896
    %4117 = vmatpush1.bf16.msra.mxu0 %v3895
    %4118 = vmatprep.subr.bf16.mxu0 %v3900
    %4119 = vmatpush1.bf16.msra.mxu0 %v3899
    %4120 = vmatprep.subr.bf16.mxu0 %v3904
    %4121 = vmatpush1.bf16.msra.mxu0 %v3903
    %4122 = vmatprep.subr.bf16.mxu0 %v3908
    %4123 = vmatpush1.bf16.msra.mxu0 %v3907
    %4124 = vmatprep.subr.bf16.mxu0 %v3912
    %4125 = vmatpush1.bf16.msra.mxu0 %v3911
    %4126 = vmatprep.subr.bf16.mxu0 %v3916
    %4127 = vmatpush1.bf16.msra.mxu0 %v3915
    %4128 = vmatprep.subr.bf16.mxu0 %v3920
    %4129 = vmatpush1.bf16.msra.mxu0 %v3919
    %4130 = vmatprep.subr.bf16.mxu0 %v3924
    %4131 = vmatpush1.bf16.msra.mxu0 %v3923
    %4132 = vmatprep.subr.bf16.mxu0 %v3928
    %4133 = vmatpush1.bf16.msra.mxu0 %v3927
    %4134 = vmatprep.mubr.bf16.mxu0 %v3268
    %4135 = vmatmul.mubr.bf16.gmra.mrb[0].mxu0 %v3267
    %v4136 = vpop.f32.mrb[0].mxu0
    %v4137 = vadd.f32 %v4094, %v4136
    %v4138 = vpop.f32.mrb[0].mxu0
    %v4139 = vadd.f32 %v4096, %v4138
    %v4140 = vpop.f32.mrb[0].mxu0
    %v4141 = vadd.f32 %v4098, %v4140
    %v4142 = vpop.f32.mrb[0].mxu0
    %v4143 = vadd.f32 %v4100, %v4142
    %4144 = vdwg.mxu0
    %4145 = vmatprep.subr.bf16.mxu0 %v3806
    %4146 = vmatpush1.bf16.msra.mxu0 %v3805
    %4147 = vmatprep.subr.bf16.mxu0 %v3810
    %4148 = vmatpush1.bf16.msra.mxu0 %v3809
    %4149 = vmatprep.subr.bf16.mxu0 %v3814
    %4150 = vmatpush1.bf16.msra.mxu0 %v3813
    %4151 = vmatprep.subr.bf16.mxu0 %v3818
    %4152 = vmatpush1.bf16.msra.mxu0 %v3817
    %4153 = vmatprep.subr.bf16.mxu0 %v3822
    %4154 = vmatpush1.bf16.msra.mxu0 %v3821
    %4155 = vmatprep.subr.bf16.mxu0 %v3826
    %4156 = vmatpush1.bf16.msra.mxu0 %v3825
    %4157 = vmatprep.subr.bf16.mxu0 %v3830
    %4158 = vmatpush1.bf16.msra.mxu0 %v3829
    %4159 = vmatprep.subr.bf16.mxu0 %v3834
    %4160 = vmatpush1.bf16.msra.mxu0 %v3833
    %4161 = vmatprep.subr.bf16.mxu0 %v3838
    %4162 = vmatpush1.bf16.msra.mxu0 %v3837
    %4163 = vmatprep.subr.bf16.mxu0 %v3842
    %4164 = vmatpush1.bf16.msra.mxu0 %v3841
    %4165 = vmatprep.subr.bf16.mxu0 %v3846
    %4166 = vmatpush1.bf16.msra.mxu0 %v3845
    %4167 = vmatprep.subr.bf16.mxu0 %v3850
    %4168 = vmatpush1.bf16.msra.mxu0 %v3849
    %4169 = vmatprep.subr.bf16.mxu0 %v3854
    %4170 = vmatpush1.bf16.msra.mxu0 %v3853
    %4171 = vmatprep.subr.bf16.mxu0 %v3858
    %4172 = vmatpush1.bf16.msra.mxu0 %v3857
    %4173 = vmatprep.subr.bf16.mxu0 %v3862
    %4174 = vmatpush1.bf16.msra.mxu0 %v3861
    %4175 = vmatprep.subr.bf16.mxu0 %v3866
    %4176 = vmatpush1.bf16.msra.mxu0 %v3865
    %4177 = vmatprep.mubr.bf16.mxu0 %v3266
    %4178 = vmatmul.mubr.bf16.gmra.mrb[0].mxu0 %v3265
    %v4179 = vpop.f32.mrb[0].mxu0
    %v4180 = vadd.f32 %v3410, %v4179
    %v4181 = vpop.f32.mrb[0].mxu0
    %v4182 = vadd.f32 %v3414, %v4181
    %v4183 = vpop.f32.mrb[0].mxu0
    %v4184 = vadd.f32 %v3410, %v4183
    %v4185 = vpop.f32.mrb[0].mxu0
    %v4186 = vadd.f32 %v3414, %v4185
    %4187 = vdwg.mxu0
    %4188 = vmatprep.subr.bf16.mxu0 %v3870
    %4189 = vmatpush1.bf16.msra.mxu0 %v3869
    %4190 = vmatprep.subr.bf16.mxu0 %v3874
    %4191 = vmatpush1.bf16.msra.mxu0 %v3873
    %4192 = vmatprep.subr.bf16.mxu0 %v3878
    %4193 = vmatpush1.bf16.msra.mxu0 %v3877
    %4194 = vmatprep.subr.bf16.mxu0 %v3882
    %4195 = vmatpush1.bf16.msra.mxu0 %v3881
    %4196 = vmatprep.subr.bf16.mxu0 %v3886
    %4197 = vmatpush1.bf16.msra.mxu0 %v3885
    %4198 = vmatprep.subr.bf16.mxu0 %v3890
    %4199 = vmatpush1.bf16.msra.mxu0 %v3889
    %4200 = vmatprep.subr.bf16.mxu0 %v3894
    %4201 = vmatpush1.bf16.msra.mxu0 %v3893
    %4202 = vmatprep.subr.bf16.mxu0 %v3898
    %4203 = vmatpush1.bf16.msra.mxu0 %v3897
    %4204 = vmatprep.subr.bf16.mxu0 %v3902
    %4205 = vmatpush1.bf16.msra.mxu0 %v3901
    %4206 = vmatprep.subr.bf16.mxu0 %v3906
    %4207 = vmatpush1.bf16.msra.mxu0 %v3905
    %4208 = vmatprep.subr.bf16.mxu0 %v3910
    %4209 = vmatpush1.bf16.msra.mxu0 %v3909
    %4210 = vmatprep.subr.bf16.mxu0 %v3914
    %4211 = vmatpush1.bf16.msra.mxu0 %v3913
    %4212 = vmatprep.subr.bf16.mxu0 %v3918
    %4213 = vmatpush1.bf16.msra.mxu0 %v3917
    %4214 = vmatprep.subr.bf16.mxu0 %v3922
    %4215 = vmatpush1.bf16.msra.mxu0 %v3921
    %4216 = vmatprep.subr.bf16.mxu0 %v3926
    %4217 = vmatpush1.bf16.msra.mxu0 %v3925
    %4218 = vmatprep.subr.bf16.mxu0 %v3930
    %4219 = vmatpush1.bf16.msra.mxu0 %v3929
    %4220 = vmatprep.mubr.bf16.mxu0 %v3268
    %4221 = vmatmul.mubr.bf16.gmra.mrb[0].mxu0 %v3267
    %v4222 = vpop.f32.mrb[0].mxu0
    %v4223 = vadd.f32 %v4180, %v4222
    %v4224 = vpop.f32.mrb[0].mxu0
    %v4225 = vadd.f32 %v4182, %v4224
    %v4226 = vpop.f32.mrb[0].mxu0
    %v4227 = vadd.f32 %v4184, %v4226
    %v4228 = vpop.f32.mrb[0].mxu0
    %v4229 = vadd.f32 %v4186, %v4228
    %4230 = vdwg.mxu0
    %v4231 = vmax.f32 %v4137, 0.0
    %v4232 = vmax.f32 %v4139, 0.0
    %v4233 = vmax.f32 %v4223, 0.0
    %v4234 = vmax.f32 %v4225, 0.0
    %v4235 = vmax.f32 %v4141, 0.0
    %v4236 = vmax.f32 %v4143, 0.0
    %v4237 = vmax.f32 %v4227, 0.0
    %v4238 = vmax.f32 %v4229, 0.0
    %v4239 = vpack.c.bf16 %v4235, %v4231
    %v4240 = vpack.c.bf16 %v4236, %v4232
    %v4241 = vpack.c.bf16 %v4237, %v4233
    %v4242 = vpack.c.bf16 %v4238, %v4234
    %v4243 = vld [vmem:[#allocation9] sm:$0xff]
    %v4244 = vld [vmem:[#allocation9 + $0x8] sm:$0xff]
    %v4245 = vld [vmem:[#allocation9 + $0x10] sm:$0xff]
    %v4246 = vld [vmem:[#allocation9 + $0x18] sm:$0xff]
    %v4247 = vld [vmem:[#allocation9 + $0x20] sm:$0xff]
    %v4248 = vld [vmem:[#allocation9 + $0x28] sm:$0xff]
    %v4249 = vld [vmem:[#allocation9 + $0x30] sm:$0xff]
    %v4250 = vld [vmem:[#allocation9 + $0x38] sm:$0xff]
    %v4251 = vld [vmem:[#allocation9 + $0x40] sm:$0xff]
    %v4252 = vld [vmem:[#allocation9 + $0x48] sm:$0xff]
    %v4253 = vld [vmem:[#allocation9 + $0x50] sm:$0xff]
    %v4254 = vld [vmem:[#allocation9 + $0x58] sm:$0xff]
    %v4255 = vld [vmem:[#allocation9 + $0x60] sm:$0xff]
    %v4256 = vld [vmem:[#allocation9 + $0x68] sm:$0xff]
    %v4257 = vld [vmem:[#allocation9 + $0x70] sm:$0xff]
    %v4258 = vld [vmem:[#allocation9 + $0x78] sm:$0xff]
    %v4259 = vld [vmem:[#allocation9 + $0x80] sm:$0xff]
    %v4260 = vld [vmem:[#allocation9 + $0x88] sm:$0xff]
    %v4261 = vld [vmem:[#allocation9 + $0x90] sm:$0xff]
    %v4262 = vld [vmem:[#allocation9 + $0x98] sm:$0xff]
    %v4263 = vld [vmem:[#allocation9 + $0xa0] sm:$0xff]
    %v4264 = vld [vmem:[#allocation9 + $0xa8] sm:$0xff]
    %v4265 = vld [vmem:[#allocation9 + $0xb0] sm:$0xff]
    %v4266 = vld [vmem:[#allocation9 + $0xb8] sm:$0xff]
    %v4267 = vld [vmem:[#allocation9 + $0xc0] sm:$0xff]
    %v4268 = vld [vmem:[#allocation9 + $0xc8] sm:$0xff]
    %v4269 = vld [vmem:[#allocation9 + $0xd0] sm:$0xff]
    %v4270 = vld [vmem:[#allocation9 + $0xd8] sm:$0xff]
    %v4271 = vld [vmem:[#allocation9 + $0xe0] sm:$0xff]
    %v4272 = vld [vmem:[#allocation9 + $0xe8] sm:$0xff]
    %v4273 = vld [vmem:[#allocation9 + $0xf0] sm:$0xff]
    %v4274 = vld [vmem:[#allocation9 + $0xf8] sm:$0xff]
    %v4275 = vld [vmem:[#allocation9 + $0x100] sm:$0xff]
    %v4276 = vld [vmem:[#allocation9 + $0x108] sm:$0xff]
    %v4277 = vld [vmem:[#allocation9 + $0x110] sm:$0xff]
    %v4278 = vld [vmem:[#allocation9 + $0x118] sm:$0xff]
    %v4279 = vld [vmem:[#allocation9 + $0x120] sm:$0xff]
    %v4280 = vld [vmem:[#allocation9 + $0x128] sm:$0xff]
    %v4281 = vld [vmem:[#allocation9 + $0x130] sm:$0xff]
    %v4282 = vld [vmem:[#allocation9 + $0x138] sm:$0xff]
    %v4283 = vld [vmem:[#allocation9 + $0x140] sm:$0xff]
    %v4284 = vld [vmem:[#allocation9 + $0x148] sm:$0xff]
    %v4285 = vld [vmem:[#allocation9 + $0x150] sm:$0xff]
    %v4286 = vld [vmem:[#allocation9 + $0x158] sm:$0xff]
    %v4287 = vld [vmem:[#allocation9 + $0x160] sm:$0xff]
    %v4288 = vld [vmem:[#allocation9 + $0x168] sm:$0xff]
    %v4289 = vld [vmem:[#allocation9 + $0x170] sm:$0xff]
    %v4290 = vld [vmem:[#allocation9 + $0x178] sm:$0xff]
    %v4291 = vld [vmem:[#allocation9 + $0x180] sm:$0xff]
    %v4292 = vld [vmem:[#allocation9 + $0x188] sm:$0xff]
    %v4293 = vld [vmem:[#allocation9 + $0x190] sm:$0xff]
    %v4294 = vld [vmem:[#allocation9 + $0x198] sm:$0xff]
    %v4295 = vld [vmem:[#allocation9 + $0x1a0] sm:$0xff]
    %v4296 = vld [vmem:[#allocation9 + $0x1a8] sm:$0xff]
    %v4297 = vld [vmem:[#allocation9 + $0x1b0] sm:$0xff]
    %v4298 = vld [vmem:[#allocation9 + $0x1b8] sm:$0xff]
    %v4299 = vld [vmem:[#allocation9 + $0x1c0] sm:$0xff]
    %v4300 = vld [vmem:[#allocation9 + $0x1c8] sm:$0xff]
    %v4301 = vld [vmem:[#allocation9 + $0x1d0] sm:$0xff]
    %v4302 = vld [vmem:[#allocation9 + $0x1d8] sm:$0xff]
    %v4303 = vld [vmem:[#allocation9 + $0x1e0] sm:$0xff]
    %v4304 = vld [vmem:[#allocation9 + $0x1e8] sm:$0xff]
    %v4305 = vld [vmem:[#allocation9 + $0x1f0] sm:$0xff]
    %v4306 = vld [vmem:[#allocation9 + $0x1f8] sm:$0xff]
    %v4307 = vld [vmem:[#allocation9 + $0x200] sm:$0xff]
    %v4308 = vld [vmem:[#allocation9 + $0x208] sm:$0xff]
    %v4309 = vld [vmem:[#allocation9 + $0x210] sm:$0xff]
    %v4310 = vld [vmem:[#allocation9 + $0x218] sm:$0xff]
    %v4311 = vld [vmem:[#allocation9 + $0x220] sm:$0xff]
    %v4312 = vld [vmem:[#allocation9 + $0x228] sm:$0xff]
    %v4313 = vld [vmem:[#allocation9 + $0x230] sm:$0xff]
    %v4314 = vld [vmem:[#allocation9 + $0x238] sm:$0xff]
    %v4315 = vld [vmem:[#allocation9 + $0x240] sm:$0xff]
    %v4316 = vld [vmem:[#allocation9 + $0x248] sm:$0xff]
    %v4317 = vld [vmem:[#allocation9 + $0x250] sm:$0xff]
    %v4318 = vld [vmem:[#allocation9 + $0x258] sm:$0xff]
    %v4319 = vld [vmem:[#allocation9 + $0x260] sm:$0xff]
    %v4320 = vld [vmem:[#allocation9 + $0x268] sm:$0xff]
    %v4321 = vld [vmem:[#allocation9 + $0x270] sm:$0xff]
    %v4322 = vld [vmem:[#allocation9 + $0x278] sm:$0xff]
    %v4323 = vld [vmem:[#allocation9 + $0x280] sm:$0xff]
    %v4324 = vld [vmem:[#allocation9 + $0x288] sm:$0xff]
    %v4325 = vld [vmem:[#allocation9 + $0x290] sm:$0xff]
    %v4326 = vld [vmem:[#allocation9 + $0x298] sm:$0xff]
    %v4327 = vld [vmem:[#allocation9 + $0x2a0] sm:$0xff]
    %v4328 = vld [vmem:[#allocation9 + $0x2a8] sm:$0xff]
    %v4329 = vld [vmem:[#allocation9 + $0x2b0] sm:$0xff]
    %v4330 = vld [vmem:[#allocation9 + $0x2b8] sm:$0xff]
    %v4331 = vld [vmem:[#allocation9 + $0x2c0] sm:$0xff]
    %v4332 = vld [vmem:[#allocation9 + $0x2c8] sm:$0xff]
    %v4333 = vld [vmem:[#allocation9 + $0x2d0] sm:$0xff]
    %v4334 = vld [vmem:[#allocation9 + $0x2d8] sm:$0xff]
    %v4335 = vld [vmem:[#allocation9 + $0x2e0] sm:$0xff]
    %v4336 = vld [vmem:[#allocation9 + $0x2e8] sm:$0xff]
    %v4337 = vld [vmem:[#allocation9 + $0x2f0] sm:$0xff]
    %v4338 = vld [vmem:[#allocation9 + $0x2f8] sm:$0xff]
    %v4339 = vld [vmem:[#allocation9 + $0x300] sm:$0xff]
    %v4340 = vld [vmem:[#allocation9 + $0x308] sm:$0xff]
    %v4341 = vld [vmem:[#allocation9 + $0x310] sm:$0xff]
    %v4342 = vld [vmem:[#allocation9 + $0x318] sm:$0xff]
    %v4343 = vld [vmem:[#allocation9 + $0x320] sm:$0xff]
    %v4344 = vld [vmem:[#allocation9 + $0x328] sm:$0xff]
    %v4345 = vld [vmem:[#allocation9 + $0x330] sm:$0xff]
    %v4346 = vld [vmem:[#allocation9 + $0x338] sm:$0xff]
    %v4347 = vld [vmem:[#allocation9 + $0x340] sm:$0xff]
    %v4348 = vld [vmem:[#allocation9 + $0x348] sm:$0xff]
    %v4349 = vld [vmem:[#allocation9 + $0x350] sm:$0xff]
    %v4350 = vld [vmem:[#allocation9 + $0x358] sm:$0xff]
    %v4351 = vld [vmem:[#allocation9 + $0x360] sm:$0xff]
    %v4352 = vld [vmem:[#allocation9 + $0x368] sm:$0xff]
    %v4353 = vld [vmem:[#allocation9 + $0x370] sm:$0xff]
    %v4354 = vld [vmem:[#allocation9 + $0x378] sm:$0xff]
    %v4355 = vld [vmem:[#allocation9 + $0x380] sm:$0xff]
    %v4356 = vld [vmem:[#allocation9 + $0x388] sm:$0xff]
    %v4357 = vld [vmem:[#allocation9 + $0x390] sm:$0xff]
    %v4358 = vld [vmem:[#allocation9 + $0x398] sm:$0xff]
    %v4359 = vld [vmem:[#allocation9 + $0x3a0] sm:$0xff]
    %v4360 = vld [vmem:[#allocation9 + $0x3a8] sm:$0xff]
    %v4361 = vld [vmem:[#allocation9 + $0x3b0] sm:$0xff]
    %v4362 = vld [vmem:[#allocation9 + $0x3b8] sm:$0xff]
    %v4363 = vld [vmem:[#allocation9 + $0x3c0] sm:$0xff]
    %v4364 = vld [vmem:[#allocation9 + $0x3c8] sm:$0xff]
    %v4365 = vld [vmem:[#allocation9 + $0x3d0] sm:$0xff]
    %v4366 = vld [vmem:[#allocation9 + $0x3d8] sm:$0xff]
    %v4367 = vld [vmem:[#allocation9 + $0x3e0] sm:$0xff]
    %v4368 = vld [vmem:[#allocation9 + $0x3e8] sm:$0xff]
    %v4369 = vld [vmem:[#allocation9 + $0x3f0] sm:$0xff]
    %v4370 = vld [vmem:[#allocation9 + $0x3f8] sm:$0xff]
    %v4371 = vld [vmem:[#allocation10] sm:$0xf]
    %v4373 = vlaneseq
    %v4374 = vshrl.u32 %v4373, 7
    %v4375 = vsub.s32 0, %v4374
    %v4376 = vrot.slane %v4371, %v4375
    %v4377 = vlaneseq
    %v4378 = vshrl.u32 %v4377, 7
    %v4379 = vsub.s32 1, %v4378
    %v4380 = vrot.slane %v4371, %v4379
    %v4381 = vlaneseq
    %v4382 = vshrl.u32 %v4381, 7
    %v4383 = vsub.s32 2, %v4382
    %v4384 = vrot.slane %v4371, %v4383
    %v4385 = vlaneseq
    %v4386 = vshrl.u32 %v4385, 7
    %v4387 = vsub.s32 3, %v4386
    %v4388 = vrot.slane %v4371, %v4387
    %v4521 = vunpack.c.l.b16 %v4243
    %v4522 = vunpack.c.h.b16 %v4243
    %v4523 = vunpack.c.l.b16 %v4244
    %v4524 = vunpack.c.h.b16 %v4244
    %v4525 = vunpack.c.l.b16 %v4245
    %v4526 = vunpack.c.h.b16 %v4245
    %v4527 = vunpack.c.l.b16 %v4246
    %v4528 = vunpack.c.h.b16 %v4246
    %v4529 = vunpack.c.l.b16 %v4247
    %v4530 = vunpack.c.h.b16 %v4247
    %v4531 = vunpack.c.l.b16 %v4248
    %v4532 = vunpack.c.h.b16 %v4248
    %v4533 = vunpack.c.l.b16 %v4249
    %v4534 = vunpack.c.h.b16 %v4249
    %v4535 = vunpack.c.l.b16 %v4250
    %v4536 = vunpack.c.h.b16 %v4250
    %v4537 = vunpack.c.l.b16 %v4251
    %v4538 = vunpack.c.h.b16 %v4251
    %v4539 = vunpack.c.l.b16 %v4252
    %v4540 = vunpack.c.h.b16 %v4252
    %v4541 = vunpack.c.l.b16 %v4253
    %v4542 = vunpack.c.h.b16 %v4253
    %v4543 = vunpack.c.l.b16 %v4254
    %v4544 = vunpack.c.h.b16 %v4254
    %v4545 = vunpack.c.l.b16 %v4255
    %v4546 = vunpack.c.h.b16 %v4255
    %v4547 = vunpack.c.l.b16 %v4256
    %v4548 = vunpack.c.h.b16 %v4256
    %v4549 = vunpack.c.l.b16 %v4257
    %v4550 = vunpack.c.h.b16 %v4257
    %v4551 = vunpack.c.l.b16 %v4258
    %v4552 = vunpack.c.h.b16 %v4258
    %v4553 = vunpack.c.l.b16 %v4259
    %v4554 = vunpack.c.h.b16 %v4259
    %v4555 = vunpack.c.l.b16 %v4260
    %v4556 = vunpack.c.h.b16 %v4260
    %v4557 = vunpack.c.l.b16 %v4261
    %v4558 = vunpack.c.h.b16 %v4261
    %v4559 = vunpack.c.l.b16 %v4262
    %v4560 = vunpack.c.h.b16 %v4262
    %v4561 = vunpack.c.l.b16 %v4263
    %v4562 = vunpack.c.h.b16 %v4263
    %v4563 = vunpack.c.l.b16 %v4264
    %v4564 = vunpack.c.h.b16 %v4264
    %v4565 = vunpack.c.l.b16 %v4265
    %v4566 = vunpack.c.h.b16 %v4265
    %v4567 = vunpack.c.l.b16 %v4266
    %v4568 = vunpack.c.h.b16 %v4266
    %v4569 = vunpack.c.l.b16 %v4267
    %v4570 = vunpack.c.h.b16 %v4267
    %v4571 = vunpack.c.l.b16 %v4268
    %v4572 = vunpack.c.h.b16 %v4268
    %v4573 = vunpack.c.l.b16 %v4269
    %v4574 = vunpack.c.h.b16 %v4269
    %v4575 = vunpack.c.l.b16 %v4270
    %v4576 = vunpack.c.h.b16 %v4270
    %v4577 = vunpack.c.l.b16 %v4271
    %v4578 = vunpack.c.h.b16 %v4271
    %v4579 = vunpack.c.l.b16 %v4272
    %v4580 = vunpack.c.h.b16 %v4272
    %v4581 = vunpack.c.l.b16 %v4273
    %v4582 = vunpack.c.h.b16 %v4273
    %v4583 = vunpack.c.l.b16 %v4274
    %v4584 = vunpack.c.h.b16 %v4274
    %v4585 = vunpack.c.l.b16 %v4275
    %v4586 = vunpack.c.h.b16 %v4275
    %v4587 = vunpack.c.l.b16 %v4276
    %v4588 = vunpack.c.h.b16 %v4276
    %v4589 = vunpack.c.l.b16 %v4277
    %v4590 = vunpack.c.h.b16 %v4277
    %v4591 = vunpack.c.l.b16 %v4278
    %v4592 = vunpack.c.h.b16 %v4278
    %v4593 = vunpack.c.l.b16 %v4279
    %v4594 = vunpack.c.h.b16 %v4279
    %v4595 = vunpack.c.l.b16 %v4280
    %v4596 = vunpack.c.h.b16 %v4280
    %v4597 = vunpack.c.l.b16 %v4281
    %v4598 = vunpack.c.h.b16 %v4281
    %v4599 = vunpack.c.l.b16 %v4282
    %v4600 = vunpack.c.h.b16 %v4282
    %v4601 = vunpack.c.l.b16 %v4283
    %v4602 = vunpack.c.h.b16 %v4283
    %v4603 = vunpack.c.l.b16 %v4284
    %v4604 = vunpack.c.h.b16 %v4284
    %v4605 = vunpack.c.l.b16 %v4285
    %v4606 = vunpack.c.h.b16 %v4285
    %v4607 = vunpack.c.l.b16 %v4286
    %v4608 = vunpack.c.h.b16 %v4286
    %v4609 = vunpack.c.l.b16 %v4287
    %v4610 = vunpack.c.h.b16 %v4287
    %v4611 = vunpack.c.l.b16 %v4288
    %v4612 = vunpack.c.h.b16 %v4288
    %v4613 = vunpack.c.l.b16 %v4289
    %v4614 = vunpack.c.h.b16 %v4289
    %v4615 = vunpack.c.l.b16 %v4290
    %v4616 = vunpack.c.h.b16 %v4290
    %v4617 = vunpack.c.l.b16 %v4291
    %v4618 = vunpack.c.h.b16 %v4291
    %v4619 = vunpack.c.l.b16 %v4292
    %v4620 = vunpack.c.h.b16 %v4292
    %v4621 = vunpack.c.l.b16 %v4293
    %v4622 = vunpack.c.h.b16 %v4293
    %v4623 = vunpack.c.l.b16 %v4294
    %v4624 = vunpack.c.h.b16 %v4294
    %v4625 = vunpack.c.l.b16 %v4295
    %v4626 = vunpack.c.h.b16 %v4295
    %v4627 = vunpack.c.l.b16 %v4296
    %v4628 = vunpack.c.h.b16 %v4296
    %v4629 = vunpack.c.l.b16 %v4297
    %v4630 = vunpack.c.h.b16 %v4297
    %v4631 = vunpack.c.l.b16 %v4298
    %v4632 = vunpack.c.h.b16 %v4298
    %v4633 = vunpack.c.l.b16 %v4299
    %v4634 = vunpack.c.h.b16 %v4299
    %v4635 = vunpack.c.l.b16 %v4300
    %v4636 = vunpack.c.h.b16 %v4300
    %v4637 = vunpack.c.l.b16 %v4301
    %v4638 = vunpack.c.h.b16 %v4301
    %v4639 = vunpack.c.l.b16 %v4302
    %v4640 = vunpack.c.h.b16 %v4302
    %v4641 = vunpack.c.l.b16 %v4303
    %v4642 = vunpack.c.h.b16 %v4303
    %v4643 = vunpack.c.l.b16 %v4304
    %v4644 = vunpack.c.h.b16 %v4304
    %v4645 = vunpack.c.l.b16 %v4305
    %v4646 = vunpack.c.h.b16 %v4305
    %v4647 = vunpack.c.l.b16 %v4306
    %v4648 = vunpack.c.h.b16 %v4306
    %v4649 = vunpack.c.l.b16 %v4307
    %v4650 = vunpack.c.h.b16 %v4307
    %v4651 = vunpack.c.l.b16 %v4308
    %v4652 = vunpack.c.h.b16 %v4308
    %v4653 = vunpack.c.l.b16 %v4309
    %v4654 = vunpack.c.h.b16 %v4309
    %v4655 = vunpack.c.l.b16 %v4310
    %v4656 = vunpack.c.h.b16 %v4310
    %v4657 = vunpack.c.l.b16 %v4311
    %v4658 = vunpack.c.h.b16 %v4311
    %v4659 = vunpack.c.l.b16 %v4312
    %v4660 = vunpack.c.h.b16 %v4312
    %v4661 = vunpack.c.l.b16 %v4313
    %v4662 = vunpack.c.h.b16 %v4313
    %v4663 = vunpack.c.l.b16 %v4314
    %v4664 = vunpack.c.h.b16 %v4314
    %v4665 = vunpack.c.l.b16 %v4315
    %v4666 = vunpack.c.h.b16 %v4315
    %v4667 = vunpack.c.l.b16 %v4316
    %v4668 = vunpack.c.h.b16 %v4316
    %v4669 = vunpack.c.l.b16 %v4317
    %v4670 = vunpack.c.h.b16 %v4317
    %v4671 = vunpack.c.l.b16 %v4318
    %v4672 = vunpack.c.h.b16 %v4318
    %v4673 = vunpack.c.l.b16 %v4319
    %v4674 = vunpack.c.h.b16 %v4319
    %v4675 = vunpack.c.l.b16 %v4320
    %v4676 = vunpack.c.h.b16 %v4320
    %v4677 = vunpack.c.l.b16 %v4321
    %v4678 = vunpack.c.h.b16 %v4321
    %v4679 = vunpack.c.l.b16 %v4322
    %v4680 = vunpack.c.h.b16 %v4322
    %v4681 = vunpack.c.l.b16 %v4323
    %v4682 = vunpack.c.h.b16 %v4323
    %v4683 = vunpack.c.l.b16 %v4324
    %v4684 = vunpack.c.h.b16 %v4324
    %v4685 = vunpack.c.l.b16 %v4325
    %v4686 = vunpack.c.h.b16 %v4325
    %v4687 = vunpack.c.l.b16 %v4326
    %v4688 = vunpack.c.h.b16 %v4326
    %v4689 = vunpack.c.l.b16 %v4327
    %v4690 = vunpack.c.h.b16 %v4327
    %v4691 = vunpack.c.l.b16 %v4328
    %v4692 = vunpack.c.h.b16 %v4328
    %v4693 = vunpack.c.l.b16 %v4329
    %v4694 = vunpack.c.h.b16 %v4329
    %v4695 = vunpack.c.l.b16 %v4330
    %v4696 = vunpack.c.h.b16 %v4330
    %v4697 = vunpack.c.l.b16 %v4331
    %v4698 = vunpack.c.h.b16 %v4331
    %v4699 = vunpack.c.l.b16 %v4332
    %v4700 = vunpack.c.h.b16 %v4332
    %v4701 = vunpack.c.l.b16 %v4333
    %v4702 = vunpack.c.h.b16 %v4333
    %v4703 = vunpack.c.l.b16 %v4334
    %v4704 = vunpack.c.h.b16 %v4334
    %v4705 = vunpack.c.l.b16 %v4335
    %v4706 = vunpack.c.h.b16 %v4335
    %v4707 = vunpack.c.l.b16 %v4336
    %v4708 = vunpack.c.h.b16 %v4336
    %v4709 = vunpack.c.l.b16 %v4337
    %v4710 = vunpack.c.h.b16 %v4337
    %v4711 = vunpack.c.l.b16 %v4338
    %v4712 = vunpack.c.h.b16 %v4338
    %v4713 = vunpack.c.l.b16 %v4339
    %v4714 = vunpack.c.h.b16 %v4339
    %v4715 = vunpack.c.l.b16 %v4340
    %v4716 = vunpack.c.h.b16 %v4340
    %v4717 = vunpack.c.l.b16 %v4341
    %v4718 = vunpack.c.h.b16 %v4341
    %v4719 = vunpack.c.l.b16 %v4342
    %v4720 = vunpack.c.h.b16 %v4342
    %v4721 = vunpack.c.l.b16 %v4343
    %v4722 = vunpack.c.h.b16 %v4343
    %v4723 = vunpack.c.l.b16 %v4344
    %v4724 = vunpack.c.h.b16 %v4344
    %v4725 = vunpack.c.l.b16 %v4345
    %v4726 = vunpack.c.h.b16 %v4345
    %v4727 = vunpack.c.l.b16 %v4346
    %v4728 = vunpack.c.h.b16 %v4346
    %v4729 = vunpack.c.l.b16 %v4347
    %v4730 = vunpack.c.h.b16 %v4347
    %v4731 = vunpack.c.l.b16 %v4348
    %v4732 = vunpack.c.h.b16 %v4348
    %v4733 = vunpack.c.l.b16 %v4349
    %v4734 = vunpack.c.h.b16 %v4349
    %v4735 = vunpack.c.l.b16 %v4350
    %v4736 = vunpack.c.h.b16 %v4350
    %v4737 = vunpack.c.l.b16 %v4351
    %v4738 = vunpack.c.h.b16 %v4351
    %v4739 = vunpack.c.l.b16 %v4352
    %v4740 = vunpack.c.h.b16 %v4352
    %v4741 = vunpack.c.l.b16 %v4353
    %v4742 = vunpack.c.h.b16 %v4353
    %v4743 = vunpack.c.l.b16 %v4354
    %v4744 = vunpack.c.h.b16 %v4354
    %v4745 = vunpack.c.l.b16 %v4355
    %v4746 = vunpack.c.h.b16 %v4355
    %v4747 = vunpack.c.l.b16 %v4356
    %v4748 = vunpack.c.h.b16 %v4356
    %v4749 = vunpack.c.l.b16 %v4357
    %v4750 = vunpack.c.h.b16 %v4357
    %v4751 = vunpack.c.l.b16 %v4358
    %v4752 = vunpack.c.h.b16 %v4358
    %v4753 = vunpack.c.l.b16 %v4359
    %v4754 = vunpack.c.h.b16 %v4359
    %v4755 = vunpack.c.l.b16 %v4360
    %v4756 = vunpack.c.h.b16 %v4360
    %v4757 = vunpack.c.l.b16 %v4361
    %v4758 = vunpack.c.h.b16 %v4361
    %v4759 = vunpack.c.l.b16 %v4362
    %v4760 = vunpack.c.h.b16 %v4362
    %v4761 = vunpack.c.l.b16 %v4363
    %v4762 = vunpack.c.h.b16 %v4363
    %v4763 = vunpack.c.l.b16 %v4364
    %v4764 = vunpack.c.h.b16 %v4364
    %v4765 = vunpack.c.l.b16 %v4365
    %v4766 = vunpack.c.h.b16 %v4365
    %v4767 = vunpack.c.l.b16 %v4366
    %v4768 = vunpack.c.h.b16 %v4366
    %v4769 = vunpack.c.l.b16 %v4367
    %v4770 = vunpack.c.h.b16 %v4367
    %v4771 = vunpack.c.l.b16 %v4368
    %v4772 = vunpack.c.h.b16 %v4368
    %v4773 = vunpack.c.l.b16 %v4369
    %v4774 = vunpack.c.h.b16 %v4369
    %v4775 = vunpack.c.l.b16 %v4370
    %v4776 = vunpack.c.h.b16 %v4370
    %v4777 = vpack.c.b16 %v4525, %v4521
    %v4778 = vpack.c.b16 %v4526, %v4522
    %v4779 = vpack.c.b16 %v4527, %v4523
    %v4780 = vpack.c.b16 %v4528, %v4524
    %v4781 = vpack.c.b16 %v4533, %v4529
    %v4782 = vpack.c.b16 %v4534, %v4530
    %v4783 = vpack.c.b16 %v4535, %v4531
    %v4784 = vpack.c.b16 %v4536, %v4532
    %v4785 = vpack.c.b16 %v4541, %v4537
    %v4786 = vpack.c.b16 %v4542, %v4538
    %v4787 = vpack.c.b16 %v4543, %v4539
    %v4788 = vpack.c.b16 %v4544, %v4540
    %v4789 = vpack.c.b16 %v4549, %v4545
    %v4790 = vpack.c.b16 %v4550, %v4546
    %v4791 = vpack.c.b16 %v4551, %v4547
    %v4792 = vpack.c.b16 %v4552, %v4548
    %v4793 = vpack.c.b16 %v4557, %v4553
    %v4794 = vpack.c.b16 %v4558, %v4554
    %v4795 = vpack.c.b16 %v4559, %v4555
    %v4796 = vpack.c.b16 %v4560, %v4556
    %v4797 = vpack.c.b16 %v4565, %v4561
    %v4798 = vpack.c.b16 %v4566, %v4562
    %v4799 = vpack.c.b16 %v4567, %v4563
    %v4800 = vpack.c.b16 %v4568, %v4564
    %v4801 = vpack.c.b16 %v4573, %v4569
    %v4802 = vpack.c.b16 %v4574, %v4570
    %v4803 = vpack.c.b16 %v4575, %v4571
    %v4804 = vpack.c.b16 %v4576, %v4572
    %v4805 = vpack.c.b16 %v4581, %v4577
    %v4806 = vpack.c.b16 %v4582, %v4578
    %v4807 = vpack.c.b16 %v4583, %v4579
    %v4808 = vpack.c.b16 %v4584, %v4580
    %v4809 = vpack.c.b16 %v4589, %v4585
    %v4810 = vpack.c.b16 %v4590, %v4586
    %v4811 = vpack.c.b16 %v4591, %v4587
    %v4812 = vpack.c.b16 %v4592, %v4588
    %v4813 = vpack.c.b16 %v4597, %v4593
    %v4814 = vpack.c.b16 %v4598, %v4594
    %v4815 = vpack.c.b16 %v4599, %v4595
    %v4816 = vpack.c.b16 %v4600, %v4596
    %v4817 = vpack.c.b16 %v4605, %v4601
    %v4818 = vpack.c.b16 %v4606, %v4602
    %v4819 = vpack.c.b16 %v4607, %v4603
    %v4820 = vpack.c.b16 %v4608, %v4604
    %v4821 = vpack.c.b16 %v4613, %v4609
    %v4822 = vpack.c.b16 %v4614, %v4610
    %v4823 = vpack.c.b16 %v4615, %v4611
    %v4824 = vpack.c.b16 %v4616, %v4612
    %v4825 = vpack.c.b16 %v4621, %v4617
    %v4826 = vpack.c.b16 %v4622, %v4618
    %v4827 = vpack.c.b16 %v4623, %v4619
    %v4828 = vpack.c.b16 %v4624, %v4620
    %v4829 = vpack.c.b16 %v4629, %v4625
    %v4830 = vpack.c.b16 %v4630, %v4626
    %v4831 = vpack.c.b16 %v4631, %v4627
    %v4832 = vpack.c.b16 %v4632, %v4628
    %v4833 = vpack.c.b16 %v4637, %v4633
    %v4834 = vpack.c.b16 %v4638, %v4634
    %v4835 = vpack.c.b16 %v4639, %v4635
    %v4836 = vpack.c.b16 %v4640, %v4636
    %v4837 = vpack.c.b16 %v4645, %v4641
    %v4838 = vpack.c.b16 %v4646, %v4642
    %v4839 = vpack.c.b16 %v4647, %v4643
    %v4840 = vpack.c.b16 %v4648, %v4644
    %v4841 = vpack.c.b16 %v4653, %v4649
    %v4842 = vpack.c.b16 %v4654, %v4650
    %v4843 = vpack.c.b16 %v4655, %v4651
    %v4844 = vpack.c.b16 %v4656, %v4652
    %v4845 = vpack.c.b16 %v4661, %v4657
    %v4846 = vpack.c.b16 %v4662, %v4658
    %v4847 = vpack.c.b16 %v4663, %v4659
    %v4848 = vpack.c.b16 %v4664, %v4660
    %v4849 = vpack.c.b16 %v4669, %v4665
    %v4850 = vpack.c.b16 %v4670, %v4666
    %v4851 = vpack.c.b16 %v4671, %v4667
    %v4852 = vpack.c.b16 %v4672, %v4668
    %v4853 = vpack.c.b16 %v4677, %v4673
    %v4854 = vpack.c.b16 %v4678, %v4674
    %v4855 = vpack.c.b16 %v4679, %v4675
    %v4856 = vpack.c.b16 %v4680, %v4676
    %v4857 = vpack.c.b16 %v4685, %v4681
    %v4858 = vpack.c.b16 %v4686, %v4682
    %v4859 = vpack.c.b16 %v4687, %v4683
    %v4860 = vpack.c.b16 %v4688, %v4684
    %v4861 = vpack.c.b16 %v4693, %v4689
    %v4862 = vpack.c.b16 %v4694, %v4690
    %v4863 = vpack.c.b16 %v4695, %v4691
    %v4864 = vpack.c.b16 %v4696, %v4692
    %v4865 = vpack.c.b16 %v4701, %v4697
    %v4866 = vpack.c.b16 %v4702, %v4698
    %v4867 = vpack.c.b16 %v4703, %v4699
    %v4868 = vpack.c.b16 %v4704, %v4700
    %v4869 = vpack.c.b16 %v4709, %v4705
    %v4870 = vpack.c.b16 %v4710, %v4706
    %v4871 = vpack.c.b16 %v4711, %v4707
    %v4872 = vpack.c.b16 %v4712, %v4708
    %v4873 = vpack.c.b16 %v4717, %v4713
    %v4874 = vpack.c.b16 %v4718, %v4714
    %v4875 = vpack.c.b16 %v4719, %v4715
    %v4876 = vpack.c.b16 %v4720, %v4716
    %v4877 = vpack.c.b16 %v4725, %v4721
    %v4878 = vpack.c.b16 %v4726, %v4722
    %v4879 = vpack.c.b16 %v4727, %v4723
    %v4880 = vpack.c.b16 %v4728, %v4724
    %v4881 = vpack.c.b16 %v4733, %v4729
    %v4882 = vpack.c.b16 %v4734, %v4730
    %v4883 = vpack.c.b16 %v4735, %v4731
    %v4884 = vpack.c.b16 %v4736, %v4732
    %v4885 = vpack.c.b16 %v4741, %v4737
    %v4886 = vpack.c.b16 %v4742, %v4738
    %v4887 = vpack.c.b16 %v4743, %v4739
    %v4888 = vpack.c.b16 %v4744, %v4740
    %v4889 = vpack.c.b16 %v4749, %v4745
    %v4890 = vpack.c.b16 %v4750, %v4746
    %v4891 = vpack.c.b16 %v4751, %v4747
    %v4892 = vpack.c.b16 %v4752, %v4748
    %v4893 = vpack.c.b16 %v4757, %v4753
    %v4894 = vpack.c.b16 %v4758, %v4754
    %v4895 = vpack.c.b16 %v4759, %v4755
    %v4896 = vpack.c.b16 %v4760, %v4756
    %v4897 = vpack.c.b16 %v4765, %v4761
    %v4898 = vpack.c.b16 %v4766, %v4762
    %v4899 = vpack.c.b16 %v4767, %v4763
    %v4900 = vpack.c.b16 %v4768, %v4764
    %v4901 = vpack.c.b16 %v4773, %v4769
    %v4902 = vpack.c.b16 %v4774, %v4770
    %v4903 = vpack.c.b16 %v4775, %v4771
    %v4904 = vpack.c.b16 %v4776, %v4772
    %5033 = vmatprep.subr.bf16.mxu0 %v4778
    %5034 = vmatpush1.bf16.msra.mxu0 %v4777
    %5035 = vmatprep.subr.bf16.mxu0 %v4782
    %5036 = vmatpush1.bf16.msra.mxu0 %v4781
    %5037 = vmatprep.subr.bf16.mxu0 %v4786
    %5038 = vmatpush1.bf16.msra.mxu0 %v4785
    %5039 = vmatprep.subr.bf16.mxu0 %v4790
    %5040 = vmatpush1.bf16.msra.mxu0 %v4789
    %5041 = vmatprep.subr.bf16.mxu0 %v4794
    %5042 = vmatpush1.bf16.msra.mxu0 %v4793
    %5043 = vmatprep.subr.bf16.mxu0 %v4798
    %5044 = vmatpush1.bf16.msra.mxu0 %v4797
    %5045 = vmatprep.subr.bf16.mxu0 %v4802
    %5046 = vmatpush1.bf16.msra.mxu0 %v4801
    %5047 = vmatprep.subr.bf16.mxu0 %v4806
    %5048 = vmatpush1.bf16.msra.mxu0 %v4805
    %5049 = vmatprep.subr.bf16.mxu0 %v4810
    %5050 = vmatpush1.bf16.msra.mxu0 %v4809
    %5051 = vmatprep.subr.bf16.mxu0 %v4814
    %5052 = vmatpush1.bf16.msra.mxu0 %v4813
    %5053 = vmatprep.subr.bf16.mxu0 %v4818
    %5054 = vmatpush1.bf16.msra.mxu0 %v4817
    %5055 = vmatprep.subr.bf16.mxu0 %v4822
    %5056 = vmatpush1.bf16.msra.mxu0 %v4821
    %5057 = vmatprep.subr.bf16.mxu0 %v4826
    %5058 = vmatpush1.bf16.msra.mxu0 %v4825
    %5059 = vmatprep.subr.bf16.mxu0 %v4830
    %5060 = vmatpush1.bf16.msra.mxu0 %v4829
    %5061 = vmatprep.subr.bf16.mxu0 %v4834
    %5062 = vmatpush1.bf16.msra.mxu0 %v4833
    %5063 = vmatprep.subr.bf16.mxu0 %v4838
    %5064 = vmatpush1.bf16.msra.mxu0 %v4837
    %5065 = vmatprep.mubr.bf16.mxu0 %v4240
    %5066 = vmatmul.mubr.bf16.gmra.mrb[0].mxu0 %v4239
    %v5067 = vpop.f32.mrb[0].mxu0
    %v5068 = vadd.f32 %v4376, %v5067
    %v5069 = vpop.f32.mrb[0].mxu0
    %v5070 = vadd.f32 %v4380, %v5069
    %v5071 = vpop.f32.mrb[0].mxu0
    %v5072 = vadd.f32 %v4376, %v5071
    %v5073 = vpop.f32.mrb[0].mxu0
    %v5074 = vadd.f32 %v4380, %v5073
    %5075 = vdwg.mxu0
    %5076 = vmatprep.subr.bf16.mxu0 %v4842
    %5077 = vmatpush1.bf16.msra.mxu0 %v4841
    %5078 = vmatprep.subr.bf16.mxu0 %v4846
    %5079 = vmatpush1.bf16.msra.mxu0 %v4845
    %5080 = vmatprep.subr.bf16.mxu0 %v4850
    %5081 = vmatpush1.bf16.msra.mxu0 %v4849
    %5082 = vmatprep.subr.bf16.mxu0 %v4854
    %5083 = vmatpush1.bf16.msra.mxu0 %v4853
    %5084 = vmatprep.subr.bf16.mxu0 %v4858
    %5085 = vmatpush1.bf16.msra.mxu0 %v4857
    %5086 = vmatprep.subr.bf16.mxu0 %v4862
    %5087 = vmatpush1.bf16.msra.mxu0 %v4861
    %5088 = vmatprep.subr.bf16.mxu0 %v4866
    %5089 = vmatpush1.bf16.msra.mxu0 %v4865
    %5090 = vmatprep.subr.bf16.mxu0 %v4870
    %5091 = vmatpush1.bf16.msra.mxu0 %v4869
    %5092 = vmatprep.subr.bf16.mxu0 %v4874
    %5093 = vmatpush1.bf16.msra.mxu0 %v4873
    %5094 = vmatprep.subr.bf16.mxu0 %v4878
    %5095 = vmatpush1.bf16.msra.mxu0 %v4877
    %5096 = vmatprep.subr.bf16.mxu0 %v4882
    %5097 = vmatpush1.bf16.msra.mxu0 %v4881
    %5098 = vmatprep.subr.bf16.mxu0 %v4886
    %5099 = vmatpush1.bf16.msra.mxu0 %v4885
    %5100 = vmatprep.subr.bf16.mxu0 %v4890
    %5101 = vmatpush1.bf16.msra.mxu0 %v4889
    %5102 = vmatprep.subr.bf16.mxu0 %v4894
    %5103 = vmatpush1.bf16.msra.mxu0 %v4893
    %5104 = vmatprep.subr.bf16.mxu0 %v4898
    %5105 = vmatpush1.bf16.msra.mxu0 %v4897
    %5106 = vmatprep.subr.bf16.mxu0 %v4902
    %5107 = vmatpush1.bf16.msra.mxu0 %v4901
    %5108 = vmatprep.mubr.bf16.mxu0 %v4242
    %5109 = vmatmul.mubr.bf16.gmra.mrb[0].mxu0 %v4241
    %v5110 = vpop.f32.mrb[0].mxu0
    %v5111 = vadd.f32 %v5068, %v5110
    %v5112 = vpop.f32.mrb[0].mxu0
    %v5113 = vadd.f32 %v5070, %v5112
    %v5114 = vpop.f32.mrb[0].mxu0
    %v5115 = vadd.f32 %v5072, %v5114
    %v5116 = vpop.f32.mrb[0].mxu0
    %v5117 = vadd.f32 %v5074, %v5116
    %5118 = vdwg.mxu0
    %5119 = vmatprep.subr.bf16.mxu0 %v4780
    %5120 = vmatpush1.bf16.msra.mxu0 %v4779
    %5121 = vmatprep.subr.bf16.mxu0 %v4784
    %5122 = vmatpush1.bf16.msra.mxu0 %v4783
    %5123 = vmatprep.subr.bf16.mxu0 %v4788
    %5124 = vmatpush1.bf16.msra.mxu0 %v4787
    %5125 = vmatprep.subr.bf16.mxu0 %v4792
    %5126 = vmatpush1.bf16.msra.mxu0 %v4791
    %5127 = vmatprep.subr.bf16.mxu0 %v4796
    %5128 = vmatpush1.bf16.msra.mxu0 %v4795
    %5129 = vmatprep.subr.bf16.mxu0 %v4800
    %5130 = vmatpush1.bf16.msra.mxu0 %v4799
    %5131 = vmatprep.subr.bf16.mxu0 %v4804
    %5132 = vmatpush1.bf16.msra.mxu0 %v4803
    %5133 = vmatprep.subr.bf16.mxu0 %v4808
    %5134 = vmatpush1.bf16.msra.mxu0 %v4807
    %5135 = vmatprep.subr.bf16.mxu0 %v4812
    %5136 = vmatpush1.bf16.msra.mxu0 %v4811
    %5137 = vmatprep.subr.bf16.mxu0 %v4816
    %5138 = vmatpush1.bf16.msra.mxu0 %v4815
    %5139 = vmatprep.subr.bf16.mxu0 %v4820
    %5140 = vmatpush1.bf16.msra.mxu0 %v4819
    %5141 = vmatprep.subr.bf16.mxu0 %v4824
    %5142 = vmatpush1.bf16.msra.mxu0 %v4823
    %5143 = vmatprep.subr.bf16.mxu0 %v4828
    %5144 = vmatpush1.bf16.msra.mxu0 %v4827
    %5145 = vmatprep.subr.bf16.mxu0 %v4832
    %5146 = vmatpush1.bf16.msra.mxu0 %v4831
    %5147 = vmatprep.subr.bf16.mxu0 %v4836
    %5148 = vmatpush1.bf16.msra.mxu0 %v4835
    %5149 = vmatprep.subr.bf16.mxu0 %v4840
    %5150 = vmatpush1.bf16.msra.mxu0 %v4839
    %5151 = vmatprep.mubr.bf16.mxu0 %v4240
    %5152 = vmatmul.mubr.bf16.gmra.mrb[0].mxu0 %v4239
    %v5153 = vpop.f32.mrb[0].mxu0
    %v5154 = vadd.f32 %v4384, %v5153
    %v5155 = vpop.f32.mrb[0].mxu0
    %v5156 = vadd.f32 %v4388, %v5155
    %v5157 = vpop.f32.mrb[0].mxu0
    %v5158 = vadd.f32 %v4384, %v5157
    %v5159 = vpop.f32.mrb[0].mxu0
    %v5160 = vadd.f32 %v4388, %v5159
    %5161 = vdwg.mxu0
    %5162 = vmatprep.subr.bf16.mxu0 %v4844
    %5163 = vmatpush1.bf16.msra.mxu0 %v4843
    %5164 = vmatprep.subr.bf16.mxu0 %v4848
    %5165 = vmatpush1.bf16.msra.mxu0 %v4847
    %5166 = vmatprep.subr.bf16.mxu0 %v4852
    %5167 = vmatpush1.bf16.msra.mxu0 %v4851
    %5168 = vmatprep.subr.bf16.mxu0 %v4856
    %5169 = vmatpush1.bf16.msra.mxu0 %v4855
    %5170 = vmatprep.subr.bf16.mxu0 %v4860
    %5171 = vmatpush1.bf16.msra.mxu0 %v4859
    %5172 = vmatprep.subr.bf16.mxu0 %v4864
    %5173 = vmatpush1.bf16.msra.mxu0 %v4863
    %5174 = vmatprep.subr.bf16.mxu0 %v4868
    %5175 = vmatpush1.bf16.msra.mxu0 %v4867
    %5176 = vmatprep.subr.bf16.mxu0 %v4872
    %5177 = vmatpush1.bf16.msra.mxu0 %v4871
    %5178 = vmatprep.subr.bf16.mxu0 %v4876
    %5179 = vmatpush1.bf16.msra.mxu0 %v4875
    %5180 = vmatprep.subr.bf16.mxu0 %v4880
    %5181 = vmatpush1.bf16.msra.mxu0 %v4879
    %5182 = vmatprep.subr.bf16.mxu0 %v4884
    %5183 = vmatpush1.bf16.msra.mxu0 %v4883
    %5184 = vmatprep.subr.bf16.mxu0 %v4888
    %5185 = vmatpush1.bf16.msra.mxu0 %v4887
    %5186 = vmatprep.subr.bf16.mxu0 %v4892
    %5187 = vmatpush1.bf16.msra.mxu0 %v4891
    %5188 = vmatprep.subr.bf16.mxu0 %v4896
    %5189 = vmatpush1.bf16.msra.mxu0 %v4895
    %5190 = vmatprep.subr.bf16.mxu0 %v4900
    %5191 = vmatpush1.bf16.msra.mxu0 %v4899
    %5192 = vmatprep.subr.bf16.mxu0 %v4904
    %5193 = vmatpush1.bf16.msra.mxu0 %v4903
    %5194 = vmatprep.mubr.bf16.mxu0 %v4242
    %5195 = vmatmul.mubr.bf16.gmra.mrb[0].mxu0 %v4241
    %v5196 = vpop.f32.mrb[0].mxu0
    %v5197 = vadd.f32 %v5154, %v5196
    %v5198 = vpop.f32.mrb[0].mxu0
    %v5199 = vadd.f32 %v5156, %v5198
    %v5200 = vpop.f32.mrb[0].mxu0
    %v5201 = vadd.f32 %v5158, %v5200
    %v5202 = vpop.f32.mrb[0].mxu0
    %v5203 = vadd.f32 %v5160, %v5202
    %5204 = vdwg.mxu0
    %v5205 = vmax.f32 %v5111, 0.0
    %v5206 = vmax.f32 %v5113, 0.0
    %v5207 = vmax.f32 %v5197, 0.0
    %v5208 = vmax.f32 %v5199, 0.0
    %v5209 = vmax.f32 %v5115, 0.0
    %v5210 = vmax.f32 %v5117, 0.0
    %v5211 = vmax.f32 %v5201, 0.0
    %v5212 = vmax.f32 %v5203, 0.0
    %v5213 = vpack.c.bf16 %v5209, %v5205
    %v5214 = vpack.c.bf16 %v5210, %v5206
    %v5215 = vpack.c.bf16 %v5211, %v5207
    %v5216 = vpack.c.bf16 %v5212, %v5208
    %v5217 = vld [vmem:[%s21] sm:$0xf]
    %v5218 = vld [vmem:[%s21 + $0x4] sm:$0xf]
    %v5219 = vld [vmem:[%s21 + $0x8] sm:$0xf]
    %v5220 = vld [vmem:[%s21 + $0xc] sm:$0xf]
    %v5221 = vld [vmem:[%s21 + $0x10] sm:$0xf]
    %v5222 = vld [vmem:[%s21 + $0x14] sm:$0xf]
    %v5223 = vld [vmem:[%s21 + $0x18] sm:$0xf]
    %v5224 = vld [vmem:[%s21 + $0x1c] sm:$0xf]
    %v5225 = vld [vmem:[%s21 + $0x20] sm:$0xf]
    %v5226 = vld [vmem:[%s21 + $0x24] sm:$0xf]
    %v5227 = vld [vmem:[%s21 + $0x28] sm:$0xf]
    %v5228 = vld [vmem:[%s21 + $0x2c] sm:$0xf]
    %v5229 = vld [vmem:[%s21 + $0x30] sm:$0xf]
    %v5230 = vld [vmem:[%s21 + $0x34] sm:$0xf]
    %v5231 = vld [vmem:[%s21 + $0x38] sm:$0xf]
    %v5232 = vld [vmem:[%s21 + $0x3c] sm:$0xf]
    %v5233 = vld [vmem:[%s21 + $0x40] sm:$0xf]
    %v5234 = vld [vmem:[%s21 + $0x44] sm:$0xf]
    %v5235 = vld [vmem:[%s21 + $0x48] sm:$0xf]
    %v5236 = vld [vmem:[%s21 + $0x4c] sm:$0xf]
    %v5237 = vld [vmem:[%s21 + $0x50] sm:$0xf]
    %v5238 = vld [vmem:[%s21 + $0x54] sm:$0xf]
    %v5239 = vld [vmem:[%s21 + $0x58] sm:$0xf]
    %v5240 = vld [vmem:[%s21 + $0x5c] sm:$0xf]
    %v5241 = vld [vmem:[%s21 + $0x60] sm:$0xf]
    %v5242 = vld [vmem:[%s21 + $0x64] sm:$0xf]
    %v5243 = vld [vmem:[%s21 + $0x68] sm:$0xf]
    %v5244 = vld [vmem:[%s21 + $0x6c] sm:$0xf]
    %v5245 = vld [vmem:[%s21 + $0x70] sm:$0xf]
    %v5246 = vld [vmem:[%s21 + $0x74] sm:$0xf]
    %v5247 = vld [vmem:[%s21 + $0x78] sm:$0xf]
    %v5248 = vld [vmem:[%s21 + $0x7c] sm:$0xf]
    %v5249 = vld [vmem:[%s21 + $0x80] sm:$0xf]
    %v5250 = vld [vmem:[%s21 + $0x84] sm:$0xf]
    %v5251 = vld [vmem:[%s21 + $0x88] sm:$0xf]
    %v5252 = vld [vmem:[%s21 + $0x8c] sm:$0xf]
    %v5253 = vld [vmem:[%s21 + $0x90] sm:$0xf]
    %v5254 = vld [vmem:[%s21 + $0x94] sm:$0xf]
    %v5255 = vld [vmem:[%s21 + $0x98] sm:$0xf]
    %v5256 = vld [vmem:[%s21 + $0x9c] sm:$0xf]
    %v5257 = vld [vmem:[%s21 + $0xa0] sm:$0xf]
    %v5258 = vld [vmem:[%s21 + $0xa4] sm:$0xf]
    %v5259 = vld [vmem:[%s21 + $0xa8] sm:$0xf]
    %v5260 = vld [vmem:[%s21 + $0xac] sm:$0xf]
    %v5261 = vld [vmem:[%s21 + $0xb0] sm:$0xf]
    %v5262 = vld [vmem:[%s21 + $0xb4] sm:$0xf]
    %v5263 = vld [vmem:[%s21 + $0xb8] sm:$0xf]
    %v5264 = vld [vmem:[%s21 + $0xbc] sm:$0xf]
    %v5265 = vld [vmem:[%s21 + $0xc0] sm:$0xf]
    %v5266 = vld [vmem:[%s21 + $0xc4] sm:$0xf]
    %v5267 = vld [vmem:[%s21 + $0xc8] sm:$0xf]
    %v5268 = vld [vmem:[%s21 + $0xcc] sm:$0xf]
    %v5269 = vld [vmem:[%s21 + $0xd0] sm:$0xf]
    %v5270 = vld [vmem:[%s21 + $0xd4] sm:$0xf]
    %v5271 = vld [vmem:[%s21 + $0xd8] sm:$0xf]
    %v5272 = vld [vmem:[%s21 + $0xdc] sm:$0xf]
    %v5273 = vld [vmem:[%s21 + $0xe0] sm:$0xf]
    %v5274 = vld [vmem:[%s21 + $0xe4] sm:$0xf]
    %v5275 = vld [vmem:[%s21 + $0xe8] sm:$0xf]
    %v5276 = vld [vmem:[%s21 + $0xec] sm:$0xf]
    %v5277 = vld [vmem:[%s21 + $0xf0] sm:$0xf]
    %v5278 = vld [vmem:[%s21 + $0xf4] sm:$0xf]
    %v5279 = vld [vmem:[%s21 + $0xf8] sm:$0xf]
    %v5280 = vld [vmem:[%s21 + $0xfc] sm:$0xf]
    %v5281 = vld [vmem:[#allocation12] sm:$0x1]
    %v5283 = vlaneseq
    %v5284 = vshrl.u32 %v5283, 7
    %v5285 = vsub.s32 0, %v5284
    %v5286 = vrot.slane %v5281, %v5285
    %v5352 = vunpack.c.l.b16 %v5217
    %v5353 = vunpack.c.l.b16 %v5218
    %v5354 = vunpack.c.l.b16 %v5219
    %v5355 = vunpack.c.l.b16 %v5220
    %v5356 = vunpack.c.l.b16 %v5221
    %v5357 = vunpack.c.l.b16 %v5222
    %v5358 = vunpack.c.l.b16 %v5223
    %v5359 = vunpack.c.l.b16 %v5224
    %v5360 = vunpack.c.l.b16 %v5225
    %v5361 = vunpack.c.l.b16 %v5226
    %v5362 = vunpack.c.l.b16 %v5227
    %v5363 = vunpack.c.l.b16 %v5228
    %v5364 = vunpack.c.l.b16 %v5229
    %v5365 = vunpack.c.l.b16 %v5230
    %v5366 = vunpack.c.l.b16 %v5231
    %v5367 = vunpack.c.l.b16 %v5232
    %v5368 = vunpack.c.l.b16 %v5233
    %v5369 = vunpack.c.l.b16 %v5234
    %v5370 = vunpack.c.l.b16 %v5235
    %v5371 = vunpack.c.l.b16 %v5236
    %v5372 = vunpack.c.l.b16 %v5237
    %v5373 = vunpack.c.l.b16 %v5238
    %v5374 = vunpack.c.l.b16 %v5239
    %v5375 = vunpack.c.l.b16 %v5240
    %v5376 = vunpack.c.l.b16 %v5241
    %v5377 = vunpack.c.l.b16 %v5242
    %v5378 = vunpack.c.l.b16 %v5243
    %v5379 = vunpack.c.l.b16 %v5244
    %v5380 = vunpack.c.l.b16 %v5245
    %v5381 = vunpack.c.l.b16 %v5246
    %v5382 = vunpack.c.l.b16 %v5247
    %v5383 = vunpack.c.l.b16 %v5248
    %v5384 = vunpack.c.l.b16 %v5249
    %v5385 = vunpack.c.l.b16 %v5250
    %v5386 = vunpack.c.l.b16 %v5251
    %v5387 = vunpack.c.l.b16 %v5252
    %v5388 = vunpack.c.l.b16 %v5253
    %v5389 = vunpack.c.l.b16 %v5254
    %v5390 = vunpack.c.l.b16 %v5255
    %v5391 = vunpack.c.l.b16 %v5256
    %v5392 = vunpack.c.l.b16 %v5257
    %v5393 = vunpack.c.l.b16 %v5258
    %v5394 = vunpack.c.l.b16 %v5259
    %v5395 = vunpack.c.l.b16 %v5260
    %v5396 = vunpack.c.l.b16 %v5261
    %v5397 = vunpack.c.l.b16 %v5262
    %v5398 = vunpack.c.l.b16 %v5263
    %v5399 = vunpack.c.l.b16 %v5264
    %v5400 = vunpack.c.l.b16 %v5265
    %v5401 = vunpack.c.l.b16 %v5266
    %v5402 = vunpack.c.l.b16 %v5267
    %v5403 = vunpack.c.l.b16 %v5268
    %v5404 = vunpack.c.l.b16 %v5269
    %v5405 = vunpack.c.l.b16 %v5270
    %v5406 = vunpack.c.l.b16 %v5271
    %v5407 = vunpack.c.l.b16 %v5272
    %v5408 = vunpack.c.l.b16 %v5273
    %v5409 = vunpack.c.l.b16 %v5274
    %v5410 = vunpack.c.l.b16 %v5275
    %v5411 = vunpack.c.l.b16 %v5276
    %v5412 = vunpack.c.l.b16 %v5277
    %v5413 = vunpack.c.l.b16 %v5278
    %v5414 = vunpack.c.l.b16 %v5279
    %v5415 = vunpack.c.l.b16 %v5280
    %v5416 = vpack.c.b16 %v5353, %v5352
    %v5417 = vpack.c.b16 %v5355, %v5354
    %v5418 = vpack.c.b16 %v5357, %v5356
    %v5419 = vpack.c.b16 %v5359, %v5358
    %v5420 = vpack.c.b16 %v5361, %v5360
    %v5421 = vpack.c.b16 %v5363, %v5362
    %v5422 = vpack.c.b16 %v5365, %v5364
    %v5423 = vpack.c.b16 %v5367, %v5366
    %v5424 = vpack.c.b16 %v5369, %v5368
    %v5425 = vpack.c.b16 %v5371, %v5370
    %v5426 = vpack.c.b16 %v5373, %v5372
    %v5427 = vpack.c.b16 %v5375, %v5374
    %v5428 = vpack.c.b16 %v5377, %v5376
    %v5429 = vpack.c.b16 %v5379, %v5378
    %v5430 = vpack.c.b16 %v5381, %v5380
    %v5431 = vpack.c.b16 %v5383, %v5382
    %v5432 = vpack.c.b16 %v5385, %v5384
    %v5433 = vpack.c.b16 %v5387, %v5386
    %v5434 = vpack.c.b16 %v5389, %v5388
    %v5435 = vpack.c.b16 %v5391, %v5390
    %v5436 = vpack.c.b16 %v5393, %v5392
    %v5437 = vpack.c.b16 %v5395, %v5394
    %v5438 = vpack.c.b16 %v5397, %v5396
    %v5439 = vpack.c.b16 %v5399, %v5398
    %v5440 = vpack.c.b16 %v5401, %v5400
    %v5441 = vpack.c.b16 %v5403, %v5402
    %v5442 = vpack.c.b16 %v5405, %v5404
    %v5443 = vpack.c.b16 %v5407, %v5406
    %v5444 = vpack.c.b16 %v5409, %v5408
    %v5445 = vpack.c.b16 %v5411, %v5410
    %v5446 = vpack.c.b16 %v5413, %v5412
    %v5447 = vpack.c.b16 %v5415, %v5414
    %5480 = vmatprep.subr.bf16.mxu0 0
    %5481 = vmatpush1.bf16.msra.mxu0 %v5416
    %5482 = vmatprep.subr.bf16.mxu0 0
    %5483 = vmatpush1.bf16.msra.mxu0 %v5417
    %5484 = vmatprep.subr.bf16.mxu0 0
    %5485 = vmatpush1.bf16.msra.mxu0 %v5418
    %5486 = vmatprep.subr.bf16.mxu0 0
    %5487 = vmatpush1.bf16.msra.mxu0 %v5419
    %5488 = vmatprep.subr.bf16.mxu0 0
    %5489 = vmatpush1.bf16.msra.mxu0 %v5420
    %5490 = vmatprep.subr.bf16.mxu0 0
    %5491 = vmatpush1.bf16.msra.mxu0 %v5421
    %5492 = vmatprep.subr.bf16.mxu0 0
    %5493 = vmatpush1.bf16.msra.mxu0 %v5422
    %5494 = vmatprep.subr.bf16.mxu0 0
    %5495 = vmatpush1.bf16.msra.mxu0 %v5423
    %5496 = vmatprep.subr.bf16.mxu0 0
    %5497 = vmatpush1.bf16.msra.mxu0 %v5424
    %5498 = vmatprep.subr.bf16.mxu0 0
    %5499 = vmatpush1.bf16.msra.mxu0 %v5425
    %5500 = vmatprep.subr.bf16.mxu0 0
    %5501 = vmatpush1.bf16.msra.mxu0 %v5426
    %5502 = vmatprep.subr.bf16.mxu0 0
    %5503 = vmatpush1.bf16.msra.mxu0 %v5427
    %5504 = vmatprep.subr.bf16.mxu0 0
    %5505 = vmatpush1.bf16.msra.mxu0 %v5428
    %5506 = vmatprep.subr.bf16.mxu0 0
    %5507 = vmatpush1.bf16.msra.mxu0 %v5429
    %5508 = vmatprep.subr.bf16.mxu0 0
    %5509 = vmatpush1.bf16.msra.mxu0 %v5430
    %5510 = vmatprep.subr.bf16.mxu0 0
    %5511 = vmatpush1.bf16.msra.mxu0 %v5431
    %5512 = vmatprep.mubr.bf16.mxu0 %v5214
    %5513 = vmatmul.mubr.bf16.gmra.mrb[0].mxu0 %v5213
    %v5514 = vpop.f32.mrb[0].mxu0
    %v5515 = vadd.f32 %v5286, %v5514
    %v5516 = vpop.f32.mrb[0].mxu0
    %v5517 = vpop.f32.mrb[0].mxu0
    %v5518 = vadd.f32 %v5286, %v5517
    %v5519 = vpop.f32.mrb[0].mxu0
    %5520 = vdwg.mxu0
    %5521 = vmatprep.subr.bf16.mxu0 0
    %5522 = vmatpush1.bf16.msra.mxu0 %v5432
    %5523 = vmatprep.subr.bf16.mxu0 0
    %5524 = vmatpush1.bf16.msra.mxu0 %v5433
    %5525 = vmatprep.subr.bf16.mxu0 0
    %5526 = vmatpush1.bf16.msra.mxu0 %v5434
    %5527 = vmatprep.subr.bf16.mxu0 0
    %5528 = vmatpush1.bf16.msra.mxu0 %v5435
    %5529 = vmatprep.subr.bf16.mxu0 0
    %5530 = vmatpush1.bf16.msra.mxu0 %v5436
    %5531 = vmatprep.subr.bf16.mxu0 0
    %5532 = vmatpush1.bf16.msra.mxu0 %v5437
    %5533 = vmatprep.subr.bf16.mxu0 0
    %5534 = vmatpush1.bf16.msra.mxu0 %v5438
    %5535 = vmatprep.subr.bf16.mxu0 0
    %5536 = vmatpush1.bf16.msra.mxu0 %v5439
    %5537 = vmatprep.subr.bf16.mxu0 0
    %5538 = vmatpush1.bf16.msra.mxu0 %v5440
    %5539 = vmatprep.subr.bf16.mxu0 0
    %5540 = vmatpush1.bf16.msra.mxu0 %v5441
    %5541 = vmatprep.subr.bf16.mxu0 0
    %5542 = vmatpush1.bf16.msra.mxu0 %v5442
    %5543 = vmatprep.subr.bf16.mxu0 0
    %5544 = vmatpush1.bf16.msra.mxu0 %v5443
    %5545 = vmatprep.subr.bf16.mxu0 0
    %5546 = vmatpush1.bf16.msra.mxu0 %v5444
    %5547 = vmatprep.subr.bf16.mxu0 0
    %5548 = vmatpush1.bf16.msra.mxu0 %v5445
    %5549 = vmatprep.subr.bf16.mxu0 0
    %5550 = vmatpush1.bf16.msra.mxu0 %v5446
    %5551 = vmatprep.subr.bf16.mxu0 0
    %5552 = vmatpush1.bf16.msra.mxu0 %v5447
    %5553 = vmatprep.mubr.bf16.mxu0 %v5216
    %5554 = vmatmul.mubr.bf16.gmra.mrb[0].mxu0 %v5215
    %v5555 = vpop.f32.mrb[0].mxu0
    %v5556 = vadd.f32 %v5515, %v5555
    %v5557 = vpop.f32.mrb[0].mxu0
    %v5558 = vpop.f32.mrb[0].mxu0
    %v5559 = vadd.f32 %v5518, %v5558
    %v5560 = vpop.f32.mrb[0].mxu0
    %5561 = vdwg.mxu0
    %5562 = vst [vmem:[%s23] sm:$0xff] %v5556
    %5563 = vst [vmem:[%s23 + $0x8] sm:$0xff] %v5559
    // Predicated region
    $region122: #{pose_vqvae_forward.1} parent=1 // pred_check
      _
    $region123: #{pose_vqvae_forward.1} parent=1 // pred_check_branch
      %5565 = sbr.rel (0) target = $region125
    $region124: #{pose_vqvae_forward.1} parent=1 // pred_region
      _
    $region125: #{pose_vqvae_forward.1} parent=1 // pred_fallthru
      _
    // Predicated region
    $region126: #{pose_vqvae_forward.1} parent=1 // pred_check
      _
    $region127: #{pose_vqvae_forward.1} parent=1 // pred_check_branch
      %5567 = sbr.rel (0) target = $region129
    $region128: #{pose_vqvae_forward.1} parent=1 // pred_region
      _
    $region129: #{pose_vqvae_forward.1} parent=1 // pred_fallthru
      _
    // Predicated region
    $region130: #{pose_vqvae_forward.1} parent=1 // pred_check
      _
    $region131: #{pose_vqvae_forward.1} parent=1 // pred_check_branch
      %5569 = sbr.rel (0) target = $region133
    $region132: #{pose_vqvae_forward.1} parent=1 // pred_region
      _
    $region133: #{pose_vqvae_forward.1} parent=1 // pred_fallthru
      _
    // Predicated region
    $region134: #{pose_vqvae_forward.1} parent=1 // pred_check
      _
    $region135: #{pose_vqvae_forward.1} parent=1 // pred_check_branch
      %5571 = sbr.rel (0) target = $region137
    $region136: #{pose_vqvae_forward.1} parent=1 // pred_region
      _
    $region137: #{pose_vqvae_forward.1} parent=1 // pred_fallthru
      _
    // Predicated region
    $region138: #{pose_vqvae_forward.1} parent=1 // pred_check
      _
    $region139: #{pose_vqvae_forward.1} parent=1 // pred_check_branch
      %5573 = sbr.rel (0) target = $region141
    $region140: #{pose_vqvae_forward.1} parent=1 // pred_region
      _
    $region141: #{pose_vqvae_forward.1} parent=1 // pred_fallthru
      _
    // Predicated region
    $region142: #{pose_vqvae_forward.1} parent=1 // pred_check
      _
    $region143: #{pose_vqvae_forward.1} parent=1 // pred_check_branch
      %5575 = sbr.rel (0) target = $region145
    $region144: #{pose_vqvae_forward.1} parent=1 // pred_region
      _
    $region145: #{pose_vqvae_forward.1} parent=1 // pred_fallthru
      _
    %5576 = vsyncpa [#allocation3], 1
    %5577 = vsyncpa [#allocation5], 1
    %5578 = vsyncpa [#allocation8], 1
    %5579 = vsyncpa [#allocation11], 1

</llo_original>
